<compile_context>
chip_gen: v6e
topology: v6e:2x2x1
jax: 0.10.0
libtpu: 0.0.40
codegen_flags: <defaults>
</compile_context>

<pallas_src>
import functools

import jax
import jax.numpy as jnp
from jax import lax
from jax.experimental import pallas as pl
from jax.experimental.pallas import tpu as pltpu

_MXU_DTYPE = jnp.bfloat16   # MXU operand dtype (f32 accumulation everywhere)


def _round_up(x, m):
    return (x + m - 1) // m * m


# ----------------------------------------------------------------------------
# Fused kernel: all LSTM layers for one time chunk + last-valid-step gather + head.
# Grid = (batch_chunks [parallel], time_chunks [arbitrary]).
# ----------------------------------------------------------------------------
def _fused_lstm_head_kernel(tgt_ref, x_ref, wih0_ref, wih_ref, whh_ref, b_ref,
                            h0_ref, c0_ref, wout_ref, bout_ref,
                            out_ref,
                            pre_sc, hseq_sc, h_sc, c_sc, rel_sc,
                            *, time_chunk, num_layers, unroll):
    BC, Hp = rel_sc.shape
    t_idx = pl.program_id(1)
    n_t = pl.num_programs(1)
    t_base = t_idx * time_chunk                         # global timestep of chunk start
    tgt = tgt_ref[...]                                  # (BC, 1) int32

    @pl.when(t_idx == 0)
    def _init():
        h_sc[...] = h0_ref[...]
        c_sc[...] = c0_ref[...]
        rel_sc[...] = jnp.zeros_like(rel_sc)

    for layer in range(num_layers):                     # static unroll over layers
        is_first = layer == 0
        is_last = layer == num_layers - 1

        # Chunk-wide input projection for this layer: one big MXU matmul, bf16 operands,
        # f32 accumulation.  Bias is folded into the per-step gate add below.
        if is_first:
            pre_sc[...] = jnp.dot(x_ref[0], wih0_ref[...],
                                  preferred_element_type=jnp.float32)
        else:
            pre_sc[...] = jnp.dot(hseq_sc[...].astype(wih_ref.dtype),
                                  wih_ref[layer - 1],
                                  preferred_element_type=jnp.float32)

        def step(tt, carry, layer=layer, is_last=is_last):
            row = pl.multiple_of(tt * BC, 8)
            h_prev = h_sc[layer]                        # (BC, Hp) f32 carry
            gates = (pre_sc[pl.ds(row, BC), :]
                     + jnp.dot(h_prev.astype(whh_ref.dtype), whh_ref[layer],
                               preferred_element_type=jnp.float32)
                     + b_ref[layer])                    # (BC, 4*Hp) f32
            # PyTorch gate order i, f, g, o; each slice is a full 128-lane group.
            i_g = jax.nn.sigmoid(gates[:, 0 * Hp:1 * Hp])
            f_g = jax.nn.sigmoid(gates[:, 1 * Hp:2 * Hp])
            g_g = jnp.tanh(gates[:, 2 * Hp:3 * Hp])
            o_g = jax.nn.sigmoid(gates[:, 3 * Hp:4 * Hp])
            c_new = f_g * c_sc[layer] + i_g * g_g
            h_new = o_g * jnp.tanh(c_new)
            c_sc[layer] = c_new
            h_sc[layer] = h_new
            if is_last:
                # Capture the hidden state at global t == actual_length - 1 per row.
                rel_sc[...] = jnp.where(tgt == t_base + tt, h_new, rel_sc[...])
            else:
                hseq_sc[pl.ds(row, BC), :] = h_new      # feed to next layer
            return carry

        lax.fori_loop(0, time_chunk, step, 0, unroll=unroll)

    @pl.when(t_idx == n_t - 1)
    def _head():
        out_ref[...] = (jnp.dot(rel_sc[...].astype(wout_ref.dtype), wout_ref[...],
                                preferred_element_type=jnp.float32)
                        + bout_ref[...])


# ----------------------------------------------------------------------------
# Wrapper: padding, weight layout, grid/BlockSpec plumbing, VMEM budget.
# ----------------------------------------------------------------------------
def _pad_gate_cols(w, hidden, hidden_pad):
    """(rows, 4*hidden) -> (rows, 4*hidden_pad), zero-padding each gate block."""
    rows = w.shape[0]
    w4 = w.reshape(rows, 4, hidden)
    w4 = jnp.pad(w4, ((0, 0), (0, 0), (0, hidden_pad - hidden)))
    return w4.reshape(rows, 4 * hidden_pad)


def lstm_classifier_forward(x_btd, actual_lengths, params, h0, c0,
                            *, time_chunk=None, batch_chunk=None):
    """Equivalent of LSTM_Classifier.forward (eval-mode dropout)."""
    B, T, D = x_btd.shape
    num_layers = len(params["lstm"])
    H = h0.shape[-1]
    C = params["w_out"].shape[-1]

    Bp = _round_up(B, 8)        # sublane-pad batch
    Hp = _round_up(H, 128)      # lane-pad hidden
    Dp = _round_up(D, 128)      # lane-pad input features
    Cp = _round_up(C, 128)      # lane-pad classes
    G = 4 * Hp
    Lm1 = max(num_layers - 1, 1)

    # Batch chunk (leading "parallel" grid axis -> v7x can shard it over both TCs).
    if batch_chunk is None:
        batch_chunk = Bp // 2 if Bp % 16 == 0 else Bp
    BC = batch_chunk
    assert Bp % BC == 0 and BC % 8 == 0
    nB = Bp // BC

    # Time chunk: bound chunk-scale VMEM (pre-gates f32 + hidden slab f32 + 2x x block).
    if time_chunk is None:
        per_step = BC * (4 * G + 4 * Hp + 2 * 2 * Dp)
        time_chunk = max(1, min(T, (8 << 20) // per_step))
    TCk = int(time_chunk)
    Tp = _round_up(T, TCk)
    nT = Tp // TCk

    # --- Input: pad, batch-chunked time-major layout, bf16 MXU operand. ---
    x_p = jnp.pad(x_btd, ((0, Bp - B), (0, Tp - T), (0, Dp - D)))       # (Bp, Tp, Dp)
    x_p = x_p.reshape(nB, BC, Tp, Dp).transpose(0, 2, 1, 3)             # (nB, Tp, BC, Dp)
    x_p = x_p.reshape(nB, Tp * BC, Dp).astype(_MXU_DTYPE)

    # --- Weights (bf16 operands) and biases (f32), per-gate column padded. ---
    w_ih0 = params["lstm"][0][0]
    wih0_p = jnp.pad(_pad_gate_cols(w_ih0, H, Hp),
                     ((0, Dp - D), (0, 0))).astype(_MXU_DTYPE)          # (Dp, G)

    whh_list, wih_rest, b_list = [], [], []
    for l, (w_ih, w_hh, b) in enumerate(params["lstm"]):
        whh_list.append(jnp.pad(_pad_gate_cols(w_hh, H, Hp), ((0, Hp - H), (0, 0))))
        b_list.append(_pad_gate_cols(b, H, Hp))
        if l > 0:
            wih_rest.append(jnp.pad(_pad_gate_cols(w_ih, H, Hp), ((0, Hp - H), (0, 0))))
    whh_all = jnp.stack(whh_list).astype(_MXU_DTYPE)                    # (L, Hp, G)
    b_all = jnp.stack(b_list)                                           # (L, 1, G) f32
    if num_layers > 1:
        wih_all = jnp.stack(wih_rest).astype(_MXU_DTYPE)                # (L-1, Hp, G)
    else:
        wih_all = jnp.zeros((1, Hp, G), _MXU_DTYPE)                     # dummy (unused)

    pad_lbh = lambda a: jnp.pad(a, ((0, 0), (0, Bp - B), (0, Hp - H)))
    h0_p = pad_lbh(h0).astype(jnp.float32)                              # (L, Bp, Hp)
    c0_p = pad_lbh(c0).astype(jnp.float32)

    w_out_p = jnp.pad(params["w_out"], ((0, Hp - H), (0, Cp - C))).astype(_MXU_DTYPE)
    b_out_p = jnp.pad(params["b_out"], ((0, 0), (0, Cp - C))).astype(jnp.float32)

    # Target timestep per row (clamped) for the last-valid-step gather.
    tgt = jnp.clip(actual_lengths.astype(jnp.int32) - 1, 0, T - 1)
    tgt = jnp.pad(tgt, (0, Bp - B)).reshape(Bp, 1)

    # --- Explicit VMEM budget (review: set vmem_limit_bytes from actual sizes). ---
    in_block_bytes = (BC * 4                                    # tgt
                      + TCk * BC * Dp * 2                       # x chunk (bf16)
                      + Dp * G * 2 + Lm1 * Hp * G * 2 + num_layers * Hp * G * 2
                      + num_layers * G * 4                      # biases
                      + 2 * num_layers * BC * Hp * 4            # h0, c0 blocks
                      + Hp * Cp * 2 + Cp * 4)                   # head
    out_block_bytes = BC * Cp * 4
    scratch_bytes = (TCk * BC * (G + Hp) * 4
                     + (2 * num_layers + 1) * BC * Hp * 4)
    vmem_limit = 2 * (in_block_bytes + out_block_bytes) + scratch_bytes + (4 << 20)
    vmem_limit = int(min(max(vmem_limit, 32 << 20), 100 << 20))

    kernel = functools.partial(_fused_lstm_head_kernel,
                               time_chunk=TCk, num_layers=num_layers,
                               unroll=min(TCk, 8))

    out = pl.pallas_call(
        kernel,
        out_shape=jax.ShapeDtypeStruct((Bp, Cp), jnp.float32),
        grid=(nB, nT),
        in_specs=[
            pl.BlockSpec((BC, 1), lambda b, t: (b, 0)),                   # tgt
            pl.BlockSpec((1, TCk * BC, Dp), lambda b, t: (b, t, 0)),      # x time chunk
            pl.BlockSpec((Dp, G), lambda b, t: (0, 0)),                   # W_ih layer 0
            pl.BlockSpec((Lm1, Hp, G), lambda b, t: (0, 0, 0)),           # W_ih layers 1..
            pl.BlockSpec((num_layers, Hp, G), lambda b, t: (0, 0, 0)),    # W_hh all layers
            pl.BlockSpec((num_layers, 1, G), lambda b, t: (0, 0, 0)),     # biases
            pl.BlockSpec((num_layers, BC, Hp), lambda b, t: (0, b, 0)),   # h0
            pl.BlockSpec((num_layers, BC, Hp), lambda b, t: (0, b, 0)),   # c0
            pl.BlockSpec((Hp, Cp), lambda b, t: (0, 0)),                  # W_out
            pl.BlockSpec((1, Cp), lambda b, t: (0, 0)),                   # b_out
        ],
        out_specs=pl.BlockSpec((BC, Cp), lambda b, t: (b, 0)),
        scratch_shapes=[
            pltpu.VMEM((TCk * BC, G), jnp.float32),            # pre-gates, current layer
            pltpu.VMEM((TCk * BC, Hp), jnp.float32),           # hidden-seq slab
            pltpu.VMEM((num_layers, BC, Hp), jnp.float32),     # h carries (per layer)
            pltpu.VMEM((num_layers, BC, Hp), jnp.float32),     # c carries (per layer)
            pltpu.VMEM((BC, Hp), jnp.float32),                 # last-valid hidden
        ],
        compiler_params=pltpu.CompilerParams(
            dimension_semantics=("parallel", "arbitrary"),
            vmem_limit_bytes=vmem_limit),
    )(tgt, x_p, wih0_p, wih_all, whh_all, b_all, h0_p, c0_p, w_out_p, b_out_p)

    return out[:B, :C]


# ----------------------------------------------------------------------------
# Parameter init (deterministic, PyTorch-style uniform(-1/sqrt(H), 1/sqrt(H))).
# Weights are stored pre-transposed: W_ih -> (D_in, 4H), W_hh -> (H, 4H),
# combined bias (b_ih + b_hh) -> (1, 4H), Linear W -> (H, C).
# ----------------------------------------------------------------------------
def init_params(key, input_size, hidden_size, num_classes, num_layers):
    bound = 1.0 / float(hidden_size) ** 0.5
    params = {"lstm": []}
    keys = jax.random.split(key, num_layers * 4 + 2)
    ki = 0
    for layer in range(num_layers):
        d_in = input_size if layer == 0 else hidden_size
        w_ih = jax.random.uniform(keys[ki], (d_in, 4 * hidden_size),
                                  minval=-bound, maxval=bound, dtype=jnp.float32); ki += 1
        w_hh = jax.random.uniform(keys[ki], (hidden_size, 4 * hidden_size),
                                  minval=-bound, maxval=bound, dtype=jnp.float32); ki += 1
        b_ih = jax.random.uniform(keys[ki], (4 * hidden_size,),
                                  minval=-bound, maxval=bound, dtype=jnp.float32); ki += 1
        b_hh = jax.random.uniform(keys[ki], (4 * hidden_size,),
                                  minval=-bound, maxval=bound, dtype=jnp.float32); ki += 1
        params["lstm"].append((w_ih, w_hh, (b_ih + b_hh)[None, :]))
    params["w_out"] = jax.random.uniform(keys[ki], (hidden_size, num_classes),
                                         minval=-bound, maxval=bound,
                                         dtype=jnp.float32); ki += 1
    params["b_out"] = jax.random.uniform(keys[ki], (1, num_classes),
                                         minval=-bound, maxval=bound, dtype=jnp.float32)
    return params


# ----------------------------------------------------------------------------
# Pure-JAX reference.  operand_dtype selects the dtype matmul operands are cast to
# (f32 = spec-faithful; bf16 = matched to the kernel's MXU operand precision).
# ----------------------------------------------------------------------------
def _reference_forward(x_btd, actual_lengths, params, h0, c0,
                       operand_dtype=jnp.float32):
    B, T, _ = x_btd.shape
    H = h0.shape[-1]
    f32 = jnp.float32
    seq = jnp.transpose(x_btd, (1, 0, 2))              # (T, B, D_in)
    for layer, (w_ih, w_hh, b) in enumerate(params["lstm"]):
        h = h0[layer]
        c = c0[layer]
        w_ih_c = w_ih.astype(operand_dtype)
        w_hh_c = w_hh.astype(operand_dtype)
        outs = []
        for t in range(T):
            gates = (jnp.dot(seq[t].astype(operand_dtype), w_ih_c,
                             preferred_element_type=f32)
                     + jnp.dot(h.astype(operand_dtype), w_hh_c,
                               preferred_element_type=f32)
                     + b)
            i_g = jax.nn.sigmoid(gates[:, :H])
            f_g = jax.nn.sigmoid(gates[:, H:2 * H])
            g_g = jnp.tanh(gates[:, 2 * H:3 * H])
            o_g = jax.nn.sigmoid(gates[:, 3 * H:])
            c = f_g * c + i_g * g_g
            h = o_g * jnp.tanh(c)
            outs.append(h)
        seq = jnp.stack(outs)
    cols = jnp.clip(actual_lengths - 1, 0, T - 1)
    rel = seq[cols, jnp.arange(B), :]
    return (jnp.dot(rel.astype(operand_dtype), params["w_out"].astype(operand_dtype),
                    preferred_element_type=f32) + params["b_out"])


if __name__ == "__main__":
    input_size = 16
    hidden_size = 32
    num_classes = 4
    num_layers = 2
    max_sequence_length = 8
    batch = 2

    key = jax.random.PRNGKey(0)
    kx, kp = jax.random.split(key, 2)

    x = jax.random.normal(kx, (batch, max_sequence_length, input_size), dtype=jnp.float32)
    actual_lengths = jnp.array([8, 5], dtype=jnp.int32)

    # The original module draws torch.rand h0/c0 but never passes them to self.lstm,
    # so the effective initial state is zeros (PyTorch default).
    h0 = jnp.zeros((num_layers, batch, hidden_size), dtype=jnp.float32)
    c0 = jnp.zeros((num_layers, batch, hidden_size), dtype=jnp.float32)

    params = init_params(kp, input_size, hidden_size, num_classes, num_layers)

    # time_chunk=4 -> 2 time chunks: exercises the cross-chunk h/c/rel carry logic.
    out = lstm_classifier_forward(x, actual_lengths, params, h0, c0, time_chunk=4)
    out = jax.block_until_ready(out)
    assert out.shape == (batch, num_classes)

    # Structure check against a reference with matched (bf16) MXU operand precision.
    ref_bf16 = jax.block_until_ready(
        _reference_forward(x, actual_lengths, params, h0, c0,
                           operand_dtype=jnp.bfloat16))
    assert jnp.allclose(out, ref_bf16, atol=5e-3, rtol=5e-3), \
        float(jnp.max(jnp.abs(out - ref_bf16)))

    # Overall parity with the full-f32 reference (difference = bf16 operand quantization).
    ref_f32 = jax.block_until_ready(
        _reference_forward(x, actual_lengths, params, h0, c0,
                           operand_dtype=jnp.float32))
    assert jnp.allclose(out, ref_f32, atol=5e-2, rtol=5e-2), \
        float(jnp.max(jnp.abs(out - ref_f32)))

    print("KERNEL_OK")
</pallas_src>

<mosaic_0001>
module attributes {stable_mosaic.version = 11 : i64} {
  func.func @_fused_lstm_head_kernel(%arg0: i32, %arg1: i32, %arg2: memref<8x1xi32, #tpu.memory_space<vmem>>, %arg3: memref<1x32x128xbf16, #tpu.memory_space<vmem>>, %arg4: memref<128x512xbf16, #tpu.memory_space<vmem>>, %arg5: memref<1x128x512xbf16, #tpu.memory_space<vmem>>, %arg6: memref<2x128x512xbf16, #tpu.memory_space<vmem>>, %arg7: memref<2x1x512xf32, #tpu.memory_space<vmem>>, %arg8: memref<2x8x128xf32, #tpu.memory_space<vmem>>, %arg9: memref<2x8x128xf32, #tpu.memory_space<vmem>>, %arg10: memref<128x128xbf16, #tpu.memory_space<vmem>>, %arg11: memref<1x128xf32, #tpu.memory_space<vmem>>, %arg12: memref<8x128xf32, #tpu.memory_space<vmem>>, %arg13: memref<32x512xf32, #tpu.memory_space<vmem>>, %arg14: memref<32x128xf32, #tpu.memory_space<vmem>>, %arg15: memref<2x8x128xf32, #tpu.memory_space<vmem>>, %arg16: memref<2x8x128xf32, #tpu.memory_space<vmem>>, %arg17: memref<8x128xf32, #tpu.memory_space<vmem>>) attributes {dimension_semantics = [#tpu.dimension_semantics<parallel>, #tpu.dimension_semantics<arbitrary>], iteration_bounds = array<i64: 1, 2>, scalar_prefetch = 0 : i64, scratch_operands = 5 : i64, tpu.core_type = #tpu.core_type<tc>, window_params = [{transform_indices = @transform_0, window_bounds = array<i64: 8, 1>}, {transform_indices = @transform_1, window_bounds = array<i64: 1, 32, 128>}, {pipeline_mode = #tpu.pipeline_mode<synchronous>, transform_indices = @transform_2, window_bounds = array<i64: 128, 512>}, {pipeline_mode = #tpu.pipeline_mode<synchronous>, transform_indices = @transform_3, window_bounds = array<i64: 1, 128, 512>}, {pipeline_mode = #tpu.pipeline_mode<synchronous>, transform_indices = @transform_4, window_bounds = array<i64: 2, 128, 512>}, {pipeline_mode = #tpu.pipeline_mode<synchronous>, transform_indices = @transform_5, window_bounds = array<i64: 2, 1, 512>}, {transform_indices = @transform_6, window_bounds = array<i64: 2, 8, 128>}, {transform_indices = @transform_7, window_bounds = array<i64: 2, 8, 128>}, {pipeline_mode = #tpu.pipeline_mode<synchronous>, transform_indices = @transform_8, window_bounds = array<i64: 128, 128>}, {pipeline_mode = #tpu.pipeline_mode<synchronous>, transform_indices = @transform_9, window_bounds = array<i64: 1, 128>}, {transform_indices = @transform_10, window_bounds = array<i64: 8, 128>}]} {
    %c4_i32 = arith.constant 4 : i32
    %0 = arith.muli %arg1, %c4_i32 : i32
    %c0 = arith.constant 0 : index
    %c0_0 = arith.constant 0 : index
    %1 = vector.load %arg2[%c0, %c0_0] : memref<8x1xi32, #tpu.memory_space<vmem>>, vector<8x1xi32>
    %c0_i32 = arith.constant 0 : i32
    %2 = arith.cmpi eq, %arg1, %c0_i32 : i32
    %3 = arith.extui %2 : i1 to i32
    %c0_i32_1 = arith.constant 0 : i32
    %4 = arith.cmpi ne, %3, %c0_i32_1 : i32
    scf.if %4 {
      %c0_236 = arith.constant 0 : index
      %c0_237 = arith.constant 0 : index
      %c0_238 = arith.constant 0 : index
      %443 = vector.load %arg8[%c0_236, %c0_237, %c0_238] : memref<2x8x128xf32, #tpu.memory_space<vmem>>, vector<2x8x128xf32>
      %c0_239 = arith.constant 0 : index
      %c0_240 = arith.constant 0 : index
      %c0_241 = arith.constant 0 : index
      %444 = vector.load %arg15[%c0_239, %c0_240, %c0_241] : memref<2x8x128xf32, #tpu.memory_space<vmem>>, vector<2x8x128xf32>
      tpu.vector_store %arg15[%c0_239, %c0_240, %c0_241], %443 {strides = array<i32>} : memref<2x8x128xf32, #tpu.memory_space<vmem>>, vector<2x8x128xf32>,
      %c0_242 = arith.constant 0 : index
      %c0_243 = arith.constant 0 : index
      %c0_244 = arith.constant 0 : index
      %445 = vector.load %arg9[%c0_242, %c0_243, %c0_244] : memref<2x8x128xf32, #tpu.memory_space<vmem>>, vector<2x8x128xf32>
      %c0_245 = arith.constant 0 : index
      %c0_246 = arith.constant 0 : index
      %c0_247 = arith.constant 0 : index
      %446 = vector.load %arg16[%c0_245, %c0_246, %c0_247] : memref<2x8x128xf32, #tpu.memory_space<vmem>>, vector<2x8x128xf32>
      tpu.vector_store %arg16[%c0_245, %c0_246, %c0_247], %445 {strides = array<i32>} : memref<2x8x128xf32, #tpu.memory_space<vmem>>, vector<2x8x128xf32>,
      %cst_248 = arith.constant 0.000000e+00 : f32
      %447 = vector.broadcast %cst_248 : f32 to vector<8x128xf32>
      %c0_249 = arith.constant 0 : index
      %c0_250 = arith.constant 0 : index
      %448 = vector.load %arg17[%c0_249, %c0_250] : memref<8x128xf32, #tpu.memory_space<vmem>>, vector<8x128xf32>
      tpu.vector_store %arg17[%c0_249, %c0_250], %447 {strides = array<i32>} : memref<8x128xf32, #tpu.memory_space<vmem>>, vector<8x128xf32>,
    } else {
    }
    %c0_2 = arith.constant 0 : index
    %c0_3 = arith.constant 0 : index
    %c0_4 = arith.constant 0 : index
    %5 = vector.load %arg3[%c0_2, %c0_3, %c0_4] : memref<1x32x128xbf16, #tpu.memory_space<vmem>>, vector<1x32x128xbf16>
    %6 = vector.shape_cast %5 : vector<1x32x128xbf16> to vector<32x128xbf16>
    %c0_5 = arith.constant 0 : index
    %c0_6 = arith.constant 0 : index
    %7 = vector.load %arg4[%c0_5, %c0_6] : memref<128x512xbf16, #tpu.memory_space<vmem>>, vector<128x512xbf16>
    %cst = arith.constant dense<0.000000e+00> : vector<32x512xf32>
    %8 = tpu.matmul %6, %7, %cst {dimension_numbers = #tpu.dot_dimension_numbers<[1], [0], [0], [1], [0, 0, 1, 1], [], []>} : vector<32x128xbf16>, vector<128x512xbf16>, vector<32x512xf32> -> vector<32x512xf32>
    %c0_7 = arith.constant 0 : index
    %c0_8 = arith.constant 0 : index
    %9 = vector.load %arg13[%c0_7, %c0_8] : memref<32x512xf32, #tpu.memory_space<vmem>>, vector<32x512xf32>
    tpu.vector_store %arg13[%c0_7, %c0_8], %8 {strides = array<i32>} : memref<32x512xf32, #tpu.memory_space<vmem>>, vector<32x512xf32>,
    %c0_i32_9 = arith.constant 0 : i32
    %c8_i32 = arith.constant 8 : i32
    %10 = arith.muli %c0_i32_9, %c8_i32 : i32
    %11 = tpu.assume_multiple %10, 8 : i32
    %c0_10 = arith.constant 0 : index
    %c0_11 = arith.constant 0 : index
    %c0_12 = arith.constant 0 : index
    %12 = vector.load %arg15[%c0_10, %c0_11, %c0_12] : memref<2x8x128xf32, #tpu.memory_space<vmem>>, vector<1x8x128xf32>
    %13 = vector.shape_cast %12 : vector<1x8x128xf32> to vector<8x128xf32>
    %14 = arith.index_cast %11 : i32 to index
    %c0_13 = arith.constant 0 : index
    %15 = vector.load %arg13[%14, %c0_13] : memref<32x512xf32, #tpu.memory_space<vmem>>, vector<8x512xf32>
    %16 = arith.truncf %13 : vector<8x128xf32> to vector<8x128xbf16>
    %c0_14 = arith.constant 0 : index
    %c0_15 = arith.constant 0 : index
    %c0_16 = arith.constant 0 : index
    %17 = vector.load %arg6[%c0_14, %c0_15, %c0_16] : memref<2x128x512xbf16, #tpu.memory_space<vmem>>, vector<1x128x512xbf16>
    %18 = vector.shape_cast %17 : vector<1x128x512xbf16> to vector<128x512xbf16>
    %cst_17 = arith.constant dense<0.000000e+00> : vector<8x512xf32>
    %19 = tpu.matmul %16, %18, %cst_17 {dimension_numbers = #tpu.dot_dimension_numbers<[1], [0], [0], [1], [0, 0, 1, 1], [], []>} : vector<8x128xbf16>, vector<128x512xbf16>, vector<8x512xf32> -> vector<8x512xf32>
    %20 = arith.addf %15, %19 : vector<8x512xf32>
    %c0_18 = arith.constant 0 : index
    %c0_19 = arith.constant 0 : index
    %c0_20 = arith.constant 0 : index
    %21 = vector.load %arg7[%c0_18, %c0_19, %c0_20] : memref<2x1x512xf32, #tpu.memory_space<vmem>>, vector<1x1x512xf32>
    %22 = vector.shape_cast %21 : vector<1x1x512xf32> to vector<1x512xf32>
    %23 = vector.broadcast %22 : vector<1x512xf32> to vector<8x512xf32>
    %24 = arith.addf %20, %23 : vector<8x512xf32>
    %25 = vector.extract_strided_slice %24 {offsets = [0, 0], sizes = [8, 128], strides = [1, 1]} : vector<8x512xf32> to vector<8x128xf32>
    %26 = arith.negf %25 : vector<8x128xf32>
    %27 = math.exp %26 : vector<8x128xf32>
    %cst_21 = arith.constant 1.000000e+00 : f32
    %28 = vector.broadcast %cst_21 : f32 to vector<8x128xf32>
    %29 = arith.addf %28, %27 : vector<8x128xf32>
    %30 = arith.divf %28, %29 : vector<8x128xf32>
    %31 = vector.extract_strided_slice %24 {offsets = [0, 128], sizes = [8, 128], strides = [1, 1]} : vector<8x512xf32> to vector<8x128xf32>
    %32 = arith.negf %31 : vector<8x128xf32>
    %33 = math.exp %32 : vector<8x128xf32>
    %cst_22 = arith.constant 1.000000e+00 : f32
    %34 = vector.broadcast %cst_22 : f32 to vector<8x128xf32>
    %35 = arith.addf %34, %33 : vector<8x128xf32>
    %36 = arith.divf %34, %35 : vector<8x128xf32>
    %37 = vector.extract_strided_slice %24 {offsets = [0, 256], sizes = [8, 128], strides = [1, 1]} : vector<8x512xf32> to vector<8x128xf32>
    %38 = math.tanh %37 : vector<8x128xf32>
    %39 = vector.extract_strided_slice %24 {offsets = [0, 384], sizes = [8, 128], strides = [1, 1]} : vector<8x512xf32> to vector<8x128xf32>
    %40 = arith.negf %39 : vector<8x128xf32>
    %41 = math.exp %40 : vector<8x128xf32>
    %cst_23 = arith.constant 1.000000e+00 : f32
    %42 = vector.broadcast %cst_23 : f32 to vector<8x128xf32>
    %43 = arith.addf %42, %41 : vector<8x128xf32>
    %44 = arith.divf %42, %43 : vector<8x128xf32>
    %c0_24 = arith.constant 0 : index
    %c0_25 = arith.constant 0 : index
    %c0_26 = arith.constant 0 : index
    %45 = vector.load %arg16[%c0_24, %c0_25, %c0_26] : memref<2x8x128xf32, #tpu.memory_space<vmem>>, vector<1x8x128xf32>
    %46 = vector.shape_cast %45 : vector<1x8x128xf32> to vector<8x128xf32>
    %47 = arith.mulf %36, %46 : vector<8x128xf32>
    %48 = arith.mulf %30, %38 : vector<8x128xf32>
    %49 = arith.addf %47, %48 : vector<8x128xf32>
    %50 = math.tanh %49 : vector<8x128xf32>
    %51 = arith.mulf %44, %50 : vector<8x128xf32>
    %c0_27 = arith.constant 0 : index
    %c0_28 = arith.constant 0 : index
    %c0_29 = arith.constant 0 : index
    %52 = vector.load %arg16[%c0_27, %c0_28, %c0_29] : memref<2x8x128xf32, #tpu.memory_space<vmem>>, vector<1x8x128xf32>
    %53 = vector.shape_cast %52 : vector<1x8x128xf32> to vector<8x128xf32>
    %54 = vector.shape_cast %49 : vector<8x128xf32> to vector<1x8x128xf32>
    tpu.vector_store %arg16[%c0_27, %c0_28, %c0_29], %54 {strides = array<i32>} : memref<2x8x128xf32, #tpu.memory_space<vmem>>, vector<1x8x128xf32>,
    %c0_30 = arith.constant 0 : index
    %c0_31 = arith.constant 0 : index
    %c0_32 = arith.constant 0 : index
    %55 = vector.load %arg15[%c0_30, %c0_31, %c0_32] : memref<2x8x128xf32, #tpu.memory_space<vmem>>, vector<1x8x128xf32>
    %56 = vector.shape_cast %55 : vector<1x8x128xf32> to vector<8x128xf32>
    %57 = vector.shape_cast %51 : vector<8x128xf32> to vector<1x8x128xf32>
    tpu.vector_store %arg15[%c0_30, %c0_31, %c0_32], %57 {strides = array<i32>} : memref<2x8x128xf32, #tpu.memory_space<vmem>>, vector<1x8x128xf32>,
    %58 = arith.index_cast %11 : i32 to index
    %c0_33 = arith.constant 0 : index
    %59 = vector.load %arg14[%58, %c0_33] : memref<32x128xf32, #tpu.memory_space<vmem>>, vector<8x128xf32>
    tpu.vector_store %arg14[%58, %c0_33], %51 {strides = array<i32>} : memref<32x128xf32, #tpu.memory_space<vmem>>, vector<8x128xf32>,
    %c1_i32 = arith.constant 1 : i32
    %c8_i32_34 = arith.constant 8 : i32
    %60 = arith.muli %c1_i32, %c8_i32_34 : i32
    %61 = tpu.assume_multiple %60, 8 : i32
    %c0_35 = arith.constant 0 : index
    %c0_36 = arith.constant 0 : index
    %c0_37 = arith.constant 0 : index
    %62 = vector.load %arg15[%c0_35, %c0_36, %c0_37] : memref<2x8x128xf32, #tpu.memory_space<vmem>>, vector<1x8x128xf32>
    %63 = vector.shape_cast %62 : vector<1x8x128xf32> to vector<8x128xf32>
    %64 = arith.index_cast %61 : i32 to index
    %c0_38 = arith.constant 0 : index
    %65 = vector.load %arg13[%64, %c0_38] : memref<32x512xf32, #tpu.memory_space<vmem>>, vector<8x512xf32>
    %66 = arith.truncf %63 : vector<8x128xf32> to vector<8x128xbf16>
    %c0_39 = arith.constant 0 : index
    %c0_40 = arith.constant 0 : index
    %c0_41 = arith.constant 0 : index
    %67 = vector.load %arg6[%c0_39, %c0_40, %c0_41] : memref<2x128x512xbf16, #tpu.memory_space<vmem>>, vector<1x128x512xbf16>
    %68 = vector.shape_cast %67 : vector<1x128x512xbf16> to vector<128x512xbf16>
    %cst_42 = arith.constant dense<0.000000e+00> : vector<8x512xf32>
    %69 = tpu.matmul %66, %68, %cst_42 {dimension_numbers = #tpu.dot_dimension_numbers<[1], [0], [0], [1], [0, 0, 1, 1], [], []>} : vector<8x128xbf16>, vector<128x512xbf16>, vector<8x512xf32> -> vector<8x512xf32>
    %70 = arith.addf %65, %69 : vector<8x512xf32>
    %c0_43 = arith.constant 0 : index
    %c0_44 = arith.constant 0 : index
    %c0_45 = arith.constant 0 : index
    %71 = vector.load %arg7[%c0_43, %c0_44, %c0_45] : memref<2x1x512xf32, #tpu.memory_space<vmem>>, vector<1x1x512xf32>
    %72 = vector.shape_cast %71 : vector<1x1x512xf32> to vector<1x512xf32>
    %73 = vector.broadcast %72 : vector<1x512xf32> to vector<8x512xf32>
    %74 = arith.addf %70, %73 : vector<8x512xf32>
    %75 = vector.extract_strided_slice %74 {offsets = [0, 0], sizes = [8, 128], strides = [1, 1]} : vector<8x512xf32> to vector<8x128xf32>
    %76 = arith.negf %75 : vector<8x128xf32>
    %77 = math.exp %76 : vector<8x128xf32>
    %cst_46 = arith.constant 1.000000e+00 : f32
    %78 = vector.broadcast %cst_46 : f32 to vector<8x128xf32>
    %79 = arith.addf %78, %77 : vector<8x128xf32>
    %80 = arith.divf %78, %79 : vector<8x128xf32>
    %81 = vector.extract_strided_slice %74 {offsets = [0, 128], sizes = [8, 128], strides = [1, 1]} : vector<8x512xf32> to vector<8x128xf32>
    %82 = arith.negf %81 : vector<8x128xf32>
    %83 = math.exp %82 : vector<8x128xf32>
    %cst_47 = arith.constant 1.000000e+00 : f32
    %84 = vector.broadcast %cst_47 : f32 to vector<8x128xf32>
    %85 = arith.addf %84, %83 : vector<8x128xf32>
    %86 = arith.divf %84, %85 : vector<8x128xf32>
    %87 = vector.extract_strided_slice %74 {offsets = [0, 256], sizes = [8, 128], strides = [1, 1]} : vector<8x512xf32> to vector<8x128xf32>
    %88 = math.tanh %87 : vector<8x128xf32>
    %89 = vector.extract_strided_slice %74 {offsets = [0, 384], sizes = [8, 128], strides = [1, 1]} : vector<8x512xf32> to vector<8x128xf32>
    %90 = arith.negf %89 : vector<8x128xf32>
    %91 = math.exp %90 : vector<8x128xf32>
    %cst_48 = arith.constant 1.000000e+00 : f32
    %92 = vector.broadcast %cst_48 : f32 to vector<8x128xf32>
    %93 = arith.addf %92, %91 : vector<8x128xf32>
    %94 = arith.divf %92, %93 : vector<8x128xf32>
    %c0_49 = arith.constant 0 : index
    %c0_50 = arith.constant 0 : index
    %c0_51 = arith.constant 0 : index
    %95 = vector.load %arg16[%c0_49, %c0_50, %c0_51] : memref<2x8x128xf32, #tpu.memory_space<vmem>>, vector<1x8x128xf32>
    %96 = vector.shape_cast %95 : vector<1x8x128xf32> to vector<8x128xf32>
    %97 = arith.mulf %86, %96 : vector<8x128xf32>
    %98 = arith.mulf %80, %88 : vector<8x128xf32>
    %99 = arith.addf %97, %98 : vector<8x128xf32>
    %100 = math.tanh %99 : vector<8x128xf32>
    %101 = arith.mulf %94, %100 : vector<8x128xf32>
    %c0_52 = arith.constant 0 : index
    %c0_53 = arith.constant 0 : index
    %c0_54 = arith.constant 0 : index
    %102 = vector.load %arg16[%c0_52, %c0_53, %c0_54] : memref<2x8x128xf32, #tpu.memory_space<vmem>>, vector<1x8x128xf32>
    %103 = vector.shape_cast %102 : vector<1x8x128xf32> to vector<8x128xf32>
    %104 = vector.shape_cast %99 : vector<8x128xf32> to vector<1x8x128xf32>
    tpu.vector_store %arg16[%c0_52, %c0_53, %c0_54], %104 {strides = array<i32>} : memref<2x8x128xf32, #tpu.memory_space<vmem>>, vector<1x8x128xf32>,
    %c0_55 = arith.constant 0 : index
    %c0_56 = arith.constant 0 : index
    %c0_57 = arith.constant 0 : index
    %105 = vector.load %arg15[%c0_55, %c0_56, %c0_57] : memref<2x8x128xf32, #tpu.memory_space<vmem>>, vector<1x8x128xf32>
    %106 = vector.shape_cast %105 : vector<1x8x128xf32> to vector<8x128xf32>
    %107 = vector.shape_cast %101 : vector<8x128xf32> to vector<1x8x128xf32>
    tpu.vector_store %arg15[%c0_55, %c0_56, %c0_57], %107 {strides = array<i32>} : memref<2x8x128xf32, #tpu.memory_space<vmem>>, vector<1x8x128xf32>,
    %108 = arith.index_cast %61 : i32 to index
    %c0_58 = arith.constant 0 : index
    %109 = vector.load %arg14[%108, %c0_58] : memref<32x128xf32, #tpu.memory_space<vmem>>, vector<8x128xf32>
    tpu.vector_store %arg14[%108, %c0_58], %101 {strides = array<i32>} : memref<32x128xf32, #tpu.memory_space<vmem>>, vector<8x128xf32>,
    %c2_i32 = arith.constant 2 : i32
    %c8_i32_59 = arith.constant 8 : i32
    %110 = arith.muli %c2_i32, %c8_i32_59 : i32
    %111 = tpu.assume_multiple %110, 8 : i32
    %c0_60 = arith.constant 0 : index
    %c0_61 = arith.constant 0 : index
    %c0_62 = arith.constant 0 : index
    %112 = vector.load %arg15[%c0_60, %c0_61, %c0_62] : memref<2x8x128xf32, #tpu.memory_space<vmem>>, vector<1x8x128xf32>
    %113 = vector.shape_cast %112 : vector<1x8x128xf32> to vector<8x128xf32>
    %114 = arith.index_cast %111 : i32 to index
    %c0_63 = arith.constant 0 : index
    %115 = vector.load %arg13[%114, %c0_63] : memref<32x512xf32, #tpu.memory_space<vmem>>, vector<8x512xf32>
    %116 = arith.truncf %113 : vector<8x128xf32> to vector<8x128xbf16>
    %c0_64 = arith.constant 0 : index
    %c0_65 = arith.constant 0 : index
    %c0_66 = arith.constant 0 : index
    %117 = vector.load %arg6[%c0_64, %c0_65, %c0_66] : memref<2x128x512xbf16, #tpu.memory_space<vmem>>, vector<1x128x512xbf16>
    %118 = vector.shape_cast %117 : vector<1x128x512xbf16> to vector<128x512xbf16>
    %cst_67 = arith.constant dense<0.000000e+00> : vector<8x512xf32>
    %119 = tpu.matmul %116, %118, %cst_67 {dimension_numbers = #tpu.dot_dimension_numbers<[1], [0], [0], [1], [0, 0, 1, 1], [], []>} : vector<8x128xbf16>, vector<128x512xbf16>, vector<8x512xf32> -> vector<8x512xf32>
    %120 = arith.addf %115, %119 : vector<8x512xf32>
    %c0_68 = arith.constant 0 : index
    %c0_69 = arith.constant 0 : index
    %c0_70 = arith.constant 0 : index
    %121 = vector.load %arg7[%c0_68, %c0_69, %c0_70] : memref<2x1x512xf32, #tpu.memory_space<vmem>>, vector<1x1x512xf32>
    %122 = vector.shape_cast %121 : vector<1x1x512xf32> to vector<1x512xf32>
    %123 = vector.broadcast %122 : vector<1x512xf32> to vector<8x512xf32>
    %124 = arith.addf %120, %123 : vector<8x512xf32>
    %125 = vector.extract_strided_slice %124 {offsets = [0, 0], sizes = [8, 128], strides = [1, 1]} : vector<8x512xf32> to vector<8x128xf32>
    %126 = arith.negf %125 : vector<8x128xf32>
    %127 = math.exp %126 : vector<8x128xf32>
    %cst_71 = arith.constant 1.000000e+00 : f32
    %128 = vector.broadcast %cst_71 : f32 to vector<8x128xf32>
    %129 = arith.addf %128, %127 : vector<8x128xf32>
    %130 = arith.divf %128, %129 : vector<8x128xf32>
    %131 = vector.extract_strided_slice %124 {offsets = [0, 128], sizes = [8, 128], strides = [1, 1]} : vector<8x512xf32> to vector<8x128xf32>
    %132 = arith.negf %131 : vector<8x128xf32>
    %133 = math.exp %132 : vector<8x128xf32>
    %cst_72 = arith.constant 1.000000e+00 : f32
    %134 = vector.broadcast %cst_72 : f32 to vector<8x128xf32>
    %135 = arith.addf %134, %133 : vector<8x128xf32>
    %136 = arith.divf %134, %135 : vector<8x128xf32>
    %137 = vector.extract_strided_slice %124 {offsets = [0, 256], sizes = [8, 128], strides = [1, 1]} : vector<8x512xf32> to vector<8x128xf32>
    %138 = math.tanh %137 : vector<8x128xf32>
    %139 = vector.extract_strided_slice %124 {offsets = [0, 384], sizes = [8, 128], strides = [1, 1]} : vector<8x512xf32> to vector<8x128xf32>
    %140 = arith.negf %139 : vector<8x128xf32>
    %141 = math.exp %140 : vector<8x128xf32>
    %cst_73 = arith.constant 1.000000e+00 : f32
    %142 = vector.broadcast %cst_73 : f32 to vector<8x128xf32>
    %143 = arith.addf %142, %141 : vector<8x128xf32>
    %144 = arith.divf %142, %143 : vector<8x128xf32>
    %c0_74 = arith.constant 0 : index
    %c0_75 = arith.constant 0 : index
    %c0_76 = arith.constant 0 : index
    %145 = vector.load %arg16[%c0_74, %c0_75, %c0_76] : memref<2x8x128xf32, #tpu.memory_space<vmem>>, vector<1x8x128xf32>
    %146 = vector.shape_cast %145 : vector<1x8x128xf32> to vector<8x128xf32>
    %147 = arith.mulf %136, %146 : vector<8x128xf32>
    %148 = arith.mulf %130, %138 : vector<8x128xf32>
    %149 = arith.addf %147, %148 : vector<8x128xf32>
    %150 = math.tanh %149 : vector<8x128xf32>
    %151 = arith.mulf %144, %150 : vector<8x128xf32>
    %c0_77 = arith.constant 0 : index
    %c0_78 = arith.constant 0 : index
    %c0_79 = arith.constant 0 : index
    %152 = vector.load %arg16[%c0_77, %c0_78, %c0_79] : memref<2x8x128xf32, #tpu.memory_space<vmem>>, vector<1x8x128xf32>
    %153 = vector.shape_cast %152 : vector<1x8x128xf32> to vector<8x128xf32>
    %154 = vector.shape_cast %149 : vector<8x128xf32> to vector<1x8x128xf32>
    tpu.vector_store %arg16[%c0_77, %c0_78, %c0_79], %154 {strides = array<i32>} : memref<2x8x128xf32, #tpu.memory_space<vmem>>, vector<1x8x128xf32>,
    %c0_80 = arith.constant 0 : index
    %c0_81 = arith.constant 0 : index
    %c0_82 = arith.constant 0 : index
    %155 = vector.load %arg15[%c0_80, %c0_81, %c0_82] : memref<2x8x128xf32, #tpu.memory_space<vmem>>, vector<1x8x128xf32>
    %156 = vector.shape_cast %155 : vector<1x8x128xf32> to vector<8x128xf32>
    %157 = vector.shape_cast %151 : vector<8x128xf32> to vector<1x8x128xf32>
    tpu.vector_store %arg15[%c0_80, %c0_81, %c0_82], %157 {strides = array<i32>} : memref<2x8x128xf32, #tpu.memory_space<vmem>>, vector<1x8x128xf32>,
    %158 = arith.index_cast %111 : i32 to index
    %c0_83 = arith.constant 0 : index
    %159 = vector.load %arg14[%158, %c0_83] : memref<32x128xf32, #tpu.memory_space<vmem>>, vector<8x128xf32>
    tpu.vector_store %arg14[%158, %c0_83], %151 {strides = array<i32>} : memref<32x128xf32, #tpu.memory_space<vmem>>, vector<8x128xf32>,
    %c3_i32 = arith.constant 3 : i32
    %c8_i32_84 = arith.constant 8 : i32
    %160 = arith.muli %c3_i32, %c8_i32_84 : i32
    %161 = tpu.assume_multiple %160, 8 : i32
    %c0_85 = arith.constant 0 : index
    %c0_86 = arith.constant 0 : index
    %c0_87 = arith.constant 0 : index
    %162 = vector.load %arg15[%c0_85, %c0_86, %c0_87] : memref<2x8x128xf32, #tpu.memory_space<vmem>>, vector<1x8x128xf32>
    %163 = vector.shape_cast %162 : vector<1x8x128xf32> to vector<8x128xf32>
    %164 = arith.index_cast %161 : i32 to index
    %c0_88 = arith.constant 0 : index
    %165 = vector.load %arg13[%164, %c0_88] : memref<32x512xf32, #tpu.memory_space<vmem>>, vector<8x512xf32>
    %166 = arith.truncf %163 : vector<8x128xf32> to vector<8x128xbf16>
    %c0_89 = arith.constant 0 : index
    %c0_90 = arith.constant 0 : index
    %c0_91 = arith.constant 0 : index
    %167 = vector.load %arg6[%c0_89, %c0_90, %c0_91] : memref<2x128x512xbf16, #tpu.memory_space<vmem>>, vector<1x128x512xbf16>
    %168 = vector.shape_cast %167 : vector<1x128x512xbf16> to vector<128x512xbf16>
    %cst_92 = arith.constant dense<0.000000e+00> : vector<8x512xf32>
    %169 = tpu.matmul %166, %168, %cst_92 {dimension_numbers = #tpu.dot_dimension_numbers<[1], [0], [0], [1], [0, 0, 1, 1], [], []>} : vector<8x128xbf16>, vector<128x512xbf16>, vector<8x512xf32> -> vector<8x512xf32>
    %170 = arith.addf %165, %169 : vector<8x512xf32>
    %c0_93 = arith.constant 0 : index
    %c0_94 = arith.constant 0 : index
    %c0_95 = arith.constant 0 : index
    %171 = vector.load %arg7[%c0_93, %c0_94, %c0_95] : memref<2x1x512xf32, #tpu.memory_space<vmem>>, vector<1x1x512xf32>
    %172 = vector.shape_cast %171 : vector<1x1x512xf32> to vector<1x512xf32>
    %173 = vector.broadcast %172 : vector<1x512xf32> to vector<8x512xf32>
    %174 = arith.addf %170, %173 : vector<8x512xf32>
    %175 = vector.extract_strided_slice %174 {offsets = [0, 0], sizes = [8, 128], strides = [1, 1]} : vector<8x512xf32> to vector<8x128xf32>
    %176 = arith.negf %175 : vector<8x128xf32>
    %177 = math.exp %176 : vector<8x128xf32>
    %cst_96 = arith.constant 1.000000e+00 : f32
    %178 = vector.broadcast %cst_96 : f32 to vector<8x128xf32>
    %179 = arith.addf %178, %177 : vector<8x128xf32>
    %180 = arith.divf %178, %179 : vector<8x128xf32>
    %181 = vector.extract_strided_slice %174 {offsets = [0, 128], sizes = [8, 128], strides = [1, 1]} : vector<8x512xf32> to vector<8x128xf32>
    %182 = arith.negf %181 : vector<8x128xf32>
    %183 = math.exp %182 : vector<8x128xf32>
    %cst_97 = arith.constant 1.000000e+00 : f32
    %184 = vector.broadcast %cst_97 : f32 to vector<8x128xf32>
    %185 = arith.addf %184, %183 : vector<8x128xf32>
    %186 = arith.divf %184, %185 : vector<8x128xf32>
    %187 = vector.extract_strided_slice %174 {offsets = [0, 256], sizes = [8, 128], strides = [1, 1]} : vector<8x512xf32> to vector<8x128xf32>
    %188 = math.tanh %187 : vector<8x128xf32>
    %189 = vector.extract_strided_slice %174 {offsets = [0, 384], sizes = [8, 128], strides = [1, 1]} : vector<8x512xf32> to vector<8x128xf32>
    %190 = arith.negf %189 : vector<8x128xf32>
    %191 = math.exp %190 : vector<8x128xf32>
    %cst_98 = arith.constant 1.000000e+00 : f32
    %192 = vector.broadcast %cst_98 : f32 to vector<8x128xf32>
    %193 = arith.addf %192, %191 : vector<8x128xf32>
    %194 = arith.divf %192, %193 : vector<8x128xf32>
    %c0_99 = arith.constant 0 : index
    %c0_100 = arith.constant 0 : index
    %c0_101 = arith.constant 0 : index
    %195 = vector.load %arg16[%c0_99, %c0_100, %c0_101] : memref<2x8x128xf32, #tpu.memory_space<vmem>>, vector<1x8x128xf32>
    %196 = vector.shape_cast %195 : vector<1x8x128xf32> to vector<8x128xf32>
    %197 = arith.mulf %186, %196 : vector<8x128xf32>
    %198 = arith.mulf %180, %188 : vector<8x128xf32>
    %199 = arith.addf %197, %198 : vector<8x128xf32>
    %200 = math.tanh %199 : vector<8x128xf32>
    %201 = arith.mulf %194, %200 : vector<8x128xf32>
    %c0_102 = arith.constant 0 : index
    %c0_103 = arith.constant 0 : index
    %c0_104 = arith.constant 0 : index
    %202 = vector.load %arg16[%c0_102, %c0_103, %c0_104] : memref<2x8x128xf32, #tpu.memory_space<vmem>>, vector<1x8x128xf32>
    %203 = vector.shape_cast %202 : vector<1x8x128xf32> to vector<8x128xf32>
    %204 = vector.shape_cast %199 : vector<8x128xf32> to vector<1x8x128xf32>
    tpu.vector_store %arg16[%c0_102, %c0_103, %c0_104], %204 {strides = array<i32>} : memref<2x8x128xf32, #tpu.memory_space<vmem>>, vector<1x8x128xf32>,
    %c0_105 = arith.constant 0 : index
    %c0_106 = arith.constant 0 : index
    %c0_107 = arith.constant 0 : index
    %205 = vector.load %arg15[%c0_105, %c0_106, %c0_107] : memref<2x8x128xf32, #tpu.memory_space<vmem>>, vector<1x8x128xf32>
    %206 = vector.shape_cast %205 : vector<1x8x128xf32> to vector<8x128xf32>
    %207 = vector.shape_cast %201 : vector<8x128xf32> to vector<1x8x128xf32>
    tpu.vector_store %arg15[%c0_105, %c0_106, %c0_107], %207 {strides = array<i32>} : memref<2x8x128xf32, #tpu.memory_space<vmem>>, vector<1x8x128xf32>,
    %208 = arith.index_cast %161 : i32 to index
    %c0_108 = arith.constant 0 : index
    %209 = vector.load %arg14[%208, %c0_108] : memref<32x128xf32, #tpu.memory_space<vmem>>, vector<8x128xf32>
    tpu.vector_store %arg14[%208, %c0_108], %201 {strides = array<i32>} : memref<32x128xf32, #tpu.memory_space<vmem>>, vector<8x128xf32>,
    %c4_i32_109 = arith.constant 4 : i32
    %c0_110 = arith.constant 0 : index
    %c0_111 = arith.constant 0 : index
    %210 = vector.load %arg14[%c0_110, %c0_111] : memref<32x128xf32, #tpu.memory_space<vmem>>, vector<32x128xf32>
    %211 = arith.truncf %210 : vector<32x128xf32> to vector<32x128xbf16>
    %c0_112 = arith.constant 0 : index
    %c0_113 = arith.constant 0 : index
    %c0_114 = arith.constant 0 : index
    %212 = vector.load %arg5[%c0_112, %c0_113, %c0_114] : memref<1x128x512xbf16, #tpu.memory_space<vmem>>, vector<1x128x512xbf16>
    %213 = vector.shape_cast %212 : vector<1x128x512xbf16> to vector<128x512xbf16>
    %cst_115 = arith.constant dense<0.000000e+00> : vector<32x512xf32>
    %214 = tpu.matmul %211, %213, %cst_115 {dimension_numbers = #tpu.dot_dimension_numbers<[1], [0], [0], [1], [0, 0, 1, 1], [], []>} : vector<32x128xbf16>, vector<128x512xbf16>, vector<32x512xf32> -> vector<32x512xf32>
    %c0_116 = arith.constant 0 : index
    %c0_117 = arith.constant 0 : index
    %215 = vector.load %arg13[%c0_116, %c0_117] : memref<32x512xf32, #tpu.memory_space<vmem>>, vector<32x512xf32>
    tpu.vector_store %arg13[%c0_116, %c0_117], %214 {strides = array<i32>} : memref<32x512xf32, #tpu.memory_space<vmem>>, vector<32x512xf32>,
    %c0_i32_118 = arith.constant 0 : i32
    %c8_i32_119 = arith.constant 8 : i32
    %216 = arith.muli %c0_i32_118, %c8_i32_119 : i32
    %217 = tpu.assume_multiple %216, 8 : i32
    %c1 = arith.constant 1 : index
    %c0_120 = arith.constant 0 : index
    %c0_121 = arith.constant 0 : index
    %218 = vector.load %arg15[%c1, %c0_120, %c0_121] : memref<2x8x128xf32, #tpu.memory_space<vmem>>, vector<1x8x128xf32>
    %219 = vector.shape_cast %218 : vector<1x8x128xf32> to vector<8x128xf32>
    %220 = arith.index_cast %217 : i32 to index
    %c0_122 = arith.constant 0 : index
    %221 = vector.load %arg13[%220, %c0_122] : memref<32x512xf32, #tpu.memory_space<vmem>>, vector<8x512xf32>
    %222 = arith.truncf %219 : vector<8x128xf32> to vector<8x128xbf16>
    %c1_123 = arith.constant 1 : index
    %c0_124 = arith.constant 0 : index
    %c0_125 = arith.constant 0 : index
    %223 = vector.load %arg6[%c1_123, %c0_124, %c0_125] : memref<2x128x512xbf16, #tpu.memory_space<vmem>>, vector<1x128x512xbf16>
    %224 = vector.shape_cast %223 : vector<1x128x512xbf16> to vector<128x512xbf16>
    %cst_126 = arith.constant dense<0.000000e+00> : vector<8x512xf32>
    %225 = tpu.matmul %222, %224, %cst_126 {dimension_numbers = #tpu.dot_dimension_numbers<[1], [0], [0], [1], [0, 0, 1, 1], [], []>} : vector<8x128xbf16>, vector<128x512xbf16>, vector<8x512xf32> -> vector<8x512xf32>
    %226 = arith.addf %221, %225 : vector<8x512xf32>
    %c1_127 = arith.constant 1 : index
    %c0_128 = arith.constant 0 : index
    %c0_129 = arith.constant 0 : index
    %227 = vector.load %arg7[%c1_127, %c0_128, %c0_129] : memref<2x1x512xf32, #tpu.memory_space<vmem>>, vector<1x1x512xf32>
    %228 = vector.shape_cast %227 : vector<1x1x512xf32> to vector<1x512xf32>
    %229 = vector.broadcast %228 : vector<1x512xf32> to vector<8x512xf32>
    %230 = arith.addf %226, %229 : vector<8x512xf32>
    %231 = vector.extract_strided_slice %230 {offsets = [0, 0], sizes = [8, 128], strides = [1, 1]} : vector<8x512xf32> to vector<8x128xf32>
    %232 = arith.negf %231 : vector<8x128xf32>
    %233 = math.exp %232 : vector<8x128xf32>
    %cst_130 = arith.constant 1.000000e+00 : f32
    %234 = vector.broadcast %cst_130 : f32 to vector<8x128xf32>
    %235 = arith.addf %234, %233 : vector<8x128xf32>
    %236 = arith.divf %234, %235 : vector<8x128xf32>
    %237 = vector.extract_strided_slice %230 {offsets = [0, 128], sizes = [8, 128], strides = [1, 1]} : vector<8x512xf32> to vector<8x128xf32>
    %238 = arith.negf %237 : vector<8x128xf32>
    %239 = math.exp %238 : vector<8x128xf32>
    %cst_131 = arith.constant 1.000000e+00 : f32
    %240 = vector.broadcast %cst_131 : f32 to vector<8x128xf32>
    %241 = arith.addf %240, %239 : vector<8x128xf32>
    %242 = arith.divf %240, %241 : vector<8x128xf32>
    %243 = vector.extract_strided_slice %230 {offsets = [0, 256], sizes = [8, 128], strides = [1, 1]} : vector<8x512xf32> to vector<8x128xf32>
    %244 = math.tanh %243 : vector<8x128xf32>
    %245 = vector.extract_strided_slice %230 {offsets = [0, 384], sizes = [8, 128], strides = [1, 1]} : vector<8x512xf32> to vector<8x128xf32>
    %246 = arith.negf %245 : vector<8x128xf32>
    %247 = math.exp %246 : vector<8x128xf32>
    %cst_132 = arith.constant 1.000000e+00 : f32
    %248 = vector.broadcast %cst_132 : f32 to vector<8x128xf32>
    %249 = arith.addf %248, %247 : vector<8x128xf32>
    %250 = arith.divf %248, %249 : vector<8x128xf32>
    %c1_133 = arith.constant 1 : index
    %c0_134 = arith.constant 0 : index
    %c0_135 = arith.constant 0 : index
    %251 = vector.load %arg16[%c1_133, %c0_134, %c0_135] : memref<2x8x128xf32, #tpu.memory_space<vmem>>, vector<1x8x128xf32>
    %252 = vector.shape_cast %251 : vector<1x8x128xf32> to vector<8x128xf32>
    %253 = arith.mulf %242, %252 : vector<8x128xf32>
    %254 = arith.mulf %236, %244 : vector<8x128xf32>
    %255 = arith.addf %253, %254 : vector<8x128xf32>
    %256 = math.tanh %255 : vector<8x128xf32>
    %257 = arith.mulf %250, %256 : vector<8x128xf32>
    %c1_136 = arith.constant 1 : index
    %c0_137 = arith.constant 0 : index
    %c0_138 = arith.constant 0 : index
    %258 = vector.load %arg16[%c1_136, %c0_137, %c0_138] : memref<2x8x128xf32, #tpu.memory_space<vmem>>, vector<1x8x128xf32>
    %259 = vector.shape_cast %258 : vector<1x8x128xf32> to vector<8x128xf32>
    %260 = vector.shape_cast %255 : vector<8x128xf32> to vector<1x8x128xf32>
    tpu.vector_store %arg16[%c1_136, %c0_137, %c0_138], %260 {strides = array<i32>} : memref<2x8x128xf32, #tpu.memory_space<vmem>>, vector<1x8x128xf32>,
    %c1_139 = arith.constant 1 : index
    %c0_140 = arith.constant 0 : index
    %c0_141 = arith.constant 0 : index
    %261 = vector.load %arg15[%c1_139, %c0_140, %c0_141] : memref<2x8x128xf32, #tpu.memory_space<vmem>>, vector<1x8x128xf32>
    %262 = vector.shape_cast %261 : vector<1x8x128xf32> to vector<8x128xf32>
    %263 = vector.shape_cast %257 : vector<8x128xf32> to vector<1x8x128xf32>
    tpu.vector_store %arg15[%c1_139, %c0_140, %c0_141], %263 {strides = array<i32>} : memref<2x8x128xf32, #tpu.memory_space<vmem>>, vector<1x8x128xf32>,
    %264 = arith.addi %0, %c0_i32_118 : i32
    %265 = vector.broadcast %264 : i32 to vector<8x1xi32>
    %266 = arith.cmpi eq, %1, %265 : vector<8x1xi32>
    %c0_142 = arith.constant 0 : index
    %c0_143 = arith.constant 0 : index
    %267 = vector.load %arg17[%c0_142, %c0_143] : memref<8x128xf32, #tpu.memory_space<vmem>>, vector<8x128xf32>
    %268 = vector.shape_cast %266 : vector<8x1xi1> to vector<8x1xi1>
    %269 = vector.broadcast %268 : vector<8x1xi1> to vector<8x128xi1>
    %270 = arith.select %269, %257, %267 : vector<8x128xi1>, vector<8x128xf32>
    %c0_144 = arith.constant 0 : index
    %c0_145 = arith.constant 0 : index
    %271 = vector.load %arg17[%c0_144, %c0_145] : memref<8x128xf32, #tpu.memory_space<vmem>>, vector<8x128xf32>
    tpu.vector_store %arg17[%c0_144, %c0_145], %270 {strides = array<i32>} : memref<8x128xf32, #tpu.memory_space<vmem>>, vector<8x128xf32>,
    %c1_i32_146 = arith.constant 1 : i32
    %c8_i32_147 = arith.constant 8 : i32
    %272 = arith.muli %c1_i32_146, %c8_i32_147 : i32
    %273 = tpu.assume_multiple %272, 8 : i32
    %c1_148 = arith.constant 1 : index
    %c0_149 = arith.constant 0 : index
    %c0_150 = arith.constant 0 : index
    %274 = vector.load %arg15[%c1_148, %c0_149, %c0_150] : memref<2x8x128xf32, #tpu.memory_space<vmem>>, vector<1x8x128xf32>
    %275 = vector.shape_cast %274 : vector<1x8x128xf32> to vector<8x128xf32>
    %276 = arith.index_cast %273 : i32 to index
    %c0_151 = arith.constant 0 : index
    %277 = vector.load %arg13[%276, %c0_151] : memref<32x512xf32, #tpu.memory_space<vmem>>, vector<8x512xf32>
    %278 = arith.truncf %275 : vector<8x128xf32> to vector<8x128xbf16>
    %c1_152 = arith.constant 1 : index
    %c0_153 = arith.constant 0 : index
    %c0_154 = arith.constant 0 : index
    %279 = vector.load %arg6[%c1_152, %c0_153, %c0_154] : memref<2x128x512xbf16, #tpu.memory_space<vmem>>, vector<1x128x512xbf16>
    %280 = vector.shape_cast %279 : vector<1x128x512xbf16> to vector<128x512xbf16>
    %cst_155 = arith.constant dense<0.000000e+00> : vector<8x512xf32>
    %281 = tpu.matmul %278, %280, %cst_155 {dimension_numbers = #tpu.dot_dimension_numbers<[1], [0], [0], [1], [0, 0, 1, 1], [], []>} : vector<8x128xbf16>, vector<128x512xbf16>, vector<8x512xf32> -> vector<8x512xf32>
    %282 = arith.addf %277, %281 : vector<8x512xf32>
    %c1_156 = arith.constant 1 : index
    %c0_157 = arith.constant 0 : index
    %c0_158 = arith.constant 0 : index
    %283 = vector.load %arg7[%c1_156, %c0_157, %c0_158] : memref<2x1x512xf32, #tpu.memory_space<vmem>>, vector<1x1x512xf32>
    %284 = vector.shape_cast %283 : vector<1x1x512xf32> to vector<1x512xf32>
    %285 = vector.broadcast %284 : vector<1x512xf32> to vector<8x512xf32>
    %286 = arith.addf %282, %285 : vector<8x512xf32>
    %287 = vector.extract_strided_slice %286 {offsets = [0, 0], sizes = [8, 128], strides = [1, 1]} : vector<8x512xf32> to vector<8x128xf32>
    %288 = arith.negf %287 : vector<8x128xf32>
    %289 = math.exp %288 : vector<8x128xf32>
    %cst_159 = arith.constant 1.000000e+00 : f32
    %290 = vector.broadcast %cst_159 : f32 to vector<8x128xf32>
    %291 = arith.addf %290, %289 : vector<8x128xf32>
    %292 = arith.divf %290, %291 : vector<8x128xf32>
    %293 = vector.extract_strided_slice %286 {offsets = [0, 128], sizes = [8, 128], strides = [1, 1]} : vector<8x512xf32> to vector<8x128xf32>
    %294 = arith.negf %293 : vector<8x128xf32>
    %295 = math.exp %294 : vector<8x128xf32>
    %cst_160 = arith.constant 1.000000e+00 : f32
    %296 = vector.broadcast %cst_160 : f32 to vector<8x128xf32>
    %297 = arith.addf %296, %295 : vector<8x128xf32>
    %298 = arith.divf %296, %297 : vector<8x128xf32>
    %299 = vector.extract_strided_slice %286 {offsets = [0, 256], sizes = [8, 128], strides = [1, 1]} : vector<8x512xf32> to vector<8x128xf32>
    %300 = math.tanh %299 : vector<8x128xf32>
    %301 = vector.extract_strided_slice %286 {offsets = [0, 384], sizes = [8, 128], strides = [1, 1]} : vector<8x512xf32> to vector<8x128xf32>
    %302 = arith.negf %301 : vector<8x128xf32>
    %303 = math.exp %302 : vector<8x128xf32>
    %cst_161 = arith.constant 1.000000e+00 : f32
    %304 = vector.broadcast %cst_161 : f32 to vector<8x128xf32>
    %305 = arith.addf %304, %303 : vector<8x128xf32>
    %306 = arith.divf %304, %305 : vector<8x128xf32>
    %c1_162 = arith.constant 1 : index
    %c0_163 = arith.constant 0 : index
    %c0_164 = arith.constant 0 : index
    %307 = vector.load %arg16[%c1_162, %c0_163, %c0_164] : memref<2x8x128xf32, #tpu.memory_space<vmem>>, vector<1x8x128xf32>
    %308 = vector.shape_cast %307 : vector<1x8x128xf32> to vector<8x128xf32>
    %309 = arith.mulf %298, %308 : vector<8x128xf32>
    %310 = arith.mulf %292, %300 : vector<8x128xf32>
    %311 = arith.addf %309, %310 : vector<8x128xf32>
    %312 = math.tanh %311 : vector<8x128xf32>
    %313 = arith.mulf %306, %312 : vector<8x128xf32>
    %c1_165 = arith.constant 1 : index
    %c0_166 = arith.constant 0 : index
    %c0_167 = arith.constant 0 : index
    %314 = vector.load %arg16[%c1_165, %c0_166, %c0_167] : memref<2x8x128xf32, #tpu.memory_space<vmem>>, vector<1x8x128xf32>
    %315 = vector.shape_cast %314 : vector<1x8x128xf32> to vector<8x128xf32>
    %316 = vector.shape_cast %311 : vector<8x128xf32> to vector<1x8x128xf32>
    tpu.vector_store %arg16[%c1_165, %c0_166, %c0_167], %316 {strides = array<i32>} : memref<2x8x128xf32, #tpu.memory_space<vmem>>, vector<1x8x128xf32>,
    %c1_168 = arith.constant 1 : index
    %c0_169 = arith.constant 0 : index
    %c0_170 = arith.constant 0 : index
    %317 = vector.load %arg15[%c1_168, %c0_169, %c0_170] : memref<2x8x128xf32, #tpu.memory_space<vmem>>, vector<1x8x128xf32>
    %318 = vector.shape_cast %317 : vector<1x8x128xf32> to vector<8x128xf32>
    %319 = vector.shape_cast %313 : vector<8x128xf32> to vector<1x8x128xf32>
    tpu.vector_store %arg15[%c1_168, %c0_169, %c0_170], %319 {strides = array<i32>} : memref<2x8x128xf32, #tpu.memory_space<vmem>>, vector<1x8x128xf32>,
    %320 = arith.addi %0, %c1_i32_146 : i32
    %321 = vector.broadcast %320 : i32 to vector<8x1xi32>
    %322 = arith.cmpi eq, %1, %321 : vector<8x1xi32>
    %c0_171 = arith.constant 0 : index
    %c0_172 = arith.constant 0 : index
    %323 = vector.load %arg17[%c0_171, %c0_172] : memref<8x128xf32, #tpu.memory_space<vmem>>, vector<8x128xf32>
    %324 = vector.shape_cast %322 : vector<8x1xi1> to vector<8x1xi1>
    %325 = vector.broadcast %324 : vector<8x1xi1> to vector<8x128xi1>
    %326 = arith.select %325, %313, %323 : vector<8x128xi1>, vector<8x128xf32>
    %c0_173 = arith.constant 0 : index
    %c0_174 = arith.constant 0 : index
    %327 = vector.load %arg17[%c0_173, %c0_174] : memref<8x128xf32, #tpu.memory_space<vmem>>, vector<8x128xf32>
    tpu.vector_store %arg17[%c0_173, %c0_174], %326 {strides = array<i32>} : memref<8x128xf32, #tpu.memory_space<vmem>>, vector<8x128xf32>,
    %c2_i32_175 = arith.constant 2 : i32
    %c8_i32_176 = arith.constant 8 : i32
    %328 = arith.muli %c2_i32_175, %c8_i32_176 : i32
    %329 = tpu.assume_multiple %328, 8 : i32
    %c1_177 = arith.constant 1 : index
    %c0_178 = arith.constant 0 : index
    %c0_179 = arith.constant 0 : index
    %330 = vector.load %arg15[%c1_177, %c0_178, %c0_179] : memref<2x8x128xf32, #tpu.memory_space<vmem>>, vector<1x8x128xf32>
    %331 = vector.shape_cast %330 : vector<1x8x128xf32> to vector<8x128xf32>
    %332 = arith.index_cast %329 : i32 to index
    %c0_180 = arith.constant 0 : index
    %333 = vector.load %arg13[%332, %c0_180] : memref<32x512xf32, #tpu.memory_space<vmem>>, vector<8x512xf32>
    %334 = arith.truncf %331 : vector<8x128xf32> to vector<8x128xbf16>
    %c1_181 = arith.constant 1 : index
    %c0_182 = arith.constant 0 : index
    %c0_183 = arith.constant 0 : index
    %335 = vector.load %arg6[%c1_181, %c0_182, %c0_183] : memref<2x128x512xbf16, #tpu.memory_space<vmem>>, vector<1x128x512xbf16>
    %336 = vector.shape_cast %335 : vector<1x128x512xbf16> to vector<128x512xbf16>
    %cst_184 = arith.constant dense<0.000000e+00> : vector<8x512xf32>
    %337 = tpu.matmul %334, %336, %cst_184 {dimension_numbers = #tpu.dot_dimension_numbers<[1], [0], [0], [1], [0, 0, 1, 1], [], []>} : vector<8x128xbf16>, vector<128x512xbf16>, vector<8x512xf32> -> vector<8x512xf32>
    %338 = arith.addf %333, %337 : vector<8x512xf32>
    %c1_185 = arith.constant 1 : index
    %c0_186 = arith.constant 0 : index
    %c0_187 = arith.constant 0 : index
    %339 = vector.load %arg7[%c1_185, %c0_186, %c0_187] : memref<2x1x512xf32, #tpu.memory_space<vmem>>, vector<1x1x512xf32>
    %340 = vector.shape_cast %339 : vector<1x1x512xf32> to vector<1x512xf32>
    %341 = vector.broadcast %340 : vector<1x512xf32> to vector<8x512xf32>
    %342 = arith.addf %338, %341 : vector<8x512xf32>
    %343 = vector.extract_strided_slice %342 {offsets = [0, 0], sizes = [8, 128], strides = [1, 1]} : vector<8x512xf32> to vector<8x128xf32>
    %344 = arith.negf %343 : vector<8x128xf32>
    %345 = math.exp %344 : vector<8x128xf32>
    %cst_188 = arith.constant 1.000000e+00 : f32
    %346 = vector.broadcast %cst_188 : f32 to vector<8x128xf32>
    %347 = arith.addf %346, %345 : vector<8x128xf32>
    %348 = arith.divf %346, %347 : vector<8x128xf32>
    %349 = vector.extract_strided_slice %342 {offsets = [0, 128], sizes = [8, 128], strides = [1, 1]} : vector<8x512xf32> to vector<8x128xf32>
    %350 = arith.negf %349 : vector<8x128xf32>
    %351 = math.exp %350 : vector<8x128xf32>
    %cst_189 = arith.constant 1.000000e+00 : f32
    %352 = vector.broadcast %cst_189 : f32 to vector<8x128xf32>
    %353 = arith.addf %352, %351 : vector<8x128xf32>
    %354 = arith.divf %352, %353 : vector<8x128xf32>
    %355 = vector.extract_strided_slice %342 {offsets = [0, 256], sizes = [8, 128], strides = [1, 1]} : vector<8x512xf32> to vector<8x128xf32>
    %356 = math.tanh %355 : vector<8x128xf32>
    %357 = vector.extract_strided_slice %342 {offsets = [0, 384], sizes = [8, 128], strides = [1, 1]} : vector<8x512xf32> to vector<8x128xf32>
    %358 = arith.negf %357 : vector<8x128xf32>
    %359 = math.exp %358 : vector<8x128xf32>
    %cst_190 = arith.constant 1.000000e+00 : f32
    %360 = vector.broadcast %cst_190 : f32 to vector<8x128xf32>
    %361 = arith.addf %360, %359 : vector<8x128xf32>
    %362 = arith.divf %360, %361 : vector<8x128xf32>
    %c1_191 = arith.constant 1 : index
    %c0_192 = arith.constant 0 : index
    %c0_193 = arith.constant 0 : index
    %363 = vector.load %arg16[%c1_191, %c0_192, %c0_193] : memref<2x8x128xf32, #tpu.memory_space<vmem>>, vector<1x8x128xf32>
    %364 = vector.shape_cast %363 : vector<1x8x128xf32> to vector<8x128xf32>
    %365 = arith.mulf %354, %364 : vector<8x128xf32>
    %366 = arith.mulf %348, %356 : vector<8x128xf32>
    %367 = arith.addf %365, %366 : vector<8x128xf32>
    %368 = math.tanh %367 : vector<8x128xf32>
    %369 = arith.mulf %362, %368 : vector<8x128xf32>
    %c1_194 = arith.constant 1 : index
    %c0_195 = arith.constant 0 : index
    %c0_196 = arith.constant 0 : index
    %370 = vector.load %arg16[%c1_194, %c0_195, %c0_196] : memref<2x8x128xf32, #tpu.memory_space<vmem>>, vector<1x8x128xf32>
    %371 = vector.shape_cast %370 : vector<1x8x128xf32> to vector<8x128xf32>
    %372 = vector.shape_cast %367 : vector<8x128xf32> to vector<1x8x128xf32>
    tpu.vector_store %arg16[%c1_194, %c0_195, %c0_196], %372 {strides = array<i32>} : memref<2x8x128xf32, #tpu.memory_space<vmem>>, vector<1x8x128xf32>,
    %c1_197 = arith.constant 1 : index
    %c0_198 = arith.constant 0 : index
    %c0_199 = arith.constant 0 : index
    %373 = vector.load %arg15[%c1_197, %c0_198, %c0_199] : memref<2x8x128xf32, #tpu.memory_space<vmem>>, vector<1x8x128xf32>
    %374 = vector.shape_cast %373 : vector<1x8x128xf32> to vector<8x128xf32>
    %375 = vector.shape_cast %369 : vector<8x128xf32> to vector<1x8x128xf32>
    tpu.vector_store %arg15[%c1_197, %c0_198, %c0_199], %375 {strides = array<i32>} : memref<2x8x128xf32, #tpu.memory_space<vmem>>, vector<1x8x128xf32>,
    %376 = arith.addi %0, %c2_i32_175 : i32
    %377 = vector.broadcast %376 : i32 to vector<8x1xi32>
    %378 = arith.cmpi eq, %1, %377 : vector<8x1xi32>
    %c0_200 = arith.constant 0 : index
    %c0_201 = arith.constant 0 : index
    %379 = vector.load %arg17[%c0_200, %c0_201] : memref<8x128xf32, #tpu.memory_space<vmem>>, vector<8x128xf32>
    %380 = vector.shape_cast %378 : vector<8x1xi1> to vector<8x1xi1>
    %381 = vector.broadcast %380 : vector<8x1xi1> to vector<8x128xi1>
    %382 = arith.select %381, %369, %379 : vector<8x128xi1>, vector<8x128xf32>
    %c0_202 = arith.constant 0 : index
    %c0_203 = arith.constant 0 : index
    %383 = vector.load %arg17[%c0_202, %c0_203] : memref<8x128xf32, #tpu.memory_space<vmem>>, vector<8x128xf32>
    tpu.vector_store %arg17[%c0_202, %c0_203], %382 {strides = array<i32>} : memref<8x128xf32, #tpu.memory_space<vmem>>, vector<8x128xf32>,
    %c3_i32_204 = arith.constant 3 : i32
    %c8_i32_205 = arith.constant 8 : i32
    %384 = arith.muli %c3_i32_204, %c8_i32_205 : i32
    %385 = tpu.assume_multiple %384, 8 : i32
    %c1_206 = arith.constant 1 : index
    %c0_207 = arith.constant 0 : index
    %c0_208 = arith.constant 0 : index
    %386 = vector.load %arg15[%c1_206, %c0_207, %c0_208] : memref<2x8x128xf32, #tpu.memory_space<vmem>>, vector<1x8x128xf32>
    %387 = vector.shape_cast %386 : vector<1x8x128xf32> to vector<8x128xf32>
    %388 = arith.index_cast %385 : i32 to index
    %c0_209 = arith.constant 0 : index
    %389 = vector.load %arg13[%388, %c0_209] : memref<32x512xf32, #tpu.memory_space<vmem>>, vector<8x512xf32>
    %390 = arith.truncf %387 : vector<8x128xf32> to vector<8x128xbf16>
    %c1_210 = arith.constant 1 : index
    %c0_211 = arith.constant 0 : index
    %c0_212 = arith.constant 0 : index
    %391 = vector.load %arg6[%c1_210, %c0_211, %c0_212] : memref<2x128x512xbf16, #tpu.memory_space<vmem>>, vector<1x128x512xbf16>
    %392 = vector.shape_cast %391 : vector<1x128x512xbf16> to vector<128x512xbf16>
    %cst_213 = arith.constant dense<0.000000e+00> : vector<8x512xf32>
    %393 = tpu.matmul %390, %392, %cst_213 {dimension_numbers = #tpu.dot_dimension_numbers<[1], [0], [0], [1], [0, 0, 1, 1], [], []>} : vector<8x128xbf16>, vector<128x512xbf16>, vector<8x512xf32> -> vector<8x512xf32>
    %394 = arith.addf %389, %393 : vector<8x512xf32>
    %c1_214 = arith.constant 1 : index
    %c0_215 = arith.constant 0 : index
    %c0_216 = arith.constant 0 : index
    %395 = vector.load %arg7[%c1_214, %c0_215, %c0_216] : memref<2x1x512xf32, #tpu.memory_space<vmem>>, vector<1x1x512xf32>
    %396 = vector.shape_cast %395 : vector<1x1x512xf32> to vector<1x512xf32>
    %397 = vector.broadcast %396 : vector<1x512xf32> to vector<8x512xf32>
    %398 = arith.addf %394, %397 : vector<8x512xf32>
    %399 = vector.extract_strided_slice %398 {offsets = [0, 0], sizes = [8, 128], strides = [1, 1]} : vector<8x512xf32> to vector<8x128xf32>
    %400 = arith.negf %399 : vector<8x128xf32>
    %401 = math.exp %400 : vector<8x128xf32>
    %cst_217 = arith.constant 1.000000e+00 : f32
    %402 = vector.broadcast %cst_217 : f32 to vector<8x128xf32>
    %403 = arith.addf %402, %401 : vector<8x128xf32>
    %404 = arith.divf %402, %403 : vector<8x128xf32>
    %405 = vector.extract_strided_slice %398 {offsets = [0, 128], sizes = [8, 128], strides = [1, 1]} : vector<8x512xf32> to vector<8x128xf32>
    %406 = arith.negf %405 : vector<8x128xf32>
    %407 = math.exp %406 : vector<8x128xf32>
    %cst_218 = arith.constant 1.000000e+00 : f32
    %408 = vector.broadcast %cst_218 : f32 to vector<8x128xf32>
    %409 = arith.addf %408, %407 : vector<8x128xf32>
    %410 = arith.divf %408, %409 : vector<8x128xf32>
    %411 = vector.extract_strided_slice %398 {offsets = [0, 256], sizes = [8, 128], strides = [1, 1]} : vector<8x512xf32> to vector<8x128xf32>
    %412 = math.tanh %411 : vector<8x128xf32>
    %413 = vector.extract_strided_slice %398 {offsets = [0, 384], sizes = [8, 128], strides = [1, 1]} : vector<8x512xf32> to vector<8x128xf32>
    %414 = arith.negf %413 : vector<8x128xf32>
    %415 = math.exp %414 : vector<8x128xf32>
    %cst_219 = arith.constant 1.000000e+00 : f32
    %416 = vector.broadcast %cst_219 : f32 to vector<8x128xf32>
    %417 = arith.addf %416, %415 : vector<8x128xf32>
    %418 = arith.divf %416, %417 : vector<8x128xf32>
    %c1_220 = arith.constant 1 : index
    %c0_221 = arith.constant 0 : index
    %c0_222 = arith.constant 0 : index
    %419 = vector.load %arg16[%c1_220, %c0_221, %c0_222] : memref<2x8x128xf32, #tpu.memory_space<vmem>>, vector<1x8x128xf32>
    %420 = vector.shape_cast %419 : vector<1x8x128xf32> to vector<8x128xf32>
    %421 = arith.mulf %410, %420 : vector<8x128xf32>
    %422 = arith.mulf %404, %412 : vector<8x128xf32>
    %423 = arith.addf %421, %422 : vector<8x128xf32>
    %424 = math.tanh %423 : vector<8x128xf32>
    %425 = arith.mulf %418, %424 : vector<8x128xf32>
    %c1_223 = arith.constant 1 : index
    %c0_224 = arith.constant 0 : index
    %c0_225 = arith.constant 0 : index
    %426 = vector.load %arg16[%c1_223, %c0_224, %c0_225] : memref<2x8x128xf32, #tpu.memory_space<vmem>>, vector<1x8x128xf32>
    %427 = vector.shape_cast %426 : vector<1x8x128xf32> to vector<8x128xf32>
    %428 = vector.shape_cast %423 : vector<8x128xf32> to vector<1x8x128xf32>
    tpu.vector_store %arg16[%c1_223, %c0_224, %c0_225], %428 {strides = array<i32>} : memref<2x8x128xf32, #tpu.memory_space<vmem>>, vector<1x8x128xf32>,
    %c1_226 = arith.constant 1 : index
    %c0_227 = arith.constant 0 : index
    %c0_228 = arith.constant 0 : index
    %429 = vector.load %arg15[%c1_226, %c0_227, %c0_228] : memref<2x8x128xf32, #tpu.memory_space<vmem>>, vector<1x8x128xf32>
    %430 = vector.shape_cast %429 : vector<1x8x128xf32> to vector<8x128xf32>
    %431 = vector.shape_cast %425 : vector<8x128xf32> to vector<1x8x128xf32>
    tpu.vector_store %arg15[%c1_226, %c0_227, %c0_228], %431 {strides = array<i32>} : memref<2x8x128xf32, #tpu.memory_space<vmem>>, vector<1x8x128xf32>,
    %432 = arith.addi %0, %c3_i32_204 : i32
    %433 = vector.broadcast %432 : i32 to vector<8x1xi32>
    %434 = arith.cmpi eq, %1, %433 : vector<8x1xi32>
    %c0_229 = arith.constant 0 : index
    %c0_230 = arith.constant 0 : index
    %435 = vector.load %arg17[%c0_229, %c0_230] : memref<8x128xf32, #tpu.memory_space<vmem>>, vector<8x128xf32>
    %436 = vector.shape_cast %434 : vector<8x1xi1> to vector<8x1xi1>
    %437 = vector.broadcast %436 : vector<8x1xi1> to vector<8x128xi1>
    %438 = arith.select %437, %425, %435 : vector<8x128xi1>, vector<8x128xf32>
    %c0_231 = arith.constant 0 : index
    %c0_232 = arith.constant 0 : index
    %439 = vector.load %arg17[%c0_231, %c0_232] : memref<8x128xf32, #tpu.memory_space<vmem>>, vector<8x128xf32>
    tpu.vector_store %arg17[%c0_231, %c0_232], %438 {strides = array<i32>} : memref<8x128xf32, #tpu.memory_space<vmem>>, vector<8x128xf32>,
    %c4_i32_233 = arith.constant 4 : i32
    %c1_i32_234 = arith.constant 1 : i32
    %440 = arith.cmpi eq, %arg1, %c1_i32_234 : i32
    %441 = arith.extui %440 : i1 to i32
    %c0_i32_235 = arith.constant 0 : i32
    %442 = arith.cmpi ne, %441, %c0_i32_235 : i32
    scf.if %442 {
      %c0_236 = arith.constant 0 : index
      %c0_237 = arith.constant 0 : index
      %443 = vector.load %arg17[%c0_236, %c0_237] : memref<8x128xf32, #tpu.memory_space<vmem>>, vector<8x128xf32>
      %444 = arith.truncf %443 : vector<8x128xf32> to vector<8x128xbf16>
      %c0_238 = arith.constant 0 : index
      %c0_239 = arith.constant 0 : index
      %445 = vector.load %arg10[%c0_238, %c0_239] : memref<128x128xbf16, #tpu.memory_space<vmem>>, vector<128x128xbf16>
      %cst_240 = arith.constant dense<0.000000e+00> : vector<8x128xf32>
      %446 = tpu.matmul %444, %445, %cst_240 {dimension_numbers = #tpu.dot_dimension_numbers<[1], [0], [0], [1], [0, 0, 1, 1], [], []>} : vector<8x128xbf16>, vector<128x128xbf16>, vector<8x128xf32> -> vector<8x128xf32>
      %c0_241 = arith.constant 0 : index
      %c0_242 = arith.constant 0 : index
      %447 = vector.load %arg11[%c0_241, %c0_242] : memref<1x128xf32, #tpu.memory_space<vmem>>, vector<1x128xf32>
      %448 = vector.broadcast %447 : vector<1x128xf32> to vector<8x128xf32>
      %449 = arith.addf %446, %448 : vector<8x128xf32>
      %c0_243 = arith.constant 0 : index
      %c0_244 = arith.constant 0 : index
      %450 = vector.load %arg12[%c0_243, %c0_244] : memref<8x128xf32, #tpu.memory_space<vmem>>, vector<8x128xf32>
      tpu.vector_store %arg12[%c0_243, %c0_244], %449 {strides = array<i32>} : memref<8x128xf32, #tpu.memory_space<vmem>>, vector<8x128xf32>,
    } else {
    }
    return
  }
  func.func @transform_0(%arg0: i32, %arg1: i32) -> (i32, i32) {
    %c0_i32 = arith.constant 0 : i32
    %c0_i32_0 = arith.constant 0 : i32
    return %arg0, %c0_i32 : i32, i32
  }
  func.func @transform_1(%arg0: i32, %arg1: i32) -> (i32, i32, i32) {
    %c0_i32 = arith.constant 0 : i32
    %c0_i32_0 = arith.constant 0 : i32
    return %arg0, %arg1, %c0_i32 : i32, i32, i32
  }
  func.func @transform_2(%arg0: i32, %arg1: i32) -> (i32, i32) {
    %c0_i32 = arith.constant 0 : i32
    %c0_i32_0 = arith.constant 0 : i32
    %c0_i32_1 = arith.constant 0 : i32
    return %c0_i32, %c0_i32_0 : i32, i32
  }
  func.func @transform_3(%arg0: i32, %arg1: i32) -> (i32, i32, i32) {
    %c0_i32 = arith.constant 0 : i32
    %c0_i32_0 = arith.constant 0 : i32
    %c0_i32_1 = arith.constant 0 : i32
    %c0_i32_2 = arith.constant 0 : i32
    return %c0_i32, %c0_i32_0, %c0_i32_1 : i32, i32, i32
  }
  func.func @transform_4(%arg0: i32, %arg1: i32) -> (i32, i32, i32) {
    %c0_i32 = arith.constant 0 : i32
    %c0_i32_0 = arith.constant 0 : i32
    %c0_i32_1 = arith.constant 0 : i32
    %c0_i32_2 = arith.constant 0 : i32
    return %c0_i32, %c0_i32_0, %c0_i32_1 : i32, i32, i32
  }
  func.func @transform_5(%arg0: i32, %arg1: i32) -> (i32, i32, i32) {
    %c0_i32 = arith.constant 0 : i32
    %c0_i32_0 = arith.constant 0 : i32
    %c0_i32_1 = arith.constant 0 : i32
    %c0_i32_2 = arith.constant 0 : i32
    return %c0_i32, %c0_i32_0, %c0_i32_1 : i32, i32, i32
  }
  func.func @transform_6(%arg0: i32, %arg1: i32) -> (i32, i32, i32) {
    %c0_i32 = arith.constant 0 : i32
    %c0_i32_0 = arith.constant 0 : i32
    %c0_i32_1 = arith.constant 0 : i32
    return %c0_i32, %arg0, %c0_i32_0 : i32, i32, i32
  }
  func.func @transform_7(%arg0: i32, %arg1: i32) -> (i32, i32, i32) {
    %c0_i32 = arith.constant 0 : i32
    %c0_i32_0 = arith.constant 0 : i32
    %c0_i32_1 = arith.constant 0 : i32
    return %c0_i32, %arg0, %c0_i32_0 : i32, i32, i32
  }
  func.func @transform_8(%arg0: i32, %arg1: i32) -> (i32, i32) {
    %c0_i32 = arith.constant 0 : i32
    %c0_i32_0 = arith.constant 0 : i32
    %c0_i32_1 = arith.constant 0 : i32
    return %c0_i32, %c0_i32_0 : i32, i32
  }
  func.func @transform_9(%arg0: i32, %arg1: i32) -> (i32, i32) {
    %c0_i32 = arith.constant 0 : i32
    %c0_i32_0 = arith.constant 0 : i32
    %c0_i32_1 = arith.constant 0 : i32
    return %c0_i32, %c0_i32_0 : i32, i32
  }
  func.func @transform_10(%arg0: i32, %arg1: i32) -> (i32, i32) {
    %c0_i32 = arith.constant 0 : i32
    %c0_i32_0 = arith.constant 0 : i32
    return %arg0, %c0_i32 : i32, i32
  }
}

</mosaic_0001>

<llo_original>
// kernel: tpu_custom_call.1
$region0: #{tpu_custom_call.1}
  #allocation0 [shape = 'u32[]', space=smem, size = 0x4, offset = 0x4, fixed_abs, tag = 'smem constant byte address 0x4 - core index']
  #allocation1 [shape = 'u32[144,128]{1,0:T(1,128)}', space=vmem, size = 0x12000, scoped, tag = 'internal scratch']
  #allocation2 [shape = 'f32[32,512]{1,0:T(8,128)}', space=vmem, size = 0x10000, scoped, tag = 'scratch operand']
  #allocation3 [shape = 'f32[32,128]{1,0:T(8,128)}', space=vmem, size = 0x4000, scoped, tag = 'scratch operand']
  #allocation4 [shape = 'f32[2,8,128]{2,1,0:T(8,128)}', space=vmem, size = 0x2000, scoped, tag = 'scratch operand']
  #allocation5 [shape = 'f32[2,8,128]{2,1,0:T(8,128)}', space=vmem, size = 0x2000, scoped, tag = 'scratch operand']
  #allocation6 [shape = 'f32[8,128]{1,0:T(8,128)}', space=vmem, size = 0x1000, scoped, tag = 'scratch operand']
  %s0 = inlined_call_operand.vmem [shape: s32[8,1], index: 0, kind: input, shape index: {}]
  %s1 = inlined_call_operand.hbm [shape: bf16[1,64,128], index: 1, kind: input, shape index: {}]
  %s2 = inlined_call_operand.hbm [shape: bf16[128,512], index: 2, kind: input, shape index: {}]
  %s3 = inlined_call_operand.hbm [shape: bf16[1,128,512], index: 3, kind: input, shape index: {}]
  %s4 = inlined_call_operand.hbm [shape: bf16[2,128,512], index: 4, kind: input, shape index: {}]
  %s5 = inlined_call_operand.hbm [shape: f32[2,1,512], index: 5, kind: input, shape index: {}]
  %s6 = inlined_call_operand.vmem [shape: f32[2,8,128], index: 6, kind: input, shape index: {}]
  %s7 = inlined_call_operand.hbm [shape: f32[2,8,128], index: 7, kind: input, shape index: {}]
  %s8 = inlined_call_operand.hbm [shape: bf16[128,128], index: 8, kind: input, shape index: {}]
  %s9 = inlined_call_operand.vmem [shape: f32[1,128], index: 9, kind: input, shape index: {}]
  %s10 = inlined_call_operand.hbm [shape: f32[8,128], index: 10, kind: output, shape index: {}]
  %s11 = sld [smem:[#allocation0]]
  $region109: #{tpu_custom_call.1} parent=0
    _
  %s13 = ssub.s32 1, %s11
  %s14 = scalar_select 0, %s13, %s11
  $region1: #{tpu_custom_call.1} parent=0
    #allocation7 [shape = 'u8[16384]{0}', space=vmem, size = 0x4000, scoped, tag = 'input window, operand 1']
    #allocation8 [shape = 's32[2]{0}', space=sflag, size = 0x8, scoped, tag = 'scoped memory for tpu_custom_call.1']
    #allocation9 [shape = 's32[2]{0}', space=sflag, size = 0x8, scoped, tag = 'scoped memory for tpu_custom_call.1']
    #allocation10 [shape = 'u8[131072]{0}', space=vmem, size = 0x20000, scoped, tag = 'input window, operand 2, single buffered']
    #allocation11 [shape = 's32[1]{0}', space=sflag, size = 0x4, scoped, tag = 'scoped memory for tpu_custom_call.1']
    #allocation12 [shape = 'u8[131072]{0}', space=vmem, size = 0x20000, scoped, tag = 'input window, operand 3, single buffered']
    #allocation13 [shape = 'u8[262144]{0}', space=vmem, size = 0x40000, scoped, tag = 'input window, operand 4, single buffered']
    #allocation14 [shape = 's32[1]{0}', space=sflag, size = 0x4, scoped, tag = 'scoped memory for tpu_custom_call.1']
    #allocation15 [shape = 'u8[4096]{0}', space=vmem, size = 0x1000, scoped, tag = 'input window, operand 5, single buffered']
    #allocation16 [shape = 'u8[8192]{0}', space=vmem, size = 0x2000, scoped, tag = 'input window, operand 7, single buffered']
    #allocation17 [shape = 's32[1]{0}', space=sflag, size = 0x4, scoped, tag = 'scoped memory for tpu_custom_call.1']
    #allocation18 [shape = 'u8[32768]{0}', space=vmem, size = 0x8000, scoped, tag = 'input window, operand 8, single buffered']
    #allocation19 [shape = 'u8[4096]{0}', space=vmem, size = 0x1000, scoped, tag = 'output window, operand 0, single buffered']
    %15 = vsyncpa [#allocation8], 0
    %s16 = scalar_lea.sflag [#allocation8], 1
    %17 = vsyncpa %s16, 0
    %18 = vsyncpa [#allocation11], 0
    %19 = vsyncpa [#allocation14], 0
    %20 = vsyncpa [#allocation17], 0
    %21 = vsyncpa [#allocation9], 0
    loop: start=0, step=1, limit=4
    $region2: #{tpu_custom_call.1} parent=1 // loop_pre_header
      _
    $region3: #{tpu_custom_call.1} parent=1 // loop_header
      %s23 = sphi 0, %s27
      %p24 = scmp.ge.s32.totalorder %s23, 4
      %s30 = sphi 0, %s42
      %s31 = sphi 0, %s38
      %s32 = sphi 0, %s30
      %s33 = sphi 0, %s31
      %s34 = sphi 0, %s32
      %s35 = sphi 0, %s33
      %s45 = sphi 0, %s47
      %s48 = sphi 0, %s45
      %s49 = sphi 0, %s48
      %s65 = sphi 0, %s49
      %s73 = sphi 0, %s75
      %s76 = sphi 0, %s73
      %s77 = sphi 0, %s76
      %s93 = sphi 0, %s77
      %s97 = sphi 0, %s97
      %s99 = sphi 0, %s97
      %s100 = sphi 0, %s99
      %s114 = sphi 0, %s100
      %s118 = sphi 0, %s118
      %s120 = sphi 0, %s118
      %s121 = sphi 0, %s120
      %s135 = sphi 0, %s121
      %s139 = sphi 0, %s139
      %s141 = sphi 0, %s139
      %s142 = sphi 0, %s141
      %s156 = sphi 0, %s142
      %s160 = sphi 0, %s160
      %s162 = sphi 0, %s160
      %s163 = sphi 0, %s162
      %s177 = sphi 0, %s163
      %s183 = sphi 0, %s185
      %s186 = sphi 0, %s183
      %s187 = sphi 0, %s186
      %s203 = sphi 0, %s187
      %s209 = sphi 0, %s211
      %s212 = sphi 0, %s209
      %s213 = sphi 0, %s212
      %s229 = sphi 0, %s213
      %s233 = sphi 0, %s233
      %s235 = sphi 0, %s233
      %s236 = sphi 0, %s235
      %s250 = sphi 0, %s236
      %s254 = sphi 0, %s254
      %s256 = sphi 0, %s254
      %s257 = sphi 0, %s256
      %s271 = sphi 0, %s257
      %s277 = sphi 0, %s279
      %s280 = sphi 0, %s277
      %s281 = sphi 0, %s280
      %s297 = sphi 0, %s281
    $region4: #{tpu_custom_call.1} parent=1 // loop_header_branch
      %26 = sbr.rel (%p24) target = $region8
    $region5: #{tpu_custom_call.1} parent=1 // loop_body
      %s28 = ssub.s32 %s23, 1
      %s29 = ssub.s32 %s23, 2
      %s36 = sadd.s32 1, %s31
      %p37 = scmp.ge.s32.totalorder %s36, 2
      %s38 = scalar_select %p37, 0, %s36
      %s39 = sadd.s32 1, %s30
      %s40 = scalar_select %p37, %s39, %s30
      %p41 = scmp.ge.s32.totalorder %s40, 1
      %s42 = scalar_select %p41, 0, %s40
      %s43 = ssub.s32 %s30, %s42
      %p44 = scmp.eq.s32.totalorder %s43, 0
      %s46 = sadd.s32 %s45, 1
      %s47 = scalar_select %p44, %s45, %s46
      %p50 = pneg %p44
      %p51 = scmp.eq.s32.totalorder %s23, 1
      %p52 = por %p50, %p51
      %p53 = scmp.ne.s32.totalorder %s45, %s48
      %p54 = scmp.eq.s32.totalorder %s23, 0
      %p55 = por %p53, %p54
      %p56 = scmp.ne.s32.totalorder %s45, %s48
      %p57 = scmp.eq.s32.totalorder %s28, 1
      %p58 = por %p56, %p57
      %p59 = scmp.ne.s32.totalorder %s48, %s49
      %p60 = scmp.eq.s32.totalorder %s28, 0
      %p61 = por %p59, %p60
      %p62 = scmp.ne.s32.totalorder %s48, %s49
      %p63 = scmp.eq.s32.totalorder %s29, 1
      %p64 = por %p62, %p63
      %p66 = scmp.ne.s32.totalorder %s49, %s65
      %p67 = scmp.eq.s32.totalorder %s29, 0
      %p68 = por %p66, %p67
      %s69 = ssub.s32 %s30, %s42
      %s70 = ssub.s32 %s31, %s38
      %s71 = sor.u32 %s69, %s70
      %p72 = scmp.eq.s32.totalorder %s71, 0
      %s74 = sadd.s32 %s73, 1
      %s75 = scalar_select %p72, %s73, %s74
      %p78 = pneg %p72
      %p79 = scmp.eq.s32.totalorder %s23, 1
      %p80 = por %p78, %p79
      %p81 = scmp.ne.s32.totalorder %s73, %s76
      %p82 = scmp.eq.s32.totalorder %s23, 0
      %p83 = por %p81, %p82
      %p84 = scmp.ne.s32.totalorder %s73, %s76
      %p85 = scmp.eq.s32.totalorder %s28, 1
      %p86 = por %p84, %p85
      %p87 = scmp.ne.s32.totalorder %s76, %s77
      %p88 = scmp.eq.s32.totalorder %s28, 0
      %p89 = por %p87, %p88
      %p90 = scmp.ne.s32.totalorder %s76, %s77
      %p91 = scmp.eq.s32.totalorder %s29, 1
      %p92 = por %p90, %p91
      %p94 = scmp.ne.s32.totalorder %s77, %s93
      %p95 = scmp.eq.s32.totalorder %s29, 0
      %p96 = por %p94, %p95
      %s98 = sadd.s32 %s97, 1
      %p101 = scmp.eq.s32.totalorder %s23, 1
      %p102 = scmp.ne.s32.totalorder %s97, %s99
      %p103 = scmp.eq.s32.totalorder %s23, 0
      %p104 = por %p102, %p103
      %p105 = scmp.ne.s32.totalorder %s97, %s99
      %p106 = scmp.eq.s32.totalorder %s28, 1
      %p107 = por %p105, %p106
      %p108 = scmp.ne.s32.totalorder %s99, %s100
      %p109 = scmp.eq.s32.totalorder %s28, 0
      %p110 = por %p108, %p109
      %p111 = scmp.ne.s32.totalorder %s99, %s100
      %p112 = scmp.eq.s32.totalorder %s29, 1
      %p113 = por %p111, %p112
      %p115 = scmp.ne.s32.totalorder %s100, %s114
      %p116 = scmp.eq.s32.totalorder %s29, 0
      %p117 = por %p115, %p116
      %s119 = sadd.s32 %s118, 1
      %p122 = scmp.eq.s32.totalorder %s23, 1
      %p123 = scmp.ne.s32.totalorder %s118, %s120
      %p124 = scmp.eq.s32.totalorder %s23, 0
      %p125 = por %p123, %p124
      %p126 = scmp.ne.s32.totalorder %s118, %s120
      %p127 = scmp.eq.s32.totalorder %s28, 1
      %p128 = por %p126, %p127
      %p129 = scmp.ne.s32.totalorder %s120, %s121
      %p130 = scmp.eq.s32.totalorder %s28, 0
      %p131 = por %p129, %p130
      %p132 = scmp.ne.s32.totalorder %s120, %s121
      %p133 = scmp.eq.s32.totalorder %s29, 1
      %p134 = por %p132, %p133
      %p136 = scmp.ne.s32.totalorder %s121, %s135
      %p137 = scmp.eq.s32.totalorder %s29, 0
      %p138 = por %p136, %p137
      %s140 = sadd.s32 %s139, 1
      %p143 = scmp.eq.s32.totalorder %s23, 1
      %p144 = scmp.ne.s32.totalorder %s139, %s141
      %p145 = scmp.eq.s32.totalorder %s23, 0
      %p146 = por %p144, %p145
      %p147 = scmp.ne.s32.totalorder %s139, %s141
      %p148 = scmp.eq.s32.totalorder %s28, 1
      %p149 = por %p147, %p148
      %p150 = scmp.ne.s32.totalorder %s141, %s142
      %p151 = scmp.eq.s32.totalorder %s28, 0
      %p152 = por %p150, %p151
      %p153 = scmp.ne.s32.totalorder %s141, %s142
      %p154 = scmp.eq.s32.totalorder %s29, 1
      %p155 = por %p153, %p154
      %p157 = scmp.ne.s32.totalorder %s142, %s156
      %p158 = scmp.eq.s32.totalorder %s29, 0
      %p159 = por %p157, %p158
      %s161 = sadd.s32 %s160, 1
      %p164 = scmp.eq.s32.totalorder %s23, 1
      %p165 = scmp.ne.s32.totalorder %s160, %s162
      %p166 = scmp.eq.s32.totalorder %s23, 0
      %p167 = por %p165, %p166
      %p168 = scmp.ne.s32.totalorder %s160, %s162
      %p169 = scmp.eq.s32.totalorder %s28, 1
      %p170 = por %p168, %p169
      %p171 = scmp.ne.s32.totalorder %s162, %s163
      %p172 = scmp.eq.s32.totalorder %s28, 0
      %p173 = por %p171, %p172
      %p174 = scmp.ne.s32.totalorder %s162, %s163
      %p175 = scmp.eq.s32.totalorder %s29, 1
      %p176 = por %p174, %p175
      %p178 = scmp.ne.s32.totalorder %s163, %s177
      %p179 = scmp.eq.s32.totalorder %s29, 0
      %p180 = por %p178, %p179
      %s181 = ssub.s32 %s30, %s42
      %p182 = scmp.eq.s32.totalorder %s181, 0
      %s184 = sadd.s32 %s183, 1
      %s185 = scalar_select %p182, %s183, %s184
      %p188 = pneg %p182
      %p189 = scmp.eq.s32.totalorder %s23, 1
      %p190 = por %p188, %p189
      %p191 = scmp.ne.s32.totalorder %s183, %s186
      %p192 = scmp.eq.s32.totalorder %s23, 0
      %p193 = por %p191, %p192
      %p194 = scmp.ne.s32.totalorder %s183, %s186
      %p195 = scmp.eq.s32.totalorder %s28, 1
      %p196 = por %p194, %p195
      %p197 = scmp.ne.s32.totalorder %s186, %s187
      %p198 = scmp.eq.s32.totalorder %s28, 0
      %p199 = por %p197, %p198
      %p200 = scmp.ne.s32.totalorder %s186, %s187
      %p201 = scmp.eq.s32.totalorder %s29, 1
      %p202 = por %p200, %p201
      %p204 = scmp.ne.s32.totalorder %s187, %s203
      %p205 = scmp.eq.s32.totalorder %s29, 0
      %p206 = por %p204, %p205
      %s207 = ssub.s32 %s30, %s42
      %p208 = scmp.eq.s32.totalorder %s207, 0
      %s210 = sadd.s32 %s209, 1
      %s211 = scalar_select %p208, %s209, %s210
      %p214 = pneg %p208
      %p215 = scmp.eq.s32.totalorder %s23, 1
      %p216 = por %p214, %p215
      %p217 = scmp.ne.s32.totalorder %s209, %s212
      %p218 = scmp.eq.s32.totalorder %s23, 0
      %p219 = por %p217, %p218
      %p220 = scmp.ne.s32.totalorder %s209, %s212
      %p221 = scmp.eq.s32.totalorder %s28, 1
      %p222 = por %p220, %p221
      %p223 = scmp.ne.s32.totalorder %s212, %s213
      %p224 = scmp.eq.s32.totalorder %s28, 0
      %p225 = por %p223, %p224
      %p226 = scmp.ne.s32.totalorder %s212, %s213
      %p227 = scmp.eq.s32.totalorder %s29, 1
      %p228 = por %p226, %p227
      %p230 = scmp.ne.s32.totalorder %s213, %s229
      %p231 = scmp.eq.s32.totalorder %s29, 0
      %p232 = por %p230, %p231
      %s234 = sadd.s32 %s233, 1
      %p237 = scmp.eq.s32.totalorder %s23, 1
      %p238 = scmp.ne.s32.totalorder %s233, %s235
      %p239 = scmp.eq.s32.totalorder %s23, 0
      %p240 = por %p238, %p239
      %p241 = scmp.ne.s32.totalorder %s233, %s235
      %p242 = scmp.eq.s32.totalorder %s28, 1
      %p243 = por %p241, %p242
      %p244 = scmp.ne.s32.totalorder %s235, %s236
      %p245 = scmp.eq.s32.totalorder %s28, 0
      %p246 = por %p244, %p245
      %p247 = scmp.ne.s32.totalorder %s235, %s236
      %p248 = scmp.eq.s32.totalorder %s29, 1
      %p249 = por %p247, %p248
      %p251 = scmp.ne.s32.totalorder %s236, %s250
      %p252 = scmp.eq.s32.totalorder %s29, 0
      %p253 = por %p251, %p252
      %s255 = sadd.s32 %s254, 1
      %p258 = scmp.eq.s32.totalorder %s23, 1
      %p259 = scmp.ne.s32.totalorder %s254, %s256
      %p260 = scmp.eq.s32.totalorder %s23, 0
      %p261 = por %p259, %p260
      %p262 = scmp.ne.s32.totalorder %s254, %s256
      %p263 = scmp.eq.s32.totalorder %s28, 1
      %p264 = por %p262, %p263
      %p265 = scmp.ne.s32.totalorder %s256, %s257
      %p266 = scmp.eq.s32.totalorder %s28, 0
      %p267 = por %p265, %p266
      %p268 = scmp.ne.s32.totalorder %s256, %s257
      %p269 = scmp.eq.s32.totalorder %s29, 1
      %p270 = por %p268, %p269
      %p272 = scmp.ne.s32.totalorder %s257, %s271
      %p273 = scmp.eq.s32.totalorder %s29, 0
      %p274 = por %p272, %p273
      %s275 = ssub.s32 %s30, %s42
      %p276 = scmp.eq.s32.totalorder %s275, 0
      %s278 = sadd.s32 %s277, 1
      %s279 = scalar_select %p276, %s277, %s278
      %p282 = pneg %p276
      %p283 = scmp.eq.s32.totalorder %s23, 1
      %p284 = por %p282, %p283
      %p285 = scmp.ne.s32.totalorder %s277, %s280
      %p286 = scmp.eq.s32.totalorder %s23, 0
      %p287 = por %p285, %p286
      %p288 = scmp.ne.s32.totalorder %s277, %s280
      %p289 = scmp.eq.s32.totalorder %s28, 1
      %p290 = por %p288, %p289
      %p291 = scmp.ne.s32.totalorder %s280, %s281
      %p292 = scmp.eq.s32.totalorder %s28, 0
      %p293 = por %p291, %p292
      %p294 = scmp.ne.s32.totalorder %s280, %s281
      %p295 = scmp.eq.s32.totalorder %s29, 1
      %p296 = por %p294, %p295
      %p298 = scmp.ne.s32.totalorder %s281, %s297
      %p299 = scmp.eq.s32.totalorder %s29, 0
      %p300 = por %p298, %p299
      %p301 = scmp.le.s32.totalorder 1, %s23
      %p302 = scmp.lt.s32.totalorder %s23, 3
      %p303 = pnand %p301, %p302
      %p304 = pneg %p303
      // Predicated region
      $region9: #{tpu_custom_call.1} parent=5 // pred_check
        _
      $region10: #{tpu_custom_call.1} parent=5 // pred_check_branch
        %306 = sbr.rel (%p303) target = $region12
      $region11: #{tpu_custom_call.1} parent=5 // pred_region
        %s307 = ssub.s32 %s23, 1
        // Predicated region
        $region13: #{tpu_custom_call.1} parent=11 // pred_check
          %p308 = pneg %p61
        $region14: #{tpu_custom_call.1} parent=11 // pred_check_branch
          %310 = sbr.rel (%p308) target = $region16
        $region15: #{tpu_custom_call.1} parent=11 // pred_region
          %p311 = scmp.lt.s32.totalorder %s32, 0
          %s312 = scalar_select %p311, %s32, 0
          %s313 = smul.addr %s312, 8
          %s314 = scalar_lea.vmem %s0, %s313
        $region16: #{tpu_custom_call.1} parent=11 // pred_fallthru
          _
        // Predicated region
        $region17: #{tpu_custom_call.1} parent=11 // pred_check
          %p315 = pneg %p110
        $region18: #{tpu_custom_call.1} parent=11 // pred_check_branch
          %317 = sbr.rel (%p315) target = $region20
        $region19: #{tpu_custom_call.1} parent=11 // pred_region
          %s319 = ssub.s32 4096, 4096
          %320 = vsyncadd [#allocation11], %s319
          %s321 = sshll.u32 [#allocation10], 4
          %s322 = int_to_ptr.vmem [resolvable:$true] %s321
          %327 = dma.hbm_to_vmem [thread:$0]  %s2, 4096, %s322, [#allocation11], 256, 256, 16
        $region20: #{tpu_custom_call.1} parent=11 // pred_fallthru
          _
        // Predicated region
        $region21: #{tpu_custom_call.1} parent=11 // pred_check
          %p328 = pneg %p131
        $region22: #{tpu_custom_call.1} parent=11 // pred_check_branch
          %330 = sbr.rel (%p328) target = $region24
        $region23: #{tpu_custom_call.1} parent=11 // pred_region
          %s332 = ssub.s32 4096, 4096
          %333 = vsyncadd [#allocation11], %s332
          %s334 = sshll.u32 [#allocation12], 4
          %s335 = int_to_ptr.vmem [resolvable:$true] %s334
          %340 = dma.hbm_to_vmem [thread:$0]  %s3, 4096, %s335, [#allocation11], 256, 256, 16
        $region24: #{tpu_custom_call.1} parent=11 // pred_fallthru
          _
        // Predicated region
        $region25: #{tpu_custom_call.1} parent=11 // pred_check
          %p341 = pneg %p152
        $region26: #{tpu_custom_call.1} parent=11 // pred_check_branch
          %343 = sbr.rel (%p341) target = $region28
        $region27: #{tpu_custom_call.1} parent=11 // pred_region
          %s345 = ssub.s32 8192, 8192
          %346 = vsyncadd [#allocation14], %s345
          %s347 = sshll.u32 [#allocation13], 4
          %s348 = int_to_ptr.vmem [resolvable:$true] %s347
          %353 = dma.hbm_to_vmem [thread:$0]  %s4, 8192, %s348, [#allocation14], 256, 256, 16
        $region28: #{tpu_custom_call.1} parent=11 // pred_fallthru
          _
        // Predicated region
        $region29: #{tpu_custom_call.1} parent=11 // pred_check
          %p354 = pneg %p173
        $region30: #{tpu_custom_call.1} parent=11 // pred_check_branch
          %356 = sbr.rel (%p354) target = $region32
        $region31: #{tpu_custom_call.1} parent=11 // pred_region
          %s358 = ssub.s32 128, 128
          %359 = vsyncadd [#allocation14], %s358
          %s360 = sshll.u32 [#allocation15], 4
          %s361 = int_to_ptr.vmem [resolvable:$true] %s360
          %366 = dma.hbm_to_vmem [thread:$0]  %s5, 128, %s361, [#allocation14], 64, 64, 4
        $region32: #{tpu_custom_call.1} parent=11 // pred_fallthru
          _
        // Predicated region
        $region33: #{tpu_custom_call.1} parent=11 // pred_check
          %p367 = pneg %p199
        $region34: #{tpu_custom_call.1} parent=11 // pred_check_branch
          %369 = sbr.rel (%p367) target = $region36
        $region35: #{tpu_custom_call.1} parent=11 // pred_region
          %p370 = scmp.lt.s32.totalorder %s32, 0
          %s371 = scalar_select %p370, %s32, 0
          %s372 = smul.addr %s371, 8
          %s373 = scalar_lea.vmem %s6, %s372
        $region36: #{tpu_custom_call.1} parent=11 // pred_fallthru
          _
        // Predicated region
        $region37: #{tpu_custom_call.1} parent=11 // pred_check
          %p374 = pneg %p225
        $region38: #{tpu_custom_call.1} parent=11 // pred_check_branch
          %376 = sbr.rel (%p374) target = $region40
        $region39: #{tpu_custom_call.1} parent=11 // pred_region
          %s378 = ssub.s32 256, 256
          %379 = vsyncadd [#allocation17], %s378
          %s380 = smul.addr %s32, 128
          %s381 = scalar_lea.hbm %s7, %s380
          %s382 = sshll.u32 [#allocation16], 4
          %s383 = int_to_ptr.vmem [resolvable:$true] %s382
          %388 = dma.hbm_to_vmem [thread:$0]  %s381, 256, %s383, [#allocation17], 128, 128, 8
        $region40: #{tpu_custom_call.1} parent=11 // pred_fallthru
          _
        // Predicated region
        $region41: #{tpu_custom_call.1} parent=11 // pred_check
          %p389 = pneg %p246
        $region42: #{tpu_custom_call.1} parent=11 // pred_check_branch
          %391 = sbr.rel (%p389) target = $region44
        $region43: #{tpu_custom_call.1} parent=11 // pred_region
          %s393 = ssub.s32 1024, 1024
          %394 = vsyncadd [#allocation17], %s393
          %s395 = sshll.u32 [#allocation18], 4
          %s396 = int_to_ptr.vmem [resolvable:$true] %s395
          %401 = dma.hbm_to_vmem [thread:$0]  %s8, 1024, %s396, [#allocation17], 64, 64, 4
        $region44: #{tpu_custom_call.1} parent=11 // pred_fallthru
          _
        // Predicated region
        $region45: #{tpu_custom_call.1} parent=11 // pred_check
          %p402 = pneg %p267
        $region46: #{tpu_custom_call.1} parent=11 // pred_check_branch
          %404 = sbr.rel (%p402) target = $region48
        $region47: #{tpu_custom_call.1} parent=11 // pred_region
          _
        $region48: #{tpu_custom_call.1} parent=11 // pred_fallthru
          _
      $region12: #{tpu_custom_call.1} parent=5 // pred_fallthru
        _
      %p405 = scmp.lt.s32.totalorder %s23, 2
      // Predicated region
      $region49: #{tpu_custom_call.1} parent=5 // pred_check
        %p406 = pneg %p405
      $region50: #{tpu_custom_call.1} parent=5 // pred_check_branch
        %408 = sbr.rel (%p406) target = $region52
      $region51: #{tpu_custom_call.1} parent=5 // pred_region
        // Predicated region
        $region53: #{tpu_custom_call.1} parent=51 // pred_check
          %p409 = pneg %p83
        $region54: #{tpu_custom_call.1} parent=51 // pred_check_branch
          %411 = sbr.rel (%p409) target = $region56
        $region55: #{tpu_custom_call.1} parent=51 // pred_region
          %s412 = sand.u32 %s73, 1
          %s413 = scalar_lea.sflag [#allocation8], %s412
          %s414 = sand.u32 %s73, 1
          %s415 = smul.addr %s414, 16
          %s416 = scalar_lea.vmem [#allocation7], %s415
          %s417 = smul.u32 4, %s31
          %s419 = ssub.s32 256, 256
          %420 = vsyncadd %s413, %s419
          %s421 = smul.addr %s30, 8
          %s422 = sadd.s32 %s417, %s421
          %s423 = smul.addr %s422, 64
          %s424 = scalar_lea.hbm %s1, %s423
          %s425 = sshll.u32 %s416, 4
          %s426 = int_to_ptr.vmem [resolvable:$true] %s425
          %431 = dma.hbm_to_vmem [thread:$0]  %s424, 256, %s426, %s413, 64, 64, 4
        $region56: #{tpu_custom_call.1} parent=51 // pred_fallthru
          _
      $region52: #{tpu_custom_call.1} parent=5 // pred_fallthru
        _
      %p432 = scmp.le.s32.totalorder 1, %s23
      %p433 = scmp.lt.s32.totalorder %s23, 3
      %p434 = pnand %p432, %p433
      %p435 = pneg %p434
      // Predicated region
      $region57: #{tpu_custom_call.1} parent=5 // pred_check
        _
      $region58: #{tpu_custom_call.1} parent=5 // pred_check_branch
        %437 = sbr.rel (%p434) target = $region60
      $region59: #{tpu_custom_call.1} parent=5 // pred_region
        %s438 = ssub.s32 %s23, 1
        %s439 = sand.u32 %s76, 1
        %s440 = scalar_lea.sflag [#allocation8], %s439
        %s441 = sand.u32 %s76, 1
        %s442 = smul.addr %s441, 16
        %s443 = scalar_lea.vmem [#allocation7], %s442
        // Predicated region
        $region61: #{tpu_custom_call.1} parent=59 // pred_check
          %p444 = pneg %p89
        $region62: #{tpu_custom_call.1} parent=59 // pred_check_branch
          %446 = sbr.rel (%p444) target = $region64
        $region63: #{tpu_custom_call.1} parent=59 // pred_region
          %447 = dma.done %s440, 256
        $region64: #{tpu_custom_call.1} parent=59 // pred_fallthru
          _
        // Predicated region
        $region65: #{tpu_custom_call.1} parent=59 // pred_check
          %p448 = pneg %p110
        $region66: #{tpu_custom_call.1} parent=59 // pred_check_branch
          %450 = sbr.rel (%p448) target = $region68
        $region67: #{tpu_custom_call.1} parent=59 // pred_region
          %451 = dma.done [#allocation11], 4096
        $region68: #{tpu_custom_call.1} parent=59 // pred_fallthru
          _
        // Predicated region
        $region69: #{tpu_custom_call.1} parent=59 // pred_check
          %p452 = pneg %p131
        $region70: #{tpu_custom_call.1} parent=59 // pred_check_branch
          %454 = sbr.rel (%p452) target = $region72
        $region71: #{tpu_custom_call.1} parent=59 // pred_region
          %455 = dma.done [#allocation11], 4096
        $region72: #{tpu_custom_call.1} parent=59 // pred_fallthru
          _
        // Predicated region
        $region73: #{tpu_custom_call.1} parent=59 // pred_check
          %p456 = pneg %p152
        $region74: #{tpu_custom_call.1} parent=59 // pred_check_branch
          %458 = sbr.rel (%p456) target = $region76
        $region75: #{tpu_custom_call.1} parent=59 // pred_region
          %459 = dma.done [#allocation14], 8192
        $region76: #{tpu_custom_call.1} parent=59 // pred_fallthru
          _
        // Predicated region
        $region77: #{tpu_custom_call.1} parent=59 // pred_check
          %p460 = pneg %p173
        $region78: #{tpu_custom_call.1} parent=59 // pred_check_branch
          %462 = sbr.rel (%p460) target = $region80
        $region79: #{tpu_custom_call.1} parent=59 // pred_region
          %463 = dma.done [#allocation14], 128
        $region80: #{tpu_custom_call.1} parent=59 // pred_fallthru
          _
        // Predicated region
        $region81: #{tpu_custom_call.1} parent=59 // pred_check
          %p464 = pneg %p225
        $region82: #{tpu_custom_call.1} parent=59 // pred_check_branch
          %466 = sbr.rel (%p464) target = $region84
        $region83: #{tpu_custom_call.1} parent=59 // pred_region
          %467 = dma.done [#allocation17], 256
        $region84: #{tpu_custom_call.1} parent=59 // pred_fallthru
          _
        // Predicated region
        $region85: #{tpu_custom_call.1} parent=59 // pred_check
          %p468 = pneg %p246
        $region86: #{tpu_custom_call.1} parent=59 // pred_check_branch
          %470 = sbr.rel (%p468) target = $region88
        $region87: #{tpu_custom_call.1} parent=59 // pred_region
          %471 = dma.done [#allocation17], 1024
        $region88: #{tpu_custom_call.1} parent=59 // pred_fallthru
          _
        %p472 = scmp.lt.s32.totalorder %s32, 0
        %s473 = scalar_select %p472, %s32, 0
        %s474 = smul.addr %s473, 8
        %s475 = scalar_lea.vmem %s0, %s474
        %p476 = pneg %p61
        %p477 = pneg %p58
        %s478 = sand.u32 %s76, 1
        %s479 = scalar_lea.sflag [#allocation8], %s478
        %s480 = sand.u32 %s76, 1
        %s481 = smul.addr %s480, 16
        %s482 = scalar_lea.vmem [#allocation7], %s481
        %p483 = pneg %p89
        %p484 = pneg %p86
        %p485 = pneg %p110
        %p486 = pneg %p107
        %p487 = pneg %p131
        %p488 = pneg %p128
        %p489 = pneg %p152
        %p490 = pneg %p149
        %p491 = pneg %p173
        %p492 = pneg %p170
        %p493 = scmp.lt.s32.totalorder %s32, 0
        %s494 = scalar_select %p493, %s32, 0
        %s495 = smul.addr %s494, 8
        %s496 = scalar_lea.vmem %s6, %s495
        %p497 = pneg %p199
        %p498 = pneg %p196
        %p499 = pneg %p225
        %p500 = pneg %p222
        %p501 = pneg %p246
        %p502 = pneg %p243
        %p503 = pneg %p267
        %p504 = pneg %p264
        %p505 = pneg %p293
        %p506 = pneg %p290
        %p507 = scmp.lt.s32.totalorder %s32, 0
        %s508 = scalar_select %p507, %s32, 0
        %s509 = smul.addr %s508, 8
        %s510 = scalar_lea.vmem %s0, %s509
        %s511 = smul.u32 4, %s33
        %p512 = scmp.lt.s32.totalorder %s32, 0
        %s513 = scalar_select %p512, %s32, 0
        %s514 = smul.addr %s513, 8
        %s515 = scalar_lea.vmem %s6, %s514
        %s517 = smul.u32 %s33, 4
        %v518 = vld [vmem:[%s510] sm:$0xff]
        %p519 = scmp.eq.s32.totalorder %s33, 0
        // Predicated region
        $region89: #{tpu_custom_call.1} parent=59 // pred_check
          %p520 = pneg %p519
        $region90: #{tpu_custom_call.1} parent=59 // pred_check_branch
          %522 = sbr.rel (%p520) target = $region92
        $region91: #{tpu_custom_call.1} parent=59 // pred_region
          %v523 = vld [vmem:[%s515] sm:$0xff]
          %v524 = vld [vmem:[%s515 + $0x8] sm:$0xff]
          %525 = vst [vmem:[#allocation4] sm:$0xff] %v523
          %526 = vst [vmem:[#allocation4 + $0x8] sm:$0xff] %v524
          %v527 = vld [vmem:[#allocation16] sm:$0xff]
          %v528 = vld [vmem:[#allocation16 + $0x8] sm:$0xff]
          %529 = vst [vmem:[#allocation5] sm:$0xff] %v527
          %530 = vst [vmem:[#allocation5 + $0x8] sm:$0xff] %v528
          %531 = vst [vmem:[#allocation6] sm:$0xff] 0.0
        $region92: #{tpu_custom_call.1} parent=59 // pred_fallthru
          _
        %v532 = vld [vmem:[%s443] sm:$0xf]
        %v533 = vld [vmem:[%s443 + $0x4] sm:$0xf]
        %v534 = vld [vmem:[%s443 + $0x8] sm:$0xf]
        %v535 = vld [vmem:[%s443 + $0xc] sm:$0xf]
        %v536 = vld [vmem:[#allocation10] sm:$0xff]
        %v537 = vld [vmem:[#allocation10 + $0x8] sm:$0xff]
        %v538 = vld [vmem:[#allocation10 + $0x10] sm:$0xff]
        %v539 = vld [vmem:[#allocation10 + $0x18] sm:$0xff]
        %v540 = vld [vmem:[#allocation10 + $0x20] sm:$0xff]
        %v541 = vld [vmem:[#allocation10 + $0x28] sm:$0xff]
        %v542 = vld [vmem:[#allocation10 + $0x30] sm:$0xff]
        %v543 = vld [vmem:[#allocation10 + $0x38] sm:$0xff]
        %v544 = vld [vmem:[#allocation10 + $0x40] sm:$0xff]
        %v545 = vld [vmem:[#allocation10 + $0x48] sm:$0xff]
        %v546 = vld [vmem:[#allocation10 + $0x50] sm:$0xff]
        %v547 = vld [vmem:[#allocation10 + $0x58] sm:$0xff]
        %v548 = vld [vmem:[#allocation10 + $0x60] sm:$0xff]
        %v549 = vld [vmem:[#allocation10 + $0x68] sm:$0xff]
        %v550 = vld [vmem:[#allocation10 + $0x70] sm:$0xff]
        %v551 = vld [vmem:[#allocation10 + $0x78] sm:$0xff]
        %v552 = vld [vmem:[#allocation10 + $0x80] sm:$0xff]
        %v553 = vld [vmem:[#allocation10 + $0x88] sm:$0xff]
        %v554 = vld [vmem:[#allocation10 + $0x90] sm:$0xff]
        %v555 = vld [vmem:[#allocation10 + $0x98] sm:$0xff]
        %v556 = vld [vmem:[#allocation10 + $0xa0] sm:$0xff]
        %v557 = vld [vmem:[#allocation10 + $0xa8] sm:$0xff]
        %v558 = vld [vmem:[#allocation10 + $0xb0] sm:$0xff]
        %v559 = vld [vmem:[#allocation10 + $0xb8] sm:$0xff]
        %v560 = vld [vmem:[#allocation10 + $0xc0] sm:$0xff]
        %v561 = vld [vmem:[#allocation10 + $0xc8] sm:$0xff]
        %v562 = vld [vmem:[#allocation10 + $0xd0] sm:$0xff]
        %v563 = vld [vmem:[#allocation10 + $0xd8] sm:$0xff]
        %v564 = vld [vmem:[#allocation10 + $0xe0] sm:$0xff]
        %v565 = vld [vmem:[#allocation10 + $0xe8] sm:$0xff]
        %v566 = vld [vmem:[#allocation10 + $0xf0] sm:$0xff]
        %v567 = vld [vmem:[#allocation10 + $0xf8] sm:$0xff]
        %v572 = vunpack.c.l.b16 %v532
        %v573 = vunpack.c.l.b16 %v533
        %v574 = vunpack.c.l.b16 %v534
        %v575 = vunpack.c.l.b16 %v535
        %v576 = vpack.c.b16 %v573, %v572
        %v577 = vpack.c.b16 %v575, %v574
        %v612 = vunpack.c.l.b16 %v536
        %v613 = vunpack.c.h.b16 %v536
        %v614 = vunpack.c.l.b16 %v537
        %v615 = vunpack.c.h.b16 %v537
        %v616 = vunpack.c.l.b16 %v538
        %v617 = vunpack.c.h.b16 %v538
        %v618 = vunpack.c.l.b16 %v539
        %v619 = vunpack.c.h.b16 %v539
        %v620 = vunpack.c.l.b16 %v540
        %v621 = vunpack.c.h.b16 %v540
        %v622 = vunpack.c.l.b16 %v541
        %v623 = vunpack.c.h.b16 %v541
        %v624 = vunpack.c.l.b16 %v542
        %v625 = vunpack.c.h.b16 %v542
        %v626 = vunpack.c.l.b16 %v543
        %v627 = vunpack.c.h.b16 %v543
        %v628 = vunpack.c.l.b16 %v544
        %v629 = vunpack.c.h.b16 %v544
        %v630 = vunpack.c.l.b16 %v545
        %v631 = vunpack.c.h.b16 %v545
        %v632 = vunpack.c.l.b16 %v546
        %v633 = vunpack.c.h.b16 %v546
        %v634 = vunpack.c.l.b16 %v547
        %v635 = vunpack.c.h.b16 %v547
        %v636 = vunpack.c.l.b16 %v548
        %v637 = vunpack.c.h.b16 %v548
        %v638 = vunpack.c.l.b16 %v549
        %v639 = vunpack.c.h.b16 %v549
        %v640 = vunpack.c.l.b16 %v550
        %v641 = vunpack.c.h.b16 %v550
        %v642 = vunpack.c.l.b16 %v551
        %v643 = vunpack.c.h.b16 %v551
        %v644 = vunpack.c.l.b16 %v552
        %v645 = vunpack.c.h.b16 %v552
        %v646 = vunpack.c.l.b16 %v553
        %v647 = vunpack.c.h.b16 %v553
        %v648 = vunpack.c.l.b16 %v554
        %v649 = vunpack.c.h.b16 %v554
        %v650 = vunpack.c.l.b16 %v555
        %v651 = vunpack.c.h.b16 %v555
        %v652 = vunpack.c.l.b16 %v556
        %v653 = vunpack.c.h.b16 %v556
        %v654 = vunpack.c.l.b16 %v557
        %v655 = vunpack.c.h.b16 %v557
        %v656 = vunpack.c.l.b16 %v558
        %v657 = vunpack.c.h.b16 %v558
        %v658 = vunpack.c.l.b16 %v559
        %v659 = vunpack.c.h.b16 %v559
        %v660 = vunpack.c.l.b16 %v560
        %v661 = vunpack.c.h.b16 %v560
        %v662 = vunpack.c.l.b16 %v561
        %v663 = vunpack.c.h.b16 %v561
        %v664 = vunpack.c.l.b16 %v562
        %v665 = vunpack.c.h.b16 %v562
        %v666 = vunpack.c.l.b16 %v563
        %v667 = vunpack.c.h.b16 %v563
        %v668 = vunpack.c.l.b16 %v564
        %v669 = vunpack.c.h.b16 %v564
        %v670 = vunpack.c.l.b16 %v565
        %v671 = vunpack.c.h.b16 %v565
        %v672 = vunpack.c.l.b16 %v566
        %v673 = vunpack.c.h.b16 %v566
        %v674 = vunpack.c.l.b16 %v567
        %v675 = vunpack.c.h.b16 %v567
        %v676 = vpack.c.b16 %v616, %v612
        %v677 = vpack.c.b16 %v617, %v613
        %v678 = vpack.c.b16 %v618, %v614
        %v679 = vpack.c.b16 %v619, %v615
        %v680 = vpack.c.b16 %v624, %v620
        %v681 = vpack.c.b16 %v625, %v621
        %v682 = vpack.c.b16 %v626, %v622
        %v683 = vpack.c.b16 %v627, %v623
        %v684 = vpack.c.b16 %v632, %v628
        %v685 = vpack.c.b16 %v633, %v629
        %v686 = vpack.c.b16 %v634, %v630
        %v687 = vpack.c.b16 %v635, %v631
        %v688 = vpack.c.b16 %v640, %v636
        %v689 = vpack.c.b16 %v641, %v637
        %v690 = vpack.c.b16 %v642, %v638
        %v691 = vpack.c.b16 %v643, %v639
        %v692 = vpack.c.b16 %v648, %v644
        %v693 = vpack.c.b16 %v649, %v645
        %v694 = vpack.c.b16 %v650, %v646
        %v695 = vpack.c.b16 %v651, %v647
        %v696 = vpack.c.b16 %v656, %v652
        %v697 = vpack.c.b16 %v657, %v653
        %v698 = vpack.c.b16 %v658, %v654
        %v699 = vpack.c.b16 %v659, %v655
        %v700 = vpack.c.b16 %v664, %v660
        %v701 = vpack.c.b16 %v665, %v661
        %v702 = vpack.c.b16 %v666, %v662
        %v703 = vpack.c.b16 %v667, %v663
        %v704 = vpack.c.b16 %v672, %v668
        %v705 = vpack.c.b16 %v673, %v669
        %v706 = vpack.c.b16 %v674, %v670
        %v707 = vpack.c.b16 %v675, %v671
        %740 = vmatprep.subr.bf16.mxu0 %v705
        %741 = vmatpush1.bf16.msra.mxu0 %v704
        %742 = vmatprep.subr.bf16.mxu0 %v701
        %743 = vmatpush1.bf16.msra.mxu0 %v700
        %744 = vmatprep.subr.bf16.mxu0 %v697
        %745 = vmatpush1.bf16.msra.mxu0 %v696
        %746 = vmatprep.subr.bf16.mxu0 %v693
        %747 = vmatpush1.bf16.msra.mxu0 %v692
        %748 = vmatprep.subr.bf16.mxu0 %v689
        %749 = vmatpush1.bf16.msra.mxu0 %v688
        %750 = vmatprep.subr.bf16.mxu0 %v685
        %751 = vmatpush1.bf16.msra.mxu0 %v684
        %752 = vmatprep.subr.bf16.mxu0 %v681
        %753 = vmatpush1.bf16.msra.mxu0 %v680
        %754 = vmatprep.subr.bf16.mxu0 %v677
        %755 = vmatpush1.bf16.msra.mxu0 %v676
        %756 = vmatprep.subr.bf16.mxu0 0
        %757 = vmatpush2.bf16.msra.mxu0 0
        %758 = vmatprep.subr.bf16.mxu0 0
        %759 = vmatpush2.bf16.msra.mxu0 0
        %760 = vmatprep.subr.bf16.mxu0 0
        %761 = vmatpush2.bf16.msra.mxu0 0
        %762 = vmatprep.subr.bf16.mxu0 0
        %763 = vmatpush2.bf16.msra.mxu0 0
        %764 = vmatprep.subr.bf16.mxu0 0
        %765 = vmatpush2.bf16.msra.mxu0 0
        %766 = vmatprep.subr.bf16.mxu0 0
        %767 = vmatpush2.bf16.msra.mxu0 0
        %768 = vmatprep.subr.bf16.mxu0 0
        %769 = vmatpush2.bf16.msra.mxu0 0
        %770 = vmatprep.subr.bf16.mxu0 0
        %771 = vmatpush2.bf16.msra.mxu0 0
        %772 = vmatprep.mubr.bf16.mxu0 0
        %773 = vmatmul.mubr.bf16.gmra.mxu0 %v576
        %v774 = vpop.f32.mrf.mxu0
        %v775 = vadd.f32 0.0, %v774
        %v776 = vpop.f32.mrf.mxu0
        %v777 = vadd.f32 0.0, %v776
        %v778 = vpop.f32.mrf.mxu0
        %v779 = vadd.f32 0.0, %v778
        %v780 = vpop.f32.mrf.mxu0
        %v781 = vadd.f32 0.0, %v780
        %782 = vmatprep.mubr.bf16.mxu0 0
        %783 = vmatmul.mubr.bf16.gmra.mxu0 %v577
        %v784 = vpop.f32.mrf.mxu0
        %v785 = vadd.f32 0.0, %v784
        %v786 = vpop.f32.mrf.mxu0
        %v787 = vadd.f32 0.0, %v786
        %v788 = vpop.f32.mrf.mxu0
        %v789 = vadd.f32 0.0, %v788
        %v790 = vpop.f32.mrf.mxu0
        %v791 = vadd.f32 0.0, %v790
        %792 = vdwg.mxu0
        %793 = vmatprep.subr.bf16.mxu0 %v707
        %794 = vmatpush1.bf16.msra.mxu0 %v706
        %795 = vmatprep.subr.bf16.mxu0 %v703
        %796 = vmatpush1.bf16.msra.mxu0 %v702
        %797 = vmatprep.subr.bf16.mxu0 %v699
        %798 = vmatpush1.bf16.msra.mxu0 %v698
        %799 = vmatprep.subr.bf16.mxu0 %v695
        %800 = vmatpush1.bf16.msra.mxu0 %v694
        %801 = vmatprep.subr.bf16.mxu0 %v691
        %802 = vmatpush1.bf16.msra.mxu0 %v690
        %803 = vmatprep.subr.bf16.mxu0 %v687
        %804 = vmatpush1.bf16.msra.mxu0 %v686
        %805 = vmatprep.subr.bf16.mxu0 %v683
        %806 = vmatpush1.bf16.msra.mxu0 %v682
        %807 = vmatprep.subr.bf16.mxu0 %v679
        %808 = vmatpush1.bf16.msra.mxu0 %v678
        %809 = vmatprep.subr.bf16.mxu0 0
        %810 = vmatpush2.bf16.msra.mxu0 0
        %811 = vmatprep.subr.bf16.mxu0 0
        %812 = vmatpush2.bf16.msra.mxu0 0
        %813 = vmatprep.subr.bf16.mxu0 0
        %814 = vmatpush2.bf16.msra.mxu0 0
        %815 = vmatprep.subr.bf16.mxu0 0
        %816 = vmatpush2.bf16.msra.mxu0 0
        %817 = vmatprep.subr.bf16.mxu0 0
        %818 = vmatpush2.bf16.msra.mxu0 0
        %819 = vmatprep.subr.bf16.mxu0 0
        %820 = vmatpush2.bf16.msra.mxu0 0
        %821 = vmatprep.subr.bf16.mxu0 0
        %822 = vmatpush2.bf16.msra.mxu0 0
        %823 = vmatprep.subr.bf16.mxu0 0
        %824 = vmatpush2.bf16.msra.mxu0 0
        %825 = vmatprep.mubr.bf16.mxu0 0
        %826 = vmatmul.mubr.bf16.gmra.mxu0 %v576
        %v827 = vpop.f32.mrf.mxu0
        %v828 = vadd.f32 0.0, %v827
        %v829 = vpop.f32.mrf.mxu0
        %v830 = vadd.f32 0.0, %v829
        %v831 = vpop.f32.mrf.mxu0
        %v832 = vadd.f32 0.0, %v831
        %v833 = vpop.f32.mrf.mxu0
        %v834 = vadd.f32 0.0, %v833
        %835 = vmatprep.mubr.bf16.mxu0 0
        %836 = vmatmul.mubr.bf16.gmra.mxu0 %v577
        %v837 = vpop.f32.mrf.mxu0
        %v838 = vadd.f32 0.0, %v837
        %v839 = vpop.f32.mrf.mxu0
        %v840 = vadd.f32 0.0, %v839
        %v841 = vpop.f32.mrf.mxu0
        %v842 = vadd.f32 0.0, %v841
        %v843 = vpop.f32.mrf.mxu0
        %v844 = vadd.f32 0.0, %v843
        %845 = vdwg.mxu0
        %846 = vst [vmem:[#allocation2] sm:$0xff] %v775
        %847 = vst [vmem:[#allocation2 + $0x8] sm:$0xff] %v777
        %848 = vst [vmem:[#allocation2 + $0x10] sm:$0xff] %v828
        %849 = vst [vmem:[#allocation2 + $0x18] sm:$0xff] %v830
        %850 = vst [vmem:[#allocation2 + $0x20] sm:$0xff] %v779
        %851 = vst [vmem:[#allocation2 + $0x28] sm:$0xff] %v781
        %852 = vst [vmem:[#allocation2 + $0x30] sm:$0xff] %v832
        %853 = vst [vmem:[#allocation2 + $0x38] sm:$0xff] %v834
        %854 = vst [vmem:[#allocation2 + $0x40] sm:$0xff] %v785
        %855 = vst [vmem:[#allocation2 + $0x48] sm:$0xff] %v787
        %856 = vst [vmem:[#allocation2 + $0x50] sm:$0xff] %v838
        %857 = vst [vmem:[#allocation2 + $0x58] sm:$0xff] %v840
        %858 = vst [vmem:[#allocation2 + $0x60] sm:$0xff] %v789
        %859 = vst [vmem:[#allocation2 + $0x68] sm:$0xff] %v791
        %860 = vst [vmem:[#allocation2 + $0x70] sm:$0xff] %v842
        %861 = vst [vmem:[#allocation2 + $0x78] sm:$0xff] %v844
        %v862 = vld [vmem:[#allocation4] sm:$0xff]
        %s863 = smul.u32 0, 4
        %s864 = smul.addr %s863, 8
        %s865 = scalar_lea.vmem [#allocation2], %s864
        %v866 = vld [vmem:[%s865] sm:$0xff]
        %v867 = vld [vmem:[%s865 + $0x8] sm:$0xff]
        %v868 = vld [vmem:[%s865 + $0x10] sm:$0xff]
        %v869 = vld [vmem:[%s865 + $0x18] sm:$0xff]
        %v870 = vpack.c.bf16 %v862, %v862
        %v871 = vld [vmem:[#allocation13] sm:$0xff]
        %v872 = vld [vmem:[#allocation13 + $0x8] sm:$0xff]
        %v873 = vld [vmem:[#allocation13 + $0x10] sm:$0xff]
        %v874 = vld [vmem:[#allocation13 + $0x18] sm:$0xff]
        %v875 = vld [vmem:[#allocation13 + $0x20] sm:$0xff]
        %v876 = vld [vmem:[#allocation13 + $0x28] sm:$0xff]
        %v877 = vld [vmem:[#allocation13 + $0x30] sm:$0xff]
        %v878 = vld [vmem:[#allocation13 + $0x38] sm:$0xff]
        %v879 = vld [vmem:[#allocation13 + $0x40] sm:$0xff]
        %v880 = vld [vmem:[#allocation13 + $0x48] sm:$0xff]
        %v881 = vld [vmem:[#allocation13 + $0x50] sm:$0xff]
        %v882 = vld [vmem:[#allocation13 + $0x58] sm:$0xff]
        %v883 = vld [vmem:[#allocation13 + $0x60] sm:$0xff]
        %v884 = vld [vmem:[#allocation13 + $0x68] sm:$0xff]
        %v885 = vld [vmem:[#allocation13 + $0x70] sm:$0xff]
        %v886 = vld [vmem:[#allocation13 + $0x78] sm:$0xff]
        %v887 = vld [vmem:[#allocation13 + $0x80] sm:$0xff]
        %v888 = vld [vmem:[#allocation13 + $0x88] sm:$0xff]
        %v889 = vld [vmem:[#allocation13 + $0x90] sm:$0xff]
        %v890 = vld [vmem:[#allocation13 + $0x98] sm:$0xff]
        %v891 = vld [vmem:[#allocation13 + $0xa0] sm:$0xff]
        %v892 = vld [vmem:[#allocation13 + $0xa8] sm:$0xff]
        %v893 = vld [vmem:[#allocation13 + $0xb0] sm:$0xff]
        %v894 = vld [vmem:[#allocation13 + $0xb8] sm:$0xff]
        %v895 = vld [vmem:[#allocation13 + $0xc0] sm:$0xff]
        %v896 = vld [vmem:[#allocation13 + $0xc8] sm:$0xff]
        %v897 = vld [vmem:[#allocation13 + $0xd0] sm:$0xff]
        %v898 = vld [vmem:[#allocation13 + $0xd8] sm:$0xff]
        %v899 = vld [vmem:[#allocation13 + $0xe0] sm:$0xff]
        %v900 = vld [vmem:[#allocation13 + $0xe8] sm:$0xff]
        %v901 = vld [vmem:[#allocation13 + $0xf0] sm:$0xff]
        %v902 = vld [vmem:[#allocation13 + $0xf8] sm:$0xff]
        %v935 = vunpack.c.l.b16 %v871
        %v936 = vunpack.c.h.b16 %v871
        %v937 = vunpack.c.l.b16 %v872
        %v938 = vunpack.c.h.b16 %v872
        %v939 = vunpack.c.l.b16 %v873
        %v940 = vunpack.c.h.b16 %v873
        %v941 = vunpack.c.l.b16 %v874
        %v942 = vunpack.c.h.b16 %v874
        %v943 = vunpack.c.l.b16 %v875
        %v944 = vunpack.c.h.b16 %v875
        %v945 = vunpack.c.l.b16 %v876
        %v946 = vunpack.c.h.b16 %v876
        %v947 = vunpack.c.l.b16 %v877
        %v948 = vunpack.c.h.b16 %v877
        %v949 = vunpack.c.l.b16 %v878
        %v950 = vunpack.c.h.b16 %v878
        %v951 = vunpack.c.l.b16 %v879
        %v952 = vunpack.c.h.b16 %v879
        %v953 = vunpack.c.l.b16 %v880
        %v954 = vunpack.c.h.b16 %v880
        %v955 = vunpack.c.l.b16 %v881
        %v956 = vunpack.c.h.b16 %v881
        %v957 = vunpack.c.l.b16 %v882
        %v958 = vunpack.c.h.b16 %v882
        %v959 = vunpack.c.l.b16 %v883
        %v960 = vunpack.c.h.b16 %v883
        %v961 = vunpack.c.l.b16 %v884
        %v962 = vunpack.c.h.b16 %v884
        %v963 = vunpack.c.l.b16 %v885
        %v964 = vunpack.c.h.b16 %v885
        %v965 = vunpack.c.l.b16 %v886
        %v966 = vunpack.c.h.b16 %v886
        %v967 = vunpack.c.l.b16 %v887
        %v968 = vunpack.c.h.b16 %v887
        %v969 = vunpack.c.l.b16 %v888
        %v970 = vunpack.c.h.b16 %v888
        %v971 = vunpack.c.l.b16 %v889
        %v972 = vunpack.c.h.b16 %v889
        %v973 = vunpack.c.l.b16 %v890
        %v974 = vunpack.c.h.b16 %v890
        %v975 = vunpack.c.l.b16 %v891
        %v976 = vunpack.c.h.b16 %v891
        %v977 = vunpack.c.l.b16 %v892
        %v978 = vunpack.c.h.b16 %v892
        %v979 = vunpack.c.l.b16 %v893
        %v980 = vunpack.c.h.b16 %v893
        %v981 = vunpack.c.l.b16 %v894
        %v982 = vunpack.c.h.b16 %v894
        %v983 = vunpack.c.l.b16 %v895
        %v984 = vunpack.c.h.b16 %v895
        %v985 = vunpack.c.l.b16 %v896
        %v986 = vunpack.c.h.b16 %v896
        %v987 = vunpack.c.l.b16 %v897
        %v988 = vunpack.c.h.b16 %v897
        %v989 = vunpack.c.l.b16 %v898
        %v990 = vunpack.c.h.b16 %v898
        %v991 = vunpack.c.l.b16 %v899
        %v992 = vunpack.c.h.b16 %v899
        %v993 = vunpack.c.l.b16 %v900
        %v994 = vunpack.c.h.b16 %v900
        %v995 = vunpack.c.l.b16 %v901
        %v996 = vunpack.c.h.b16 %v901
        %v997 = vunpack.c.l.b16 %v902
        %v998 = vunpack.c.h.b16 %v902
        %v999 = vpack.c.b16 %v939, %v935
        %v1000 = vpack.c.b16 %v940, %v936
        %v1001 = vpack.c.b16 %v941, %v937
        %v1002 = vpack.c.b16 %v942, %v938
        %v1003 = vpack.c.b16 %v947, %v943
        %v1004 = vpack.c.b16 %v948, %v944
        %v1005 = vpack.c.b16 %v949, %v945
        %v1006 = vpack.c.b16 %v950, %v946
        %v1007 = vpack.c.b16 %v955, %v951
        %v1008 = vpack.c.b16 %v956, %v952
        %v1009 = vpack.c.b16 %v957, %v953
        %v1010 = vpack.c.b16 %v958, %v954
        %v1011 = vpack.c.b16 %v963, %v959
        %v1012 = vpack.c.b16 %v964, %v960
        %v1013 = vpack.c.b16 %v965, %v961
        %v1014 = vpack.c.b16 %v966, %v962
        %v1015 = vpack.c.b16 %v971, %v967
        %v1016 = vpack.c.b16 %v972, %v968
        %v1017 = vpack.c.b16 %v973, %v969
        %v1018 = vpack.c.b16 %v974, %v970
        %v1019 = vpack.c.b16 %v979, %v975
        %v1020 = vpack.c.b16 %v980, %v976
        %v1021 = vpack.c.b16 %v981, %v977
        %v1022 = vpack.c.b16 %v982, %v978
        %v1023 = vpack.c.b16 %v987, %v983
        %v1024 = vpack.c.b16 %v988, %v984
        %v1025 = vpack.c.b16 %v989, %v985
        %v1026 = vpack.c.b16 %v990, %v986
        %v1027 = vpack.c.b16 %v995, %v991
        %v1028 = vpack.c.b16 %v996, %v992
        %v1029 = vpack.c.b16 %v997, %v993
        %v1030 = vpack.c.b16 %v998, %v994
        %1063 = vmatprep.subr.bf16.mxu0 %v1028
        %1064 = vmatpush1.bf16.msra.mxu0 %v1027
        %1065 = vmatprep.subr.bf16.mxu0 %v1024
        %1066 = vmatpush1.bf16.msra.mxu0 %v1023
        %1067 = vmatprep.subr.bf16.mxu0 %v1020
        %1068 = vmatpush1.bf16.msra.mxu0 %v1019
        %1069 = vmatprep.subr.bf16.mxu0 %v1016
        %1070 = vmatpush1.bf16.msra.mxu0 %v1015
        %1071 = vmatprep.subr.bf16.mxu0 %v1012
        %1072 = vmatpush1.bf16.msra.mxu0 %v1011
        %1073 = vmatprep.subr.bf16.mxu0 %v1008
        %1074 = vmatpush1.bf16.msra.mxu0 %v1007
        %1075 = vmatprep.subr.bf16.mxu0 %v1004
        %1076 = vmatpush1.bf16.msra.mxu0 %v1003
        %1077 = vmatprep.subr.bf16.mxu0 %v1000
        %1078 = vmatpush1.bf16.msra.mxu0 %v999
        %1079 = vmatprep.subr.bf16.mxu0 0
        %1080 = vmatpush2.bf16.msra.mxu0 0
        %1081 = vmatprep.subr.bf16.mxu0 0
        %1082 = vmatpush2.bf16.msra.mxu0 0
        %1083 = vmatprep.subr.bf16.mxu0 0
        %1084 = vmatpush2.bf16.msra.mxu0 0
        %1085 = vmatprep.subr.bf16.mxu0 0
        %1086 = vmatpush2.bf16.msra.mxu0 0
        %1087 = vmatprep.subr.bf16.mxu0 0
        %1088 = vmatpush2.bf16.msra.mxu0 0
        %1089 = vmatprep.subr.bf16.mxu0 0
        %1090 = vmatpush2.bf16.msra.mxu0 0
        %1091 = vmatprep.subr.bf16.mxu0 0
        %1092 = vmatpush2.bf16.msra.mxu0 0
        %1093 = vmatprep.subr.bf16.mxu0 0
        %1094 = vmatpush2.bf16.msra.mxu0 0
        %1095 = vmatprep.mubr.bf16.mxu0 0
        %1096 = vmatmul.mubr.bf16.gmra.mxu0 %v870
        %v1097 = vpop.f32.mrf.mxu0
        %v1098 = vadd.f32 0.0, %v1097
        %v1099 = vpop.f32.mrf.mxu0
        %v1100 = vadd.f32 0.0, %v1099
        %v1101 = vpop.f32.mrf.mxu0
        %v1102 = vpop.f32.mrf.mxu0
        %1103 = vdwg.mxu0
        %1104 = vmatprep.subr.bf16.mxu0 %v1030
        %1105 = vmatpush1.bf16.msra.mxu0 %v1029
        %1106 = vmatprep.subr.bf16.mxu0 %v1026
        %1107 = vmatpush1.bf16.msra.mxu0 %v1025
        %1108 = vmatprep.subr.bf16.mxu0 %v1022
        %1109 = vmatpush1.bf16.msra.mxu0 %v1021
        %1110 = vmatprep.subr.bf16.mxu0 %v1018
        %1111 = vmatpush1.bf16.msra.mxu0 %v1017
        %1112 = vmatprep.subr.bf16.mxu0 %v1014
        %1113 = vmatpush1.bf16.msra.mxu0 %v1013
        %1114 = vmatprep.subr.bf16.mxu0 %v1010
        %1115 = vmatpush1.bf16.msra.mxu0 %v1009
        %1116 = vmatprep.subr.bf16.mxu0 %v1006
        %1117 = vmatpush1.bf16.msra.mxu0 %v1005
        %1118 = vmatprep.subr.bf16.mxu0 %v1002
        %1119 = vmatpush1.bf16.msra.mxu0 %v1001
        %1120 = vmatprep.subr.bf16.mxu0 0
        %1121 = vmatpush2.bf16.msra.mxu0 0
        %1122 = vmatprep.subr.bf16.mxu0 0
        %1123 = vmatpush2.bf16.msra.mxu0 0
        %1124 = vmatprep.subr.bf16.mxu0 0
        %1125 = vmatpush2.bf16.msra.mxu0 0
        %1126 = vmatprep.subr.bf16.mxu0 0
        %1127 = vmatpush2.bf16.msra.mxu0 0
        %1128 = vmatprep.subr.bf16.mxu0 0
        %1129 = vmatpush2.bf16.msra.mxu0 0
        %1130 = vmatprep.subr.bf16.mxu0 0
        %1131 = vmatpush2.bf16.msra.mxu0 0
        %1132 = vmatprep.subr.bf16.mxu0 0
        %1133 = vmatpush2.bf16.msra.mxu0 0
        %1134 = vmatprep.subr.bf16.mxu0 0
        %1135 = vmatpush2.bf16.msra.mxu0 0
        %1136 = vmatprep.mubr.bf16.mxu0 0
        %1137 = vmatmul.mubr.bf16.gmra.mxu0 %v870
        %v1138 = vpop.f32.mrf.mxu0
        %v1139 = vadd.f32 0.0, %v1138
        %v1140 = vpop.f32.mrf.mxu0
        %v1141 = vadd.f32 0.0, %v1140
        %v1142 = vpop.f32.mrf.mxu0
        %v1143 = vpop.f32.mrf.mxu0
        %1144 = vdwg.mxu0
        %v1145 = vadd.f32 %v866, %v1098
        %v1146 = vadd.f32 %v867, %v1100
        %v1147 = vadd.f32 %v868, %v1139
        %v1148 = vadd.f32 %v869, %v1141
        %v1149 = vld [vmem:[#allocation15] sm:$0xf]
        %v1151 = vlaneseq
        %v1152 = vshrl.u32 %v1151, 7
        %v1153 = vsub.s32 0, %v1152
        %v1154 = vrot.slane %v1149, %v1153
        %v1155 = vlaneseq
        %v1156 = vshrl.u32 %v1155, 7
        %v1157 = vsub.s32 1, %v1156
        %v1158 = vrot.slane %v1149, %v1157
        %v1159 = vlaneseq
        %v1160 = vshrl.u32 %v1159, 7
        %v1161 = vsub.s32 2, %v1160
        %v1162 = vrot.slane %v1149, %v1161
        %v1163 = vlaneseq
        %v1164 = vshrl.u32 %v1163, 7
        %v1165 = vsub.s32 3, %v1164
        %v1166 = vrot.slane %v1149, %v1165
        %v1171 = vadd.f32 %v1145, %v1154
        %v1172 = vadd.f32 %v1146, %v1158
        %v1173 = vadd.f32 %v1147, %v1162
        %v1174 = vadd.f32 %v1148, %v1166
        %v1175 = vxor.u32 %v1171, 2147483648
        %v1176 = vmul.f32 %v1175, 1.442695
        %v1177 = vpow.pop %v1176
        %v1178 = vadd.f32 %v1177, 1.0
        %v1179 = vrcp.pop %v1178
        %v1180 = vmul.f32 1.0, %v1179
        %v1181 = vxor.u32 %v1172, 2147483648
        %v1182 = vmul.f32 %v1181, 1.442695
        %v1183 = vpow.pop %v1182
        %v1184 = vadd.f32 %v1183, 1.0
        %v1185 = vrcp.pop %v1184
        %v1186 = vmul.f32 1.0, %v1185
        %v1187 = vtanh.pop %v1173
        %v1188 = vxor.u32 %v1174, 2147483648
        %v1189 = vmul.f32 %v1188, 1.442695
        %v1190 = vpow.pop %v1189
        %v1191 = vadd.f32 %v1190, 1.0
        %v1192 = vrcp.pop %v1191
        %v1193 = vmul.f32 1.0, %v1192
        %v1194 = vld [vmem:[#allocation5] sm:$0xff]
        %v1195 = vmul.f32 %v1186, %v1194
        %v1196 = vmul.f32 %v1180, %v1187
        %v1197 = vadd.f32 %v1195, %v1196
        %v1198 = vtanh.pop %v1197
        %v1199 = vmul.f32 %v1193, %v1198
        %1200 = vst [vmem:[#allocation5] sm:$0xff] %v1197
        %1201 = vst [vmem:[#allocation4] sm:$0xff] %v1199
        %1202 = vst [vmem:[#allocation3] sm:$0xff] %v1199
        %v1203 = vld [vmem:[#allocation4] sm:$0xff]
        %s1204 = smul.u32 1, 4
        %s1205 = smul.addr %s1204, 8
        %s1206 = scalar_lea.vmem [#allocation2], %s1205
        %v1207 = vld [vmem:[%s1206] sm:$0xff]
        %v1208 = vld [vmem:[%s1206 + $0x8] sm:$0xff]
        %v1209 = vld [vmem:[%s1206 + $0x10] sm:$0xff]
        %v1210 = vld [vmem:[%s1206 + $0x18] sm:$0xff]
        %v1211 = vpack.c.bf16 %v1203, %v1203
        %v1212 = vld [vmem:[#allocation13] sm:$0xff]
        %v1213 = vld [vmem:[#allocation13 + $0x8] sm:$0xff]
        %v1214 = vld [vmem:[#allocation13 + $0x10] sm:$0xff]
        %v1215 = vld [vmem:[#allocation13 + $0x18] sm:$0xff]
        %v1216 = vld [vmem:[#allocation13 + $0x20] sm:$0xff]
        %v1217 = vld [vmem:[#allocation13 + $0x28] sm:$0xff]
        %v1218 = vld [vmem:[#allocation13 + $0x30] sm:$0xff]
        %v1219 = vld [vmem:[#allocation13 + $0x38] sm:$0xff]
        %v1220 = vld [vmem:[#allocation13 + $0x40] sm:$0xff]
        %v1221 = vld [vmem:[#allocation13 + $0x48] sm:$0xff]
        %v1222 = vld [vmem:[#allocation13 + $0x50] sm:$0xff]
        %v1223 = vld [vmem:[#allocation13 + $0x58] sm:$0xff]
        %v1224 = vld [vmem:[#allocation13 + $0x60] sm:$0xff]
        %v1225 = vld [vmem:[#allocation13 + $0x68] sm:$0xff]
        %v1226 = vld [vmem:[#allocation13 + $0x70] sm:$0xff]
        %v1227 = vld [vmem:[#allocation13 + $0x78] sm:$0xff]
        %v1228 = vld [vmem:[#allocation13 + $0x80] sm:$0xff]
        %v1229 = vld [vmem:[#allocation13 + $0x88] sm:$0xff]
        %v1230 = vld [vmem:[#allocation13 + $0x90] sm:$0xff]
        %v1231 = vld [vmem:[#allocation13 + $0x98] sm:$0xff]
        %v1232 = vld [vmem:[#allocation13 + $0xa0] sm:$0xff]
        %v1233 = vld [vmem:[#allocation13 + $0xa8] sm:$0xff]
        %v1234 = vld [vmem:[#allocation13 + $0xb0] sm:$0xff]
        %v1235 = vld [vmem:[#allocation13 + $0xb8] sm:$0xff]
        %v1236 = vld [vmem:[#allocation13 + $0xc0] sm:$0xff]
        %v1237 = vld [vmem:[#allocation13 + $0xc8] sm:$0xff]
        %v1238 = vld [vmem:[#allocation13 + $0xd0] sm:$0xff]
        %v1239 = vld [vmem:[#allocation13 + $0xd8] sm:$0xff]
        %v1240 = vld [vmem:[#allocation13 + $0xe0] sm:$0xff]
        %v1241 = vld [vmem:[#allocation13 + $0xe8] sm:$0xff]
        %v1242 = vld [vmem:[#allocation13 + $0xf0] sm:$0xff]
        %v1243 = vld [vmem:[#allocation13 + $0xf8] sm:$0xff]
        %v1276 = vunpack.c.l.b16 %v1212
        %v1277 = vunpack.c.h.b16 %v1212
        %v1278 = vunpack.c.l.b16 %v1213
        %v1279 = vunpack.c.h.b16 %v1213
        %v1280 = vunpack.c.l.b16 %v1214
        %v1281 = vunpack.c.h.b16 %v1214
        %v1282 = vunpack.c.l.b16 %v1215
        %v1283 = vunpack.c.h.b16 %v1215
        %v1284 = vunpack.c.l.b16 %v1216
        %v1285 = vunpack.c.h.b16 %v1216
        %v1286 = vunpack.c.l.b16 %v1217
        %v1287 = vunpack.c.h.b16 %v1217
        %v1288 = vunpack.c.l.b16 %v1218
        %v1289 = vunpack.c.h.b16 %v1218
        %v1290 = vunpack.c.l.b16 %v1219
        %v1291 = vunpack.c.h.b16 %v1219
        %v1292 = vunpack.c.l.b16 %v1220
        %v1293 = vunpack.c.h.b16 %v1220
        %v1294 = vunpack.c.l.b16 %v1221
        %v1295 = vunpack.c.h.b16 %v1221
        %v1296 = vunpack.c.l.b16 %v1222
        %v1297 = vunpack.c.h.b16 %v1222
        %v1298 = vunpack.c.l.b16 %v1223
        %v1299 = vunpack.c.h.b16 %v1223
        %v1300 = vunpack.c.l.b16 %v1224
        %v1301 = vunpack.c.h.b16 %v1224
        %v1302 = vunpack.c.l.b16 %v1225
        %v1303 = vunpack.c.h.b16 %v1225
        %v1304 = vunpack.c.l.b16 %v1226
        %v1305 = vunpack.c.h.b16 %v1226
        %v1306 = vunpack.c.l.b16 %v1227
        %v1307 = vunpack.c.h.b16 %v1227
        %v1308 = vunpack.c.l.b16 %v1228
        %v1309 = vunpack.c.h.b16 %v1228
        %v1310 = vunpack.c.l.b16 %v1229
        %v1311 = vunpack.c.h.b16 %v1229
        %v1312 = vunpack.c.l.b16 %v1230
        %v1313 = vunpack.c.h.b16 %v1230
        %v1314 = vunpack.c.l.b16 %v1231
        %v1315 = vunpack.c.h.b16 %v1231
        %v1316 = vunpack.c.l.b16 %v1232
        %v1317 = vunpack.c.h.b16 %v1232
        %v1318 = vunpack.c.l.b16 %v1233
        %v1319 = vunpack.c.h.b16 %v1233
        %v1320 = vunpack.c.l.b16 %v1234
        %v1321 = vunpack.c.h.b16 %v1234
        %v1322 = vunpack.c.l.b16 %v1235
        %v1323 = vunpack.c.h.b16 %v1235
        %v1324 = vunpack.c.l.b16 %v1236
        %v1325 = vunpack.c.h.b16 %v1236
        %v1326 = vunpack.c.l.b16 %v1237
        %v1327 = vunpack.c.h.b16 %v1237
        %v1328 = vunpack.c.l.b16 %v1238
        %v1329 = vunpack.c.h.b16 %v1238
        %v1330 = vunpack.c.l.b16 %v1239
        %v1331 = vunpack.c.h.b16 %v1239
        %v1332 = vunpack.c.l.b16 %v1240
        %v1333 = vunpack.c.h.b16 %v1240
        %v1334 = vunpack.c.l.b16 %v1241
        %v1335 = vunpack.c.h.b16 %v1241
        %v1336 = vunpack.c.l.b16 %v1242
        %v1337 = vunpack.c.h.b16 %v1242
        %v1338 = vunpack.c.l.b16 %v1243
        %v1339 = vunpack.c.h.b16 %v1243
        %v1340 = vpack.c.b16 %v1280, %v1276
        %v1341 = vpack.c.b16 %v1281, %v1277
        %v1342 = vpack.c.b16 %v1282, %v1278
        %v1343 = vpack.c.b16 %v1283, %v1279
        %v1344 = vpack.c.b16 %v1288, %v1284
        %v1345 = vpack.c.b16 %v1289, %v1285
        %v1346 = vpack.c.b16 %v1290, %v1286
        %v1347 = vpack.c.b16 %v1291, %v1287
        %v1348 = vpack.c.b16 %v1296, %v1292
        %v1349 = vpack.c.b16 %v1297, %v1293
        %v1350 = vpack.c.b16 %v1298, %v1294
        %v1351 = vpack.c.b16 %v1299, %v1295
        %v1352 = vpack.c.b16 %v1304, %v1300
        %v1353 = vpack.c.b16 %v1305, %v1301
        %v1354 = vpack.c.b16 %v1306, %v1302
        %v1355 = vpack.c.b16 %v1307, %v1303
        %v1356 = vpack.c.b16 %v1312, %v1308
        %v1357 = vpack.c.b16 %v1313, %v1309
        %v1358 = vpack.c.b16 %v1314, %v1310
        %v1359 = vpack.c.b16 %v1315, %v1311
        %v1360 = vpack.c.b16 %v1320, %v1316
        %v1361 = vpack.c.b16 %v1321, %v1317
        %v1362 = vpack.c.b16 %v1322, %v1318
        %v1363 = vpack.c.b16 %v1323, %v1319
        %v1364 = vpack.c.b16 %v1328, %v1324
        %v1365 = vpack.c.b16 %v1329, %v1325
        %v1366 = vpack.c.b16 %v1330, %v1326
        %v1367 = vpack.c.b16 %v1331, %v1327
        %v1368 = vpack.c.b16 %v1336, %v1332
        %v1369 = vpack.c.b16 %v1337, %v1333
        %v1370 = vpack.c.b16 %v1338, %v1334
        %v1371 = vpack.c.b16 %v1339, %v1335
        %1404 = vmatprep.subr.bf16.mxu0 %v1369
        %1405 = vmatpush1.bf16.msra.mxu0 %v1368
        %1406 = vmatprep.subr.bf16.mxu0 %v1365
        %1407 = vmatpush1.bf16.msra.mxu0 %v1364
        %1408 = vmatprep.subr.bf16.mxu0 %v1361
        %1409 = vmatpush1.bf16.msra.mxu0 %v1360
        %1410 = vmatprep.subr.bf16.mxu0 %v1357
        %1411 = vmatpush1.bf16.msra.mxu0 %v1356
        %1412 = vmatprep.subr.bf16.mxu0 %v1353
        %1413 = vmatpush1.bf16.msra.mxu0 %v1352
        %1414 = vmatprep.subr.bf16.mxu0 %v1349
        %1415 = vmatpush1.bf16.msra.mxu0 %v1348
        %1416 = vmatprep.subr.bf16.mxu0 %v1345
        %1417 = vmatpush1.bf16.msra.mxu0 %v1344
        %1418 = vmatprep.subr.bf16.mxu0 %v1341
        %1419 = vmatpush1.bf16.msra.mxu0 %v1340
        %1420 = vmatprep.subr.bf16.mxu0 0
        %1421 = vmatpush2.bf16.msra.mxu0 0
        %1422 = vmatprep.subr.bf16.mxu0 0
        %1423 = vmatpush2.bf16.msra.mxu0 0
        %1424 = vmatprep.subr.bf16.mxu0 0
        %1425 = vmatpush2.bf16.msra.mxu0 0
        %1426 = vmatprep.subr.bf16.mxu0 0
        %1427 = vmatpush2.bf16.msra.mxu0 0
        %1428 = vmatprep.subr.bf16.mxu0 0
        %1429 = vmatpush2.bf16.msra.mxu0 0
        %1430 = vmatprep.subr.bf16.mxu0 0
        %1431 = vmatpush2.bf16.msra.mxu0 0
        %1432 = vmatprep.subr.bf16.mxu0 0
        %1433 = vmatpush2.bf16.msra.mxu0 0
        %1434 = vmatprep.subr.bf16.mxu0 0
        %1435 = vmatpush2.bf16.msra.mxu0 0
        %1436 = vmatprep.mubr.bf16.mxu0 0
        %1437 = vmatmul.mubr.bf16.gmra.mxu0 %v1211
        %v1438 = vpop.f32.mrf.mxu0
        %v1439 = vadd.f32 0.0, %v1438
        %v1440 = vpop.f32.mrf.mxu0
        %v1441 = vadd.f32 0.0, %v1440
        %v1442 = vpop.f32.mrf.mxu0
        %v1443 = vpop.f32.mrf.mxu0
        %1444 = vdwg.mxu0
        %1445 = vmatprep.subr.bf16.mxu0 %v1371
        %1446 = vmatpush1.bf16.msra.mxu0 %v1370
        %1447 = vmatprep.subr.bf16.mxu0 %v1367
        %1448 = vmatpush1.bf16.msra.mxu0 %v1366
        %1449 = vmatprep.subr.bf16.mxu0 %v1363
        %1450 = vmatpush1.bf16.msra.mxu0 %v1362
        %1451 = vmatprep.subr.bf16.mxu0 %v1359
        %1452 = vmatpush1.bf16.msra.mxu0 %v1358
        %1453 = vmatprep.subr.bf16.mxu0 %v1355
        %1454 = vmatpush1.bf16.msra.mxu0 %v1354
        %1455 = vmatprep.subr.bf16.mxu0 %v1351
        %1456 = vmatpush1.bf16.msra.mxu0 %v1350
        %1457 = vmatprep.subr.bf16.mxu0 %v1347
        %1458 = vmatpush1.bf16.msra.mxu0 %v1346
        %1459 = vmatprep.subr.bf16.mxu0 %v1343
        %1460 = vmatpush1.bf16.msra.mxu0 %v1342
        %1461 = vmatprep.subr.bf16.mxu0 0
        %1462 = vmatpush2.bf16.msra.mxu0 0
        %1463 = vmatprep.subr.bf16.mxu0 0
        %1464 = vmatpush2.bf16.msra.mxu0 0
        %1465 = vmatprep.subr.bf16.mxu0 0
        %1466 = vmatpush2.bf16.msra.mxu0 0
        %1467 = vmatprep.subr.bf16.mxu0 0
        %1468 = vmatpush2.bf16.msra.mxu0 0
        %1469 = vmatprep.subr.bf16.mxu0 0
        %1470 = vmatpush2.bf16.msra.mxu0 0
        %1471 = vmatprep.subr.bf16.mxu0 0
        %1472 = vmatpush2.bf16.msra.mxu0 0
        %1473 = vmatprep.subr.bf16.mxu0 0
        %1474 = vmatpush2.bf16.msra.mxu0 0
        %1475 = vmatprep.subr.bf16.mxu0 0
        %1476 = vmatpush2.bf16.msra.mxu0 0
        %1477 = vmatprep.mubr.bf16.mxu0 0
        %1478 = vmatmul.mubr.bf16.gmra.mxu0 %v1211
        %v1479 = vpop.f32.mrf.mxu0
        %v1480 = vadd.f32 0.0, %v1479
        %v1481 = vpop.f32.mrf.mxu0
        %v1482 = vadd.f32 0.0, %v1481
        %v1483 = vpop.f32.mrf.mxu0
        %v1484 = vpop.f32.mrf.mxu0
        %1485 = vdwg.mxu0
        %v1486 = vadd.f32 %v1207, %v1439
        %v1487 = vadd.f32 %v1208, %v1441
        %v1488 = vadd.f32 %v1209, %v1480
        %v1489 = vadd.f32 %v1210, %v1482
        %v1490 = vld [vmem:[#allocation15] sm:$0xf]
        %v1492 = vlaneseq
        %v1493 = vshrl.u32 %v1492, 7
        %v1494 = vsub.s32 0, %v1493
        %v1495 = vrot.slane %v1490, %v1494
        %v1496 = vlaneseq
        %v1497 = vshrl.u32 %v1496, 7
        %v1498 = vsub.s32 1, %v1497
        %v1499 = vrot.slane %v1490, %v1498
        %v1500 = vlaneseq
        %v1501 = vshrl.u32 %v1500, 7
        %v1502 = vsub.s32 2, %v1501
        %v1503 = vrot.slane %v1490, %v1502
        %v1504 = vlaneseq
        %v1505 = vshrl.u32 %v1504, 7
        %v1506 = vsub.s32 3, %v1505
        %v1507 = vrot.slane %v1490, %v1506
        %v1512 = vadd.f32 %v1486, %v1495
        %v1513 = vadd.f32 %v1487, %v1499
        %v1514 = vadd.f32 %v1488, %v1503
        %v1515 = vadd.f32 %v1489, %v1507
        %v1516 = vxor.u32 %v1512, 2147483648
        %v1517 = vmul.f32 %v1516, 1.442695
        %v1518 = vpow.pop %v1517
        %v1519 = vadd.f32 %v1518, 1.0
        %v1520 = vrcp.pop %v1519
        %v1521 = vmul.f32 1.0, %v1520
        %v1522 = vxor.u32 %v1513, 2147483648
        %v1523 = vmul.f32 %v1522, 1.442695
        %v1524 = vpow.pop %v1523
        %v1525 = vadd.f32 %v1524, 1.0
        %v1526 = vrcp.pop %v1525
        %v1527 = vmul.f32 1.0, %v1526
        %v1528 = vtanh.pop %v1514
        %v1529 = vxor.u32 %v1515, 2147483648
        %v1530 = vmul.f32 %v1529, 1.442695
        %v1531 = vpow.pop %v1530
        %v1532 = vadd.f32 %v1531, 1.0
        %v1533 = vrcp.pop %v1532
        %v1534 = vmul.f32 1.0, %v1533
        %v1535 = vld [vmem:[#allocation5] sm:$0xff]
        %v1536 = vmul.f32 %v1527, %v1535
        %v1537 = vmul.f32 %v1521, %v1528
        %v1538 = vadd.f32 %v1536, %v1537
        %v1539 = vtanh.pop %v1538
        %v1540 = vmul.f32 %v1534, %v1539
        %1541 = vst [vmem:[#allocation5] sm:$0xff] %v1538
        %1542 = vst [vmem:[#allocation4] sm:$0xff] %v1540
        %s1543 = scalar_lea.vmem [#allocation3], 8
        %1544 = vst [vmem:[%s1543] sm:$0xff] %v1540
        %v1545 = vld [vmem:[#allocation4] sm:$0xff]
        %s1546 = smul.u32 2, 4
        %s1547 = smul.addr %s1546, 8
        %s1548 = scalar_lea.vmem [#allocation2], %s1547
        %v1549 = vld [vmem:[%s1548] sm:$0xff]
        %v1550 = vld [vmem:[%s1548 + $0x8] sm:$0xff]
        %v1551 = vld [vmem:[%s1548 + $0x10] sm:$0xff]
        %v1552 = vld [vmem:[%s1548 + $0x18] sm:$0xff]
        %v1553 = vpack.c.bf16 %v1545, %v1545
        %v1554 = vld [vmem:[#allocation13] sm:$0xff]
        %v1555 = vld [vmem:[#allocation13 + $0x8] sm:$0xff]
        %v1556 = vld [vmem:[#allocation13 + $0x10] sm:$0xff]
        %v1557 = vld [vmem:[#allocation13 + $0x18] sm:$0xff]
        %v1558 = vld [vmem:[#allocation13 + $0x20] sm:$0xff]
        %v1559 = vld [vmem:[#allocation13 + $0x28] sm:$0xff]
        %v1560 = vld [vmem:[#allocation13 + $0x30] sm:$0xff]
        %v1561 = vld [vmem:[#allocation13 + $0x38] sm:$0xff]
        %v1562 = vld [vmem:[#allocation13 + $0x40] sm:$0xff]
        %v1563 = vld [vmem:[#allocation13 + $0x48] sm:$0xff]
        %v1564 = vld [vmem:[#allocation13 + $0x50] sm:$0xff]
        %v1565 = vld [vmem:[#allocation13 + $0x58] sm:$0xff]
        %v1566 = vld [vmem:[#allocation13 + $0x60] sm:$0xff]
        %v1567 = vld [vmem:[#allocation13 + $0x68] sm:$0xff]
        %v1568 = vld [vmem:[#allocation13 + $0x70] sm:$0xff]
        %v1569 = vld [vmem:[#allocation13 + $0x78] sm:$0xff]
        %v1570 = vld [vmem:[#allocation13 + $0x80] sm:$0xff]
        %v1571 = vld [vmem:[#allocation13 + $0x88] sm:$0xff]
        %v1572 = vld [vmem:[#allocation13 + $0x90] sm:$0xff]
        %v1573 = vld [vmem:[#allocation13 + $0x98] sm:$0xff]
        %v1574 = vld [vmem:[#allocation13 + $0xa0] sm:$0xff]
        %v1575 = vld [vmem:[#allocation13 + $0xa8] sm:$0xff]
        %v1576 = vld [vmem:[#allocation13 + $0xb0] sm:$0xff]
        %v1577 = vld [vmem:[#allocation13 + $0xb8] sm:$0xff]
        %v1578 = vld [vmem:[#allocation13 + $0xc0] sm:$0xff]
        %v1579 = vld [vmem:[#allocation13 + $0xc8] sm:$0xff]
        %v1580 = vld [vmem:[#allocation13 + $0xd0] sm:$0xff]
        %v1581 = vld [vmem:[#allocation13 + $0xd8] sm:$0xff]
        %v1582 = vld [vmem:[#allocation13 + $0xe0] sm:$0xff]
        %v1583 = vld [vmem:[#allocation13 + $0xe8] sm:$0xff]
        %v1584 = vld [vmem:[#allocation13 + $0xf0] sm:$0xff]
        %v1585 = vld [vmem:[#allocation13 + $0xf8] sm:$0xff]
        %v1618 = vunpack.c.l.b16 %v1554
        %v1619 = vunpack.c.h.b16 %v1554
        %v1620 = vunpack.c.l.b16 %v1555
        %v1621 = vunpack.c.h.b16 %v1555
        %v1622 = vunpack.c.l.b16 %v1556
        %v1623 = vunpack.c.h.b16 %v1556
        %v1624 = vunpack.c.l.b16 %v1557
        %v1625 = vunpack.c.h.b16 %v1557
        %v1626 = vunpack.c.l.b16 %v1558
        %v1627 = vunpack.c.h.b16 %v1558
        %v1628 = vunpack.c.l.b16 %v1559
        %v1629 = vunpack.c.h.b16 %v1559
        %v1630 = vunpack.c.l.b16 %v1560
        %v1631 = vunpack.c.h.b16 %v1560
        %v1632 = vunpack.c.l.b16 %v1561
        %v1633 = vunpack.c.h.b16 %v1561
        %v1634 = vunpack.c.l.b16 %v1562
        %v1635 = vunpack.c.h.b16 %v1562
        %v1636 = vunpack.c.l.b16 %v1563
        %v1637 = vunpack.c.h.b16 %v1563
        %v1638 = vunpack.c.l.b16 %v1564
        %v1639 = vunpack.c.h.b16 %v1564
        %v1640 = vunpack.c.l.b16 %v1565
        %v1641 = vunpack.c.h.b16 %v1565
        %v1642 = vunpack.c.l.b16 %v1566
        %v1643 = vunpack.c.h.b16 %v1566
        %v1644 = vunpack.c.l.b16 %v1567
        %v1645 = vunpack.c.h.b16 %v1567
        %v1646 = vunpack.c.l.b16 %v1568
        %v1647 = vunpack.c.h.b16 %v1568
        %v1648 = vunpack.c.l.b16 %v1569
        %v1649 = vunpack.c.h.b16 %v1569
        %v1650 = vunpack.c.l.b16 %v1570
        %v1651 = vunpack.c.h.b16 %v1570
        %v1652 = vunpack.c.l.b16 %v1571
        %v1653 = vunpack.c.h.b16 %v1571
        %v1654 = vunpack.c.l.b16 %v1572
        %v1655 = vunpack.c.h.b16 %v1572
        %v1656 = vunpack.c.l.b16 %v1573
        %v1657 = vunpack.c.h.b16 %v1573
        %v1658 = vunpack.c.l.b16 %v1574
        %v1659 = vunpack.c.h.b16 %v1574
        %v1660 = vunpack.c.l.b16 %v1575
        %v1661 = vunpack.c.h.b16 %v1575
        %v1662 = vunpack.c.l.b16 %v1576
        %v1663 = vunpack.c.h.b16 %v1576
        %v1664 = vunpack.c.l.b16 %v1577
        %v1665 = vunpack.c.h.b16 %v1577
        %v1666 = vunpack.c.l.b16 %v1578
        %v1667 = vunpack.c.h.b16 %v1578
        %v1668 = vunpack.c.l.b16 %v1579
        %v1669 = vunpack.c.h.b16 %v1579
        %v1670 = vunpack.c.l.b16 %v1580
        %v1671 = vunpack.c.h.b16 %v1580
        %v1672 = vunpack.c.l.b16 %v1581
        %v1673 = vunpack.c.h.b16 %v1581
        %v1674 = vunpack.c.l.b16 %v1582
        %v1675 = vunpack.c.h.b16 %v1582
        %v1676 = vunpack.c.l.b16 %v1583
        %v1677 = vunpack.c.h.b16 %v1583
        %v1678 = vunpack.c.l.b16 %v1584
        %v1679 = vunpack.c.h.b16 %v1584
        %v1680 = vunpack.c.l.b16 %v1585
        %v1681 = vunpack.c.h.b16 %v1585
        %v1682 = vpack.c.b16 %v1622, %v1618
        %v1683 = vpack.c.b16 %v1623, %v1619
        %v1684 = vpack.c.b16 %v1624, %v1620
        %v1685 = vpack.c.b16 %v1625, %v1621
        %v1686 = vpack.c.b16 %v1630, %v1626
        %v1687 = vpack.c.b16 %v1631, %v1627
        %v1688 = vpack.c.b16 %v1632, %v1628
        %v1689 = vpack.c.b16 %v1633, %v1629
        %v1690 = vpack.c.b16 %v1638, %v1634
        %v1691 = vpack.c.b16 %v1639, %v1635
        %v1692 = vpack.c.b16 %v1640, %v1636
        %v1693 = vpack.c.b16 %v1641, %v1637
        %v1694 = vpack.c.b16 %v1646, %v1642
        %v1695 = vpack.c.b16 %v1647, %v1643
        %v1696 = vpack.c.b16 %v1648, %v1644
        %v1697 = vpack.c.b16 %v1649, %v1645
        %v1698 = vpack.c.b16 %v1654, %v1650
        %v1699 = vpack.c.b16 %v1655, %v1651
        %v1700 = vpack.c.b16 %v1656, %v1652
        %v1701 = vpack.c.b16 %v1657, %v1653
        %v1702 = vpack.c.b16 %v1662, %v1658
        %v1703 = vpack.c.b16 %v1663, %v1659
        %v1704 = vpack.c.b16 %v1664, %v1660
        %v1705 = vpack.c.b16 %v1665, %v1661
        %v1706 = vpack.c.b16 %v1670, %v1666
        %v1707 = vpack.c.b16 %v1671, %v1667
        %v1708 = vpack.c.b16 %v1672, %v1668
        %v1709 = vpack.c.b16 %v1673, %v1669
        %v1710 = vpack.c.b16 %v1678, %v1674
        %v1711 = vpack.c.b16 %v1679, %v1675
        %v1712 = vpack.c.b16 %v1680, %v1676
        %v1713 = vpack.c.b16 %v1681, %v1677
        %1746 = vmatprep.subr.bf16.mxu0 %v1711
        %1747 = vmatpush1.bf16.msra.mxu0 %v1710
        %1748 = vmatprep.subr.bf16.mxu0 %v1707
        %1749 = vmatpush1.bf16.msra.mxu0 %v1706
        %1750 = vmatprep.subr.bf16.mxu0 %v1703
        %1751 = vmatpush1.bf16.msra.mxu0 %v1702
        %1752 = vmatprep.subr.bf16.mxu0 %v1699
        %1753 = vmatpush1.bf16.msra.mxu0 %v1698
        %1754 = vmatprep.subr.bf16.mxu0 %v1695
        %1755 = vmatpush1.bf16.msra.mxu0 %v1694
        %1756 = vmatprep.subr.bf16.mxu0 %v1691
        %1757 = vmatpush1.bf16.msra.mxu0 %v1690
        %1758 = vmatprep.subr.bf16.mxu0 %v1687
        %1759 = vmatpush1.bf16.msra.mxu0 %v1686
        %1760 = vmatprep.subr.bf16.mxu0 %v1683
        %1761 = vmatpush1.bf16.msra.mxu0 %v1682
        %1762 = vmatprep.subr.bf16.mxu0 0
        %1763 = vmatpush2.bf16.msra.mxu0 0
        %1764 = vmatprep.subr.bf16.mxu0 0
        %1765 = vmatpush2.bf16.msra.mxu0 0
        %1766 = vmatprep.subr.bf16.mxu0 0
        %1767 = vmatpush2.bf16.msra.mxu0 0
        %1768 = vmatprep.subr.bf16.mxu0 0
        %1769 = vmatpush2.bf16.msra.mxu0 0
        %1770 = vmatprep.subr.bf16.mxu0 0
        %1771 = vmatpush2.bf16.msra.mxu0 0
        %1772 = vmatprep.subr.bf16.mxu0 0
        %1773 = vmatpush2.bf16.msra.mxu0 0
        %1774 = vmatprep.subr.bf16.mxu0 0
        %1775 = vmatpush2.bf16.msra.mxu0 0
        %1776 = vmatprep.subr.bf16.mxu0 0
        %1777 = vmatpush2.bf16.msra.mxu0 0
        %1778 = vmatprep.mubr.bf16.mxu0 0
        %1779 = vmatmul.mubr.bf16.gmra.mxu0 %v1553
        %v1780 = vpop.f32.mrf.mxu0
        %v1781 = vadd.f32 0.0, %v1780
        %v1782 = vpop.f32.mrf.mxu0
        %v1783 = vadd.f32 0.0, %v1782
        %v1784 = vpop.f32.mrf.mxu0
        %v1785 = vpop.f32.mrf.mxu0
        %1786 = vdwg.mxu0
        %1787 = vmatprep.subr.bf16.mxu0 %v1713
        %1788 = vmatpush1.bf16.msra.mxu0 %v1712
        %1789 = vmatprep.subr.bf16.mxu0 %v1709
        %1790 = vmatpush1.bf16.msra.mxu0 %v1708
        %1791 = vmatprep.subr.bf16.mxu0 %v1705
        %1792 = vmatpush1.bf16.msra.mxu0 %v1704
        %1793 = vmatprep.subr.bf16.mxu0 %v1701
        %1794 = vmatpush1.bf16.msra.mxu0 %v1700
        %1795 = vmatprep.subr.bf16.mxu0 %v1697
        %1796 = vmatpush1.bf16.msra.mxu0 %v1696
        %1797 = vmatprep.subr.bf16.mxu0 %v1693
        %1798 = vmatpush1.bf16.msra.mxu0 %v1692
        %1799 = vmatprep.subr.bf16.mxu0 %v1689
        %1800 = vmatpush1.bf16.msra.mxu0 %v1688
        %1801 = vmatprep.subr.bf16.mxu0 %v1685
        %1802 = vmatpush1.bf16.msra.mxu0 %v1684
        %1803 = vmatprep.subr.bf16.mxu0 0
        %1804 = vmatpush2.bf16.msra.mxu0 0
        %1805 = vmatprep.subr.bf16.mxu0 0
        %1806 = vmatpush2.bf16.msra.mxu0 0
        %1807 = vmatprep.subr.bf16.mxu0 0
        %1808 = vmatpush2.bf16.msra.mxu0 0
        %1809 = vmatprep.subr.bf16.mxu0 0
        %1810 = vmatpush2.bf16.msra.mxu0 0
        %1811 = vmatprep.subr.bf16.mxu0 0
        %1812 = vmatpush2.bf16.msra.mxu0 0
        %1813 = vmatprep.subr.bf16.mxu0 0
        %1814 = vmatpush2.bf16.msra.mxu0 0
        %1815 = vmatprep.subr.bf16.mxu0 0
        %1816 = vmatpush2.bf16.msra.mxu0 0
        %1817 = vmatprep.subr.bf16.mxu0 0
        %1818 = vmatpush2.bf16.msra.mxu0 0
        %1819 = vmatprep.mubr.bf16.mxu0 0
        %1820 = vmatmul.mubr.bf16.gmra.mxu0 %v1553
        %v1821 = vpop.f32.mrf.mxu0
        %v1822 = vadd.f32 0.0, %v1821
        %v1823 = vpop.f32.mrf.mxu0
        %v1824 = vadd.f32 0.0, %v1823
        %v1825 = vpop.f32.mrf.mxu0
        %v1826 = vpop.f32.mrf.mxu0
        %1827 = vdwg.mxu0
        %v1828 = vadd.f32 %v1549, %v1781
        %v1829 = vadd.f32 %v1550, %v1783
        %v1830 = vadd.f32 %v1551, %v1822
        %v1831 = vadd.f32 %v1552, %v1824
        %v1832 = vld [vmem:[#allocation15] sm:$0xf]
        %v1834 = vlaneseq
        %v1835 = vshrl.u32 %v1834, 7
        %v1836 = vsub.s32 0, %v1835
        %v1837 = vrot.slane %v1832, %v1836
        %v1838 = vlaneseq
        %v1839 = vshrl.u32 %v1838, 7
        %v1840 = vsub.s32 1, %v1839
        %v1841 = vrot.slane %v1832, %v1840
        %v1842 = vlaneseq
        %v1843 = vshrl.u32 %v1842, 7
        %v1844 = vsub.s32 2, %v1843
        %v1845 = vrot.slane %v1832, %v1844
        %v1846 = vlaneseq
        %v1847 = vshrl.u32 %v1846, 7
        %v1848 = vsub.s32 3, %v1847
        %v1849 = vrot.slane %v1832, %v1848
        %v1854 = vadd.f32 %v1828, %v1837
        %v1855 = vadd.f32 %v1829, %v1841
        %v1856 = vadd.f32 %v1830, %v1845
        %v1857 = vadd.f32 %v1831, %v1849
        %v1858 = vxor.u32 %v1854, 2147483648
        %v1859 = vmul.f32 %v1858, 1.442695
        %v1860 = vpow.pop %v1859
        %v1861 = vadd.f32 %v1860, 1.0
        %v1862 = vrcp.pop %v1861
        %v1863 = vmul.f32 1.0, %v1862
        %v1864 = vxor.u32 %v1855, 2147483648
        %v1865 = vmul.f32 %v1864, 1.442695
        %v1866 = vpow.pop %v1865
        %v1867 = vadd.f32 %v1866, 1.0
        %v1868 = vrcp.pop %v1867
        %v1869 = vmul.f32 1.0, %v1868
        %v1870 = vtanh.pop %v1856
        %v1871 = vxor.u32 %v1857, 2147483648
        %v1872 = vmul.f32 %v1871, 1.442695
        %v1873 = vpow.pop %v1872
        %v1874 = vadd.f32 %v1873, 1.0
        %v1875 = vrcp.pop %v1874
        %v1876 = vmul.f32 1.0, %v1875
        %v1877 = vld [vmem:[#allocation5] sm:$0xff]
        %v1878 = vmul.f32 %v1869, %v1877
        %v1879 = vmul.f32 %v1863, %v1870
        %v1880 = vadd.f32 %v1878, %v1879
        %v1881 = vtanh.pop %v1880
        %v1882 = vmul.f32 %v1876, %v1881
        %1883 = vst [vmem:[#allocation5] sm:$0xff] %v1880
        %1884 = vst [vmem:[#allocation4] sm:$0xff] %v1882
        %s1885 = scalar_lea.vmem [#allocation3], 16
        %1886 = vst [vmem:[%s1885] sm:$0xff] %v1882
        %v1887 = vld [vmem:[#allocation4] sm:$0xff]
        %s1888 = smul.u32 3, 4
        %s1889 = smul.addr %s1888, 8
        %s1890 = scalar_lea.vmem [#allocation2], %s1889
        %v1891 = vld [vmem:[%s1890] sm:$0xff]
        %v1892 = vld [vmem:[%s1890 + $0x8] sm:$0xff]
        %v1893 = vld [vmem:[%s1890 + $0x10] sm:$0xff]
        %v1894 = vld [vmem:[%s1890 + $0x18] sm:$0xff]
        %v1895 = vpack.c.bf16 %v1887, %v1887
        %v1896 = vld [vmem:[#allocation13] sm:$0xff]
        %v1897 = vld [vmem:[#allocation13 + $0x8] sm:$0xff]
        %v1898 = vld [vmem:[#allocation13 + $0x10] sm:$0xff]
        %v1899 = vld [vmem:[#allocation13 + $0x18] sm:$0xff]
        %v1900 = vld [vmem:[#allocation13 + $0x20] sm:$0xff]
        %v1901 = vld [vmem:[#allocation13 + $0x28] sm:$0xff]
        %v1902 = vld [vmem:[#allocation13 + $0x30] sm:$0xff]
        %v1903 = vld [vmem:[#allocation13 + $0x38] sm:$0xff]
        %v1904 = vld [vmem:[#allocation13 + $0x40] sm:$0xff]
        %v1905 = vld [vmem:[#allocation13 + $0x48] sm:$0xff]
        %v1906 = vld [vmem:[#allocation13 + $0x50] sm:$0xff]
        %v1907 = vld [vmem:[#allocation13 + $0x58] sm:$0xff]
        %v1908 = vld [vmem:[#allocation13 + $0x60] sm:$0xff]
        %v1909 = vld [vmem:[#allocation13 + $0x68] sm:$0xff]
        %v1910 = vld [vmem:[#allocation13 + $0x70] sm:$0xff]
        %v1911 = vld [vmem:[#allocation13 + $0x78] sm:$0xff]
        %v1912 = vld [vmem:[#allocation13 + $0x80] sm:$0xff]
        %v1913 = vld [vmem:[#allocation13 + $0x88] sm:$0xff]
        %v1914 = vld [vmem:[#allocation13 + $0x90] sm:$0xff]
        %v1915 = vld [vmem:[#allocation13 + $0x98] sm:$0xff]
        %v1916 = vld [vmem:[#allocation13 + $0xa0] sm:$0xff]
        %v1917 = vld [vmem:[#allocation13 + $0xa8] sm:$0xff]
        %v1918 = vld [vmem:[#allocation13 + $0xb0] sm:$0xff]
        %v1919 = vld [vmem:[#allocation13 + $0xb8] sm:$0xff]
        %v1920 = vld [vmem:[#allocation13 + $0xc0] sm:$0xff]
        %v1921 = vld [vmem:[#allocation13 + $0xc8] sm:$0xff]
        %v1922 = vld [vmem:[#allocation13 + $0xd0] sm:$0xff]
        %v1923 = vld [vmem:[#allocation13 + $0xd8] sm:$0xff]
        %v1924 = vld [vmem:[#allocation13 + $0xe0] sm:$0xff]
        %v1925 = vld [vmem:[#allocation13 + $0xe8] sm:$0xff]
        %v1926 = vld [vmem:[#allocation13 + $0xf0] sm:$0xff]
        %v1927 = vld [vmem:[#allocation13 + $0xf8] sm:$0xff]
        %v1960 = vunpack.c.l.b16 %v1896
        %v1961 = vunpack.c.h.b16 %v1896
        %v1962 = vunpack.c.l.b16 %v1897
        %v1963 = vunpack.c.h.b16 %v1897
        %v1964 = vunpack.c.l.b16 %v1898
        %v1965 = vunpack.c.h.b16 %v1898
        %v1966 = vunpack.c.l.b16 %v1899
        %v1967 = vunpack.c.h.b16 %v1899
        %v1968 = vunpack.c.l.b16 %v1900
        %v1969 = vunpack.c.h.b16 %v1900
        %v1970 = vunpack.c.l.b16 %v1901
        %v1971 = vunpack.c.h.b16 %v1901
        %v1972 = vunpack.c.l.b16 %v1902
        %v1973 = vunpack.c.h.b16 %v1902
        %v1974 = vunpack.c.l.b16 %v1903
        %v1975 = vunpack.c.h.b16 %v1903
        %v1976 = vunpack.c.l.b16 %v1904
        %v1977 = vunpack.c.h.b16 %v1904
        %v1978 = vunpack.c.l.b16 %v1905
        %v1979 = vunpack.c.h.b16 %v1905
        %v1980 = vunpack.c.l.b16 %v1906
        %v1981 = vunpack.c.h.b16 %v1906
        %v1982 = vunpack.c.l.b16 %v1907
        %v1983 = vunpack.c.h.b16 %v1907
        %v1984 = vunpack.c.l.b16 %v1908
        %v1985 = vunpack.c.h.b16 %v1908
        %v1986 = vunpack.c.l.b16 %v1909
        %v1987 = vunpack.c.h.b16 %v1909
        %v1988 = vunpack.c.l.b16 %v1910
        %v1989 = vunpack.c.h.b16 %v1910
        %v1990 = vunpack.c.l.b16 %v1911
        %v1991 = vunpack.c.h.b16 %v1911
        %v1992 = vunpack.c.l.b16 %v1912
        %v1993 = vunpack.c.h.b16 %v1912
        %v1994 = vunpack.c.l.b16 %v1913
        %v1995 = vunpack.c.h.b16 %v1913
        %v1996 = vunpack.c.l.b16 %v1914
        %v1997 = vunpack.c.h.b16 %v1914
        %v1998 = vunpack.c.l.b16 %v1915
        %v1999 = vunpack.c.h.b16 %v1915
        %v2000 = vunpack.c.l.b16 %v1916
        %v2001 = vunpack.c.h.b16 %v1916
        %v2002 = vunpack.c.l.b16 %v1917
        %v2003 = vunpack.c.h.b16 %v1917
        %v2004 = vunpack.c.l.b16 %v1918
        %v2005 = vunpack.c.h.b16 %v1918
        %v2006 = vunpack.c.l.b16 %v1919
        %v2007 = vunpack.c.h.b16 %v1919
        %v2008 = vunpack.c.l.b16 %v1920
        %v2009 = vunpack.c.h.b16 %v1920
        %v2010 = vunpack.c.l.b16 %v1921
        %v2011 = vunpack.c.h.b16 %v1921
        %v2012 = vunpack.c.l.b16 %v1922
        %v2013 = vunpack.c.h.b16 %v1922
        %v2014 = vunpack.c.l.b16 %v1923
        %v2015 = vunpack.c.h.b16 %v1923
        %v2016 = vunpack.c.l.b16 %v1924
        %v2017 = vunpack.c.h.b16 %v1924
        %v2018 = vunpack.c.l.b16 %v1925
        %v2019 = vunpack.c.h.b16 %v1925
        %v2020 = vunpack.c.l.b16 %v1926
        %v2021 = vunpack.c.h.b16 %v1926
        %v2022 = vunpack.c.l.b16 %v1927
        %v2023 = vunpack.c.h.b16 %v1927
        %v2024 = vpack.c.b16 %v1964, %v1960
        %v2025 = vpack.c.b16 %v1965, %v1961
        %v2026 = vpack.c.b16 %v1966, %v1962
        %v2027 = vpack.c.b16 %v1967, %v1963
        %v2028 = vpack.c.b16 %v1972, %v1968
        %v2029 = vpack.c.b16 %v1973, %v1969
        %v2030 = vpack.c.b16 %v1974, %v1970
        %v2031 = vpack.c.b16 %v1975, %v1971
        %v2032 = vpack.c.b16 %v1980, %v1976
        %v2033 = vpack.c.b16 %v1981, %v1977
        %v2034 = vpack.c.b16 %v1982, %v1978
        %v2035 = vpack.c.b16 %v1983, %v1979
        %v2036 = vpack.c.b16 %v1988, %v1984
        %v2037 = vpack.c.b16 %v1989, %v1985
        %v2038 = vpack.c.b16 %v1990, %v1986
        %v2039 = vpack.c.b16 %v1991, %v1987
        %v2040 = vpack.c.b16 %v1996, %v1992
        %v2041 = vpack.c.b16 %v1997, %v1993
        %v2042 = vpack.c.b16 %v1998, %v1994
        %v2043 = vpack.c.b16 %v1999, %v1995
        %v2044 = vpack.c.b16 %v2004, %v2000
        %v2045 = vpack.c.b16 %v2005, %v2001
        %v2046 = vpack.c.b16 %v2006, %v2002
        %v2047 = vpack.c.b16 %v2007, %v2003
        %v2048 = vpack.c.b16 %v2012, %v2008
        %v2049 = vpack.c.b16 %v2013, %v2009
        %v2050 = vpack.c.b16 %v2014, %v2010
        %v2051 = vpack.c.b16 %v2015, %v2011
        %v2052 = vpack.c.b16 %v2020, %v2016
        %v2053 = vpack.c.b16 %v2021, %v2017
        %v2054 = vpack.c.b16 %v2022, %v2018
        %v2055 = vpack.c.b16 %v2023, %v2019
        %2088 = vmatprep.subr.bf16.mxu0 %v2053
        %2089 = vmatpush1.bf16.msra.mxu0 %v2052
        %2090 = vmatprep.subr.bf16.mxu0 %v2049
        %2091 = vmatpush1.bf16.msra.mxu0 %v2048
        %2092 = vmatprep.subr.bf16.mxu0 %v2045
        %2093 = vmatpush1.bf16.msra.mxu0 %v2044
        %2094 = vmatprep.subr.bf16.mxu0 %v2041
        %2095 = vmatpush1.bf16.msra.mxu0 %v2040
        %2096 = vmatprep.subr.bf16.mxu0 %v2037
        %2097 = vmatpush1.bf16.msra.mxu0 %v2036
        %2098 = vmatprep.subr.bf16.mxu0 %v2033
        %2099 = vmatpush1.bf16.msra.mxu0 %v2032
        %2100 = vmatprep.subr.bf16.mxu0 %v2029
        %2101 = vmatpush1.bf16.msra.mxu0 %v2028
        %2102 = vmatprep.subr.bf16.mxu0 %v2025
        %2103 = vmatpush1.bf16.msra.mxu0 %v2024
        %2104 = vmatprep.subr.bf16.mxu0 0
        %2105 = vmatpush2.bf16.msra.mxu0 0
        %2106 = vmatprep.subr.bf16.mxu0 0
        %2107 = vmatpush2.bf16.msra.mxu0 0
        %2108 = vmatprep.subr.bf16.mxu0 0
        %2109 = vmatpush2.bf16.msra.mxu0 0
        %2110 = vmatprep.subr.bf16.mxu0 0
        %2111 = vmatpush2.bf16.msra.mxu0 0
        %2112 = vmatprep.subr.bf16.mxu0 0
        %2113 = vmatpush2.bf16.msra.mxu0 0
        %2114 = vmatprep.subr.bf16.mxu0 0
        %2115 = vmatpush2.bf16.msra.mxu0 0
        %2116 = vmatprep.subr.bf16.mxu0 0
        %2117 = vmatpush2.bf16.msra.mxu0 0
        %2118 = vmatprep.subr.bf16.mxu0 0
        %2119 = vmatpush2.bf16.msra.mxu0 0
        %2120 = vmatprep.mubr.bf16.mxu0 0
        %2121 = vmatmul.mubr.bf16.gmra.mxu0 %v1895
        %v2122 = vpop.f32.mrf.mxu0
        %v2123 = vadd.f32 0.0, %v2122
        %v2124 = vpop.f32.mrf.mxu0
        %v2125 = vadd.f32 0.0, %v2124
        %v2126 = vpop.f32.mrf.mxu0
        %v2127 = vpop.f32.mrf.mxu0
        %2128 = vdwg.mxu0
        %2129 = vmatprep.subr.bf16.mxu0 %v2055
        %2130 = vmatpush1.bf16.msra.mxu0 %v2054
        %2131 = vmatprep.subr.bf16.mxu0 %v2051
        %2132 = vmatpush1.bf16.msra.mxu0 %v2050
        %2133 = vmatprep.subr.bf16.mxu0 %v2047
        %2134 = vmatpush1.bf16.msra.mxu0 %v2046
        %2135 = vmatprep.subr.bf16.mxu0 %v2043
        %2136 = vmatpush1.bf16.msra.mxu0 %v2042
        %2137 = vmatprep.subr.bf16.mxu0 %v2039
        %2138 = vmatpush1.bf16.msra.mxu0 %v2038
        %2139 = vmatprep.subr.bf16.mxu0 %v2035
        %2140 = vmatpush1.bf16.msra.mxu0 %v2034
        %2141 = vmatprep.subr.bf16.mxu0 %v2031
        %2142 = vmatpush1.bf16.msra.mxu0 %v2030
        %2143 = vmatprep.subr.bf16.mxu0 %v2027
        %2144 = vmatpush1.bf16.msra.mxu0 %v2026
        %2145 = vmatprep.subr.bf16.mxu0 0
        %2146 = vmatpush2.bf16.msra.mxu0 0
        %2147 = vmatprep.subr.bf16.mxu0 0
        %2148 = vmatpush2.bf16.msra.mxu0 0
        %2149 = vmatprep.subr.bf16.mxu0 0
        %2150 = vmatpush2.bf16.msra.mxu0 0
        %2151 = vmatprep.subr.bf16.mxu0 0
        %2152 = vmatpush2.bf16.msra.mxu0 0
        %2153 = vmatprep.subr.bf16.mxu0 0
        %2154 = vmatpush2.bf16.msra.mxu0 0
        %2155 = vmatprep.subr.bf16.mxu0 0
        %2156 = vmatpush2.bf16.msra.mxu0 0
        %2157 = vmatprep.subr.bf16.mxu0 0
        %2158 = vmatpush2.bf16.msra.mxu0 0
        %2159 = vmatprep.subr.bf16.mxu0 0
        %2160 = vmatpush2.bf16.msra.mxu0 0
        %2161 = vmatprep.mubr.bf16.mxu0 0
        %2162 = vmatmul.mubr.bf16.gmra.mxu0 %v1895
        %v2163 = vpop.f32.mrf.mxu0
        %v2164 = vadd.f32 0.0, %v2163
        %v2165 = vpop.f32.mrf.mxu0
        %v2166 = vadd.f32 0.0, %v2165
        %v2167 = vpop.f32.mrf.mxu0
        %v2168 = vpop.f32.mrf.mxu0
        %2169 = vdwg.mxu0
        %v2170 = vadd.f32 %v1891, %v2123
        %v2171 = vadd.f32 %v1892, %v2125
        %v2172 = vadd.f32 %v1893, %v2164
        %v2173 = vadd.f32 %v1894, %v2166
        %v2174 = vld [vmem:[#allocation15] sm:$0xf]
        %v2176 = vlaneseq
        %v2177 = vshrl.u32 %v2176, 7
        %v2178 = vsub.s32 0, %v2177
        %v2179 = vrot.slane %v2174, %v2178
        %v2180 = vlaneseq
        %v2181 = vshrl.u32 %v2180, 7
        %v2182 = vsub.s32 1, %v2181
        %v2183 = vrot.slane %v2174, %v2182
        %v2184 = vlaneseq
        %v2185 = vshrl.u32 %v2184, 7
        %v2186 = vsub.s32 2, %v2185
        %v2187 = vrot.slane %v2174, %v2186
        %v2188 = vlaneseq
        %v2189 = vshrl.u32 %v2188, 7
        %v2190 = vsub.s32 3, %v2189
        %v2191 = vrot.slane %v2174, %v2190
        %v2196 = vadd.f32 %v2170, %v2179
        %v2197 = vadd.f32 %v2171, %v2183
        %v2198 = vadd.f32 %v2172, %v2187
        %v2199 = vadd.f32 %v2173, %v2191
        %v2200 = vxor.u32 %v2196, 2147483648
        %v2201 = vmul.f32 %v2200, 1.442695
        %v2202 = vpow.pop %v2201
        %v2203 = vadd.f32 %v2202, 1.0
        %v2204 = vrcp.pop %v2203
        %v2205 = vmul.f32 1.0, %v2204
        %v2206 = vxor.u32 %v2197, 2147483648
        %v2207 = vmul.f32 %v2206, 1.442695
        %v2208 = vpow.pop %v2207
        %v2209 = vadd.f32 %v2208, 1.0
        %v2210 = vrcp.pop %v2209
        %v2211 = vmul.f32 1.0, %v2210
        %v2212 = vtanh.pop %v2198
        %v2213 = vxor.u32 %v2199, 2147483648
        %v2214 = vmul.f32 %v2213, 1.442695
        %v2215 = vpow.pop %v2214
        %v2216 = vadd.f32 %v2215, 1.0
        %v2217 = vrcp.pop %v2216
        %v2218 = vmul.f32 1.0, %v2217
        %v2219 = vld [vmem:[#allocation5] sm:$0xff]
        %v2220 = vmul.f32 %v2211, %v2219
        %v2221 = vmul.f32 %v2205, %v2212
        %v2222 = vadd.f32 %v2220, %v2221
        %v2223 = vtanh.pop %v2222
        %v2224 = vmul.f32 %v2218, %v2223
        %2225 = vst [vmem:[#allocation5] sm:$0xff] %v2222
        %2226 = vst [vmem:[#allocation4] sm:$0xff] %v2224
        %s2227 = scalar_lea.vmem [#allocation3], 24
        %2228 = vst [vmem:[%s2227] sm:$0xff] %v2224
        %v2229 = vld [vmem:[#allocation3] sm:$0xff]
        %v2230 = vld [vmem:[#allocation3 + $0x8] sm:$0xff]
        %v2231 = vld [vmem:[#allocation3 + $0x10] sm:$0xff]
        %v2232 = vld [vmem:[#allocation3 + $0x18] sm:$0xff]
        %v2233 = vpack.c.bf16 %v2230, %v2229
        %v2234 = vpack.c.bf16 %v2232, %v2231
        %v2235 = vld [vmem:[#allocation12] sm:$0xff]
        %v2236 = vld [vmem:[#allocation12 + $0x8] sm:$0xff]
        %v2237 = vld [vmem:[#allocation12 + $0x10] sm:$0xff]
        %v2238 = vld [vmem:[#allocation12 + $0x18] sm:$0xff]
        %v2239 = vld [vmem:[#allocation12 + $0x20] sm:$0xff]
        %v2240 = vld [vmem:[#allocation12 + $0x28] sm:$0xff]
        %v2241 = vld [vmem:[#allocation12 + $0x30] sm:$0xff]
        %v2242 = vld [vmem:[#allocation12 + $0x38] sm:$0xff]
        %v2243 = vld [vmem:[#allocation12 + $0x40] sm:$0xff]
        %v2244 = vld [vmem:[#allocation12 + $0x48] sm:$0xff]
        %v2245 = vld [vmem:[#allocation12 + $0x50] sm:$0xff]
        %v2246 = vld [vmem:[#allocation12 + $0x58] sm:$0xff]
        %v2247 = vld [vmem:[#allocation12 + $0x60] sm:$0xff]
        %v2248 = vld [vmem:[#allocation12 + $0x68] sm:$0xff]
        %v2249 = vld [vmem:[#allocation12 + $0x70] sm:$0xff]
        %v2250 = vld [vmem:[#allocation12 + $0x78] sm:$0xff]
        %v2251 = vld [vmem:[#allocation12 + $0x80] sm:$0xff]
        %v2252 = vld [vmem:[#allocation12 + $0x88] sm:$0xff]
        %v2253 = vld [vmem:[#allocation12 + $0x90] sm:$0xff]
        %v2254 = vld [vmem:[#allocation12 + $0x98] sm:$0xff]
        %v2255 = vld [vmem:[#allocation12 + $0xa0] sm:$0xff]
        %v2256 = vld [vmem:[#allocation12 + $0xa8] sm:$0xff]
        %v2257 = vld [vmem:[#allocation12 + $0xb0] sm:$0xff]
        %v2258 = vld [vmem:[#allocation12 + $0xb8] sm:$0xff]
        %v2259 = vld [vmem:[#allocation12 + $0xc0] sm:$0xff]
        %v2260 = vld [vmem:[#allocation12 + $0xc8] sm:$0xff]
        %v2261 = vld [vmem:[#allocation12 + $0xd0] sm:$0xff]
        %v2262 = vld [vmem:[#allocation12 + $0xd8] sm:$0xff]
        %v2263 = vld [vmem:[#allocation12 + $0xe0] sm:$0xff]
        %v2264 = vld [vmem:[#allocation12 + $0xe8] sm:$0xff]
        %v2265 = vld [vmem:[#allocation12 + $0xf0] sm:$0xff]
        %v2266 = vld [vmem:[#allocation12 + $0xf8] sm:$0xff]
        %v2299 = vunpack.c.l.b16 %v2235
        %v2300 = vunpack.c.h.b16 %v2235
        %v2301 = vunpack.c.l.b16 %v2236
        %v2302 = vunpack.c.h.b16 %v2236
        %v2303 = vunpack.c.l.b16 %v2237
        %v2304 = vunpack.c.h.b16 %v2237
        %v2305 = vunpack.c.l.b16 %v2238
        %v2306 = vunpack.c.h.b16 %v2238
        %v2307 = vunpack.c.l.b16 %v2239
        %v2308 = vunpack.c.h.b16 %v2239
        %v2309 = vunpack.c.l.b16 %v2240
        %v2310 = vunpack.c.h.b16 %v2240
        %v2311 = vunpack.c.l.b16 %v2241
        %v2312 = vunpack.c.h.b16 %v2241
        %v2313 = vunpack.c.l.b16 %v2242
        %v2314 = vunpack.c.h.b16 %v2242
        %v2315 = vunpack.c.l.b16 %v2243
        %v2316 = vunpack.c.h.b16 %v2243
        %v2317 = vunpack.c.l.b16 %v2244
        %v2318 = vunpack.c.h.b16 %v2244
        %v2319 = vunpack.c.l.b16 %v2245
        %v2320 = vunpack.c.h.b16 %v2245
        %v2321 = vunpack.c.l.b16 %v2246
        %v2322 = vunpack.c.h.b16 %v2246
        %v2323 = vunpack.c.l.b16 %v2247
        %v2324 = vunpack.c.h.b16 %v2247
        %v2325 = vunpack.c.l.b16 %v2248
        %v2326 = vunpack.c.h.b16 %v2248
        %v2327 = vunpack.c.l.b16 %v2249
        %v2328 = vunpack.c.h.b16 %v2249
        %v2329 = vunpack.c.l.b16 %v2250
        %v2330 = vunpack.c.h.b16 %v2250
        %v2331 = vunpack.c.l.b16 %v2251
        %v2332 = vunpack.c.h.b16 %v2251
        %v2333 = vunpack.c.l.b16 %v2252
        %v2334 = vunpack.c.h.b16 %v2252
        %v2335 = vunpack.c.l.b16 %v2253
        %v2336 = vunpack.c.h.b16 %v2253
        %v2337 = vunpack.c.l.b16 %v2254
        %v2338 = vunpack.c.h.b16 %v2254
        %v2339 = vunpack.c.l.b16 %v2255
        %v2340 = vunpack.c.h.b16 %v2255
        %v2341 = vunpack.c.l.b16 %v2256
        %v2342 = vunpack.c.h.b16 %v2256
        %v2343 = vunpack.c.l.b16 %v2257
        %v2344 = vunpack.c.h.b16 %v2257
        %v2345 = vunpack.c.l.b16 %v2258
        %v2346 = vunpack.c.h.b16 %v2258
        %v2347 = vunpack.c.l.b16 %v2259
        %v2348 = vunpack.c.h.b16 %v2259
        %v2349 = vunpack.c.l.b16 %v2260
        %v2350 = vunpack.c.h.b16 %v2260
        %v2351 = vunpack.c.l.b16 %v2261
        %v2352 = vunpack.c.h.b16 %v2261
        %v2353 = vunpack.c.l.b16 %v2262
        %v2354 = vunpack.c.h.b16 %v2262
        %v2355 = vunpack.c.l.b16 %v2263
        %v2356 = vunpack.c.h.b16 %v2263
        %v2357 = vunpack.c.l.b16 %v2264
        %v2358 = vunpack.c.h.b16 %v2264
        %v2359 = vunpack.c.l.b16 %v2265
        %v2360 = vunpack.c.h.b16 %v2265
        %v2361 = vunpack.c.l.b16 %v2266
        %v2362 = vunpack.c.h.b16 %v2266
        %v2363 = vpack.c.b16 %v2303, %v2299
        %v2364 = vpack.c.b16 %v2304, %v2300
        %v2365 = vpack.c.b16 %v2305, %v2301
        %v2366 = vpack.c.b16 %v2306, %v2302
        %v2367 = vpack.c.b16 %v2311, %v2307
        %v2368 = vpack.c.b16 %v2312, %v2308
        %v2369 = vpack.c.b16 %v2313, %v2309
        %v2370 = vpack.c.b16 %v2314, %v2310
        %v2371 = vpack.c.b16 %v2319, %v2315
        %v2372 = vpack.c.b16 %v2320, %v2316
        %v2373 = vpack.c.b16 %v2321, %v2317
        %v2374 = vpack.c.b16 %v2322, %v2318
        %v2375 = vpack.c.b16 %v2327, %v2323
        %v2376 = vpack.c.b16 %v2328, %v2324
        %v2377 = vpack.c.b16 %v2329, %v2325
        %v2378 = vpack.c.b16 %v2330, %v2326
        %v2379 = vpack.c.b16 %v2335, %v2331
        %v2380 = vpack.c.b16 %v2336, %v2332
        %v2381 = vpack.c.b16 %v2337, %v2333
        %v2382 = vpack.c.b16 %v2338, %v2334
        %v2383 = vpack.c.b16 %v2343, %v2339
        %v2384 = vpack.c.b16 %v2344, %v2340
        %v2385 = vpack.c.b16 %v2345, %v2341
        %v2386 = vpack.c.b16 %v2346, %v2342
        %v2387 = vpack.c.b16 %v2351, %v2347
        %v2388 = vpack.c.b16 %v2352, %v2348
        %v2389 = vpack.c.b16 %v2353, %v2349
        %v2390 = vpack.c.b16 %v2354, %v2350
        %v2391 = vpack.c.b16 %v2359, %v2355
        %v2392 = vpack.c.b16 %v2360, %v2356
        %v2393 = vpack.c.b16 %v2361, %v2357
        %v2394 = vpack.c.b16 %v2362, %v2358
        %2427 = vmatprep.subr.bf16.mxu0 %v2392
        %2428 = vmatpush1.bf16.msra.mxu0 %v2391
        %2429 = vmatprep.subr.bf16.mxu0 %v2388
        %2430 = vmatpush1.bf16.msra.mxu0 %v2387
        %2431 = vmatprep.subr.bf16.mxu0 %v2384
        %2432 = vmatpush1.bf16.msra.mxu0 %v2383
        %2433 = vmatprep.subr.bf16.mxu0 %v2380
        %2434 = vmatpush1.bf16.msra.mxu0 %v2379
        %2435 = vmatprep.subr.bf16.mxu0 %v2376
        %2436 = vmatpush1.bf16.msra.mxu0 %v2375
        %2437 = vmatprep.subr.bf16.mxu0 %v2372
        %2438 = vmatpush1.bf16.msra.mxu0 %v2371
        %2439 = vmatprep.subr.bf16.mxu0 %v2368
        %2440 = vmatpush1.bf16.msra.mxu0 %v2367
        %2441 = vmatprep.subr.bf16.mxu0 %v2364
        %2442 = vmatpush1.bf16.msra.mxu0 %v2363
        %2443 = vmatprep.subr.bf16.mxu0 0
        %2444 = vmatpush2.bf16.msra.mxu0 0
        %2445 = vmatprep.subr.bf16.mxu0 0
        %2446 = vmatpush2.bf16.msra.mxu0 0
        %2447 = vmatprep.subr.bf16.mxu0 0
        %2448 = vmatpush2.bf16.msra.mxu0 0
        %2449 = vmatprep.subr.bf16.mxu0 0
        %2450 = vmatpush2.bf16.msra.mxu0 0
        %2451 = vmatprep.subr.bf16.mxu0 0
        %2452 = vmatpush2.bf16.msra.mxu0 0
        %2453 = vmatprep.subr.bf16.mxu0 0
        %2454 = vmatpush2.bf16.msra.mxu0 0
        %2455 = vmatprep.subr.bf16.mxu0 0
        %2456 = vmatpush2.bf16.msra.mxu0 0
        %2457 = vmatprep.subr.bf16.mxu0 0
        %2458 = vmatpush2.bf16.msra.mxu0 0
        %2459 = vmatprep.mubr.bf16.mxu0 0
        %2460 = vmatmul.mubr.bf16.gmra.mxu0 %v2233
        %v2461 = vpop.f32.mrf.mxu0
        %v2462 = vadd.f32 0.0, %v2461
        %v2463 = vpop.f32.mrf.mxu0
        %v2464 = vadd.f32 0.0, %v2463
        %v2465 = vpop.f32.mrf.mxu0
        %v2466 = vadd.f32 0.0, %v2465
        %v2467 = vpop.f32.mrf.mxu0
        %v2468 = vadd.f32 0.0, %v2467
        %2469 = vmatprep.mubr.bf16.mxu0 0
        %2470 = vmatmul.mubr.bf16.gmra.mxu0 %v2234
        %v2471 = vpop.f32.mrf.mxu0
        %v2472 = vadd.f32 0.0, %v2471
        %v2473 = vpop.f32.mrf.mxu0
        %v2474 = vadd.f32 0.0, %v2473
        %v2475 = vpop.f32.mrf.mxu0
        %v2476 = vadd.f32 0.0, %v2475
        %v2477 = vpop.f32.mrf.mxu0
        %v2478 = vadd.f32 0.0, %v2477
        %2479 = vdwg.mxu0
        %2480 = vmatprep.subr.bf16.mxu0 %v2394
        %2481 = vmatpush1.bf16.msra.mxu0 %v2393
        %2482 = vmatprep.subr.bf16.mxu0 %v2390
        %2483 = vmatpush1.bf16.msra.mxu0 %v2389
        %2484 = vmatprep.subr.bf16.mxu0 %v2386
        %2485 = vmatpush1.bf16.msra.mxu0 %v2385
        %2486 = vmatprep.subr.bf16.mxu0 %v2382
        %2487 = vmatpush1.bf16.msra.mxu0 %v2381
        %2488 = vmatprep.subr.bf16.mxu0 %v2378
        %2489 = vmatpush1.bf16.msra.mxu0 %v2377
        %2490 = vmatprep.subr.bf16.mxu0 %v2374
        %2491 = vmatpush1.bf16.msra.mxu0 %v2373
        %2492 = vmatprep.subr.bf16.mxu0 %v2370
        %2493 = vmatpush1.bf16.msra.mxu0 %v2369
        %2494 = vmatprep.subr.bf16.mxu0 %v2366
        %2495 = vmatpush1.bf16.msra.mxu0 %v2365
        %2496 = vmatprep.subr.bf16.mxu0 0
        %2497 = vmatpush2.bf16.msra.mxu0 0
        %2498 = vmatprep.subr.bf16.mxu0 0
        %2499 = vmatpush2.bf16.msra.mxu0 0
        %2500 = vmatprep.subr.bf16.mxu0 0
        %2501 = vmatpush2.bf16.msra.mxu0 0
        %2502 = vmatprep.subr.bf16.mxu0 0
        %2503 = vmatpush2.bf16.msra.mxu0 0
        %2504 = vmatprep.subr.bf16.mxu0 0
        %2505 = vmatpush2.bf16.msra.mxu0 0
        %2506 = vmatprep.subr.bf16.mxu0 0
        %2507 = vmatpush2.bf16.msra.mxu0 0
        %2508 = vmatprep.subr.bf16.mxu0 0
        %2509 = vmatpush2.bf16.msra.mxu0 0
        %2510 = vmatprep.subr.bf16.mxu0 0
        %2511 = vmatpush2.bf16.msra.mxu0 0
        %2512 = vmatprep.mubr.bf16.mxu0 0
        %2513 = vmatmul.mubr.bf16.gmra.mxu0 %v2233
        %v2514 = vpop.f32.mrf.mxu0
        %v2515 = vadd.f32 0.0, %v2514
        %v2516 = vpop.f32.mrf.mxu0
        %v2517 = vadd.f32 0.0, %v2516
        %v2518 = vpop.f32.mrf.mxu0
        %v2519 = vadd.f32 0.0, %v2518
        %v2520 = vpop.f32.mrf.mxu0
        %v2521 = vadd.f32 0.0, %v2520
        %2522 = vmatprep.mubr.bf16.mxu0 0
        %2523 = vmatmul.mubr.bf16.gmra.mxu0 %v2234
        %v2524 = vpop.f32.mrf.mxu0
        %v2525 = vadd.f32 0.0, %v2524
        %v2526 = vpop.f32.mrf.mxu0
        %v2527 = vadd.f32 0.0, %v2526
        %v2528 = vpop.f32.mrf.mxu0
        %v2529 = vadd.f32 0.0, %v2528
        %v2530 = vpop.f32.mrf.mxu0
        %v2531 = vadd.f32 0.0, %v2530
        %2532 = vdwg.mxu0
        %2533 = vst [vmem:[#allocation2] sm:$0xff] %v2462
        %2534 = vst [vmem:[#allocation2 + $0x8] sm:$0xff] %v2464
        %2535 = vst [vmem:[#allocation2 + $0x10] sm:$0xff] %v2515
        %2536 = vst [vmem:[#allocation2 + $0x18] sm:$0xff] %v2517
        %2537 = vst [vmem:[#allocation2 + $0x20] sm:$0xff] %v2466
        %2538 = vst [vmem:[#allocation2 + $0x28] sm:$0xff] %v2468
        %2539 = vst [vmem:[#allocation2 + $0x30] sm:$0xff] %v2519
        %2540 = vst [vmem:[#allocation2 + $0x38] sm:$0xff] %v2521
        %2541 = vst [vmem:[#allocation2 + $0x40] sm:$0xff] %v2472
        %2542 = vst [vmem:[#allocation2 + $0x48] sm:$0xff] %v2474
        %2543 = vst [vmem:[#allocation2 + $0x50] sm:$0xff] %v2525
        %2544 = vst [vmem:[#allocation2 + $0x58] sm:$0xff] %v2527
        %2545 = vst [vmem:[#allocation2 + $0x60] sm:$0xff] %v2476
        %2546 = vst [vmem:[#allocation2 + $0x68] sm:$0xff] %v2478
        %2547 = vst [vmem:[#allocation2 + $0x70] sm:$0xff] %v2529
        %2548 = vst [vmem:[#allocation2 + $0x78] sm:$0xff] %v2531
        %s2549 = scalar_lea.vmem [#allocation4], 8
        %v2550 = vld [vmem:[%s2549] sm:$0xff]
        %v2551 = vld [vmem:[%s865] sm:$0xff]
        %v2552 = vld [vmem:[%s865 + $0x8] sm:$0xff]
        %v2553 = vld [vmem:[%s865 + $0x10] sm:$0xff]
        %v2554 = vld [vmem:[%s865 + $0x18] sm:$0xff]
        %v2555 = vpack.c.bf16 %v2550, %v2550
        %s2556 = scalar_lea.vmem [#allocation13], 256
        %v2557 = vld [vmem:[%s2556] sm:$0xff]
        %v2558 = vld [vmem:[%s2556 + $0x8] sm:$0xff]
        %v2559 = vld [vmem:[%s2556 + $0x10] sm:$0xff]
        %v2560 = vld [vmem:[%s2556 + $0x18] sm:$0xff]
        %v2561 = vld [vmem:[%s2556 + $0x20] sm:$0xff]
        %v2562 = vld [vmem:[%s2556 + $0x28] sm:$0xff]
        %v2563 = vld [vmem:[%s2556 + $0x30] sm:$0xff]
        %v2564 = vld [vmem:[%s2556 + $0x38] sm:$0xff]
        %v2565 = vld [vmem:[%s2556 + $0x40] sm:$0xff]
        %v2566 = vld [vmem:[%s2556 + $0x48] sm:$0xff]
        %v2567 = vld [vmem:[%s2556 + $0x50] sm:$0xff]
        %v2568 = vld [vmem:[%s2556 + $0x58] sm:$0xff]
        %v2569 = vld [vmem:[%s2556 + $0x60] sm:$0xff]
        %v2570 = vld [vmem:[%s2556 + $0x68] sm:$0xff]
        %v2571 = vld [vmem:[%s2556 + $0x70] sm:$0xff]
        %v2572 = vld [vmem:[%s2556 + $0x78] sm:$0xff]
        %v2573 = vld [vmem:[%s2556 + $0x80] sm:$0xff]
        %v2574 = vld [vmem:[%s2556 + $0x88] sm:$0xff]
        %v2575 = vld [vmem:[%s2556 + $0x90] sm:$0xff]
        %v2576 = vld [vmem:[%s2556 + $0x98] sm:$0xff]
        %v2577 = vld [vmem:[%s2556 + $0xa0] sm:$0xff]
        %v2578 = vld [vmem:[%s2556 + $0xa8] sm:$0xff]
        %v2579 = vld [vmem:[%s2556 + $0xb0] sm:$0xff]
        %v2580 = vld [vmem:[%s2556 + $0xb8] sm:$0xff]
        %v2581 = vld [vmem:[%s2556 + $0xc0] sm:$0xff]
        %v2582 = vld [vmem:[%s2556 + $0xc8] sm:$0xff]
        %v2583 = vld [vmem:[%s2556 + $0xd0] sm:$0xff]
        %v2584 = vld [vmem:[%s2556 + $0xd8] sm:$0xff]
        %v2585 = vld [vmem:[%s2556 + $0xe0] sm:$0xff]
        %v2586 = vld [vmem:[%s2556 + $0xe8] sm:$0xff]
        %v2587 = vld [vmem:[%s2556 + $0xf0] sm:$0xff]
        %v2588 = vld [vmem:[%s2556 + $0xf8] sm:$0xff]
        %v2621 = vunpack.c.l.b16 %v2557
        %v2622 = vunpack.c.h.b16 %v2557
        %v2623 = vunpack.c.l.b16 %v2558
        %v2624 = vunpack.c.h.b16 %v2558
        %v2625 = vunpack.c.l.b16 %v2559
        %v2626 = vunpack.c.h.b16 %v2559
        %v2627 = vunpack.c.l.b16 %v2560
        %v2628 = vunpack.c.h.b16 %v2560
        %v2629 = vunpack.c.l.b16 %v2561
        %v2630 = vunpack.c.h.b16 %v2561
        %v2631 = vunpack.c.l.b16 %v2562
        %v2632 = vunpack.c.h.b16 %v2562
        %v2633 = vunpack.c.l.b16 %v2563
        %v2634 = vunpack.c.h.b16 %v2563
        %v2635 = vunpack.c.l.b16 %v2564
        %v2636 = vunpack.c.h.b16 %v2564
        %v2637 = vunpack.c.l.b16 %v2565
        %v2638 = vunpack.c.h.b16 %v2565
        %v2639 = vunpack.c.l.b16 %v2566
        %v2640 = vunpack.c.h.b16 %v2566
        %v2641 = vunpack.c.l.b16 %v2567
        %v2642 = vunpack.c.h.b16 %v2567
        %v2643 = vunpack.c.l.b16 %v2568
        %v2644 = vunpack.c.h.b16 %v2568
        %v2645 = vunpack.c.l.b16 %v2569
        %v2646 = vunpack.c.h.b16 %v2569
        %v2647 = vunpack.c.l.b16 %v2570
        %v2648 = vunpack.c.h.b16 %v2570
        %v2649 = vunpack.c.l.b16 %v2571
        %v2650 = vunpack.c.h.b16 %v2571
        %v2651 = vunpack.c.l.b16 %v2572
        %v2652 = vunpack.c.h.b16 %v2572
        %v2653 = vunpack.c.l.b16 %v2573
        %v2654 = vunpack.c.h.b16 %v2573
        %v2655 = vunpack.c.l.b16 %v2574
        %v2656 = vunpack.c.h.b16 %v2574
        %v2657 = vunpack.c.l.b16 %v2575
        %v2658 = vunpack.c.h.b16 %v2575
        %v2659 = vunpack.c.l.b16 %v2576
        %v2660 = vunpack.c.h.b16 %v2576
        %v2661 = vunpack.c.l.b16 %v2577
        %v2662 = vunpack.c.h.b16 %v2577
        %v2663 = vunpack.c.l.b16 %v2578
        %v2664 = vunpack.c.h.b16 %v2578
        %v2665 = vunpack.c.l.b16 %v2579
        %v2666 = vunpack.c.h.b16 %v2579
        %v2667 = vunpack.c.l.b16 %v2580
        %v2668 = vunpack.c.h.b16 %v2580
        %v2669 = vunpack.c.l.b16 %v2581
        %v2670 = vunpack.c.h.b16 %v2581
        %v2671 = vunpack.c.l.b16 %v2582
        %v2672 = vunpack.c.h.b16 %v2582
        %v2673 = vunpack.c.l.b16 %v2583
        %v2674 = vunpack.c.h.b16 %v2583
        %v2675 = vunpack.c.l.b16 %v2584
        %v2676 = vunpack.c.h.b16 %v2584
        %v2677 = vunpack.c.l.b16 %v2585
        %v2678 = vunpack.c.h.b16 %v2585
        %v2679 = vunpack.c.l.b16 %v2586
        %v2680 = vunpack.c.h.b16 %v2586
        %v2681 = vunpack.c.l.b16 %v2587
        %v2682 = vunpack.c.h.b16 %v2587
        %v2683 = vunpack.c.l.b16 %v2588
        %v2684 = vunpack.c.h.b16 %v2588
        %v2685 = vpack.c.b16 %v2625, %v2621
        %v2686 = vpack.c.b16 %v2626, %v2622
        %v2687 = vpack.c.b16 %v2627, %v2623
        %v2688 = vpack.c.b16 %v2628, %v2624
        %v2689 = vpack.c.b16 %v2633, %v2629
        %v2690 = vpack.c.b16 %v2634, %v2630
        %v2691 = vpack.c.b16 %v2635, %v2631
        %v2692 = vpack.c.b16 %v2636, %v2632
        %v2693 = vpack.c.b16 %v2641, %v2637
        %v2694 = vpack.c.b16 %v2642, %v2638
        %v2695 = vpack.c.b16 %v2643, %v2639
        %v2696 = vpack.c.b16 %v2644, %v2640
        %v2697 = vpack.c.b16 %v2649, %v2645
        %v2698 = vpack.c.b16 %v2650, %v2646
        %v2699 = vpack.c.b16 %v2651, %v2647
        %v2700 = vpack.c.b16 %v2652, %v2648
        %v2701 = vpack.c.b16 %v2657, %v2653
        %v2702 = vpack.c.b16 %v2658, %v2654
        %v2703 = vpack.c.b16 %v2659, %v2655
        %v2704 = vpack.c.b16 %v2660, %v2656
        %v2705 = vpack.c.b16 %v2665, %v2661
        %v2706 = vpack.c.b16 %v2666, %v2662
        %v2707 = vpack.c.b16 %v2667, %v2663
        %v2708 = vpack.c.b16 %v2668, %v2664
        %v2709 = vpack.c.b16 %v2673, %v2669
        %v2710 = vpack.c.b16 %v2674, %v2670
        %v2711 = vpack.c.b16 %v2675, %v2671
        %v2712 = vpack.c.b16 %v2676, %v2672
        %v2713 = vpack.c.b16 %v2681, %v2677
        %v2714 = vpack.c.b16 %v2682, %v2678
        %v2715 = vpack.c.b16 %v2683, %v2679
        %v2716 = vpack.c.b16 %v2684, %v2680
        %2749 = vmatprep.subr.bf16.mxu0 %v2714
        %2750 = vmatpush1.bf16.msra.mxu0 %v2713
        %2751 = vmatprep.subr.bf16.mxu0 %v2710
        %2752 = vmatpush1.bf16.msra.mxu0 %v2709
        %2753 = vmatprep.subr.bf16.mxu0 %v2706
        %2754 = vmatpush1.bf16.msra.mxu0 %v2705
        %2755 = vmatprep.subr.bf16.mxu0 %v2702
        %2756 = vmatpush1.bf16.msra.mxu0 %v2701
        %2757 = vmatprep.subr.bf16.mxu0 %v2698
        %2758 = vmatpush1.bf16.msra.mxu0 %v2697
        %2759 = vmatprep.subr.bf16.mxu0 %v2694
        %2760 = vmatpush1.bf16.msra.mxu0 %v2693
        %2761 = vmatprep.subr.bf16.mxu0 %v2690
        %2762 = vmatpush1.bf16.msra.mxu0 %v2689
        %2763 = vmatprep.subr.bf16.mxu0 %v2686
        %2764 = vmatpush1.bf16.msra.mxu0 %v2685
        %2765 = vmatprep.subr.bf16.mxu0 0
        %2766 = vmatpush2.bf16.msra.mxu0 0
        %2767 = vmatprep.subr.bf16.mxu0 0
        %2768 = vmatpush2.bf16.msra.mxu0 0
        %2769 = vmatprep.subr.bf16.mxu0 0
        %2770 = vmatpush2.bf16.msra.mxu0 0
        %2771 = vmatprep.subr.bf16.mxu0 0
        %2772 = vmatpush2.bf16.msra.mxu0 0
        %2773 = vmatprep.subr.bf16.mxu0 0
        %2774 = vmatpush2.bf16.msra.mxu0 0
        %2775 = vmatprep.subr.bf16.mxu0 0
        %2776 = vmatpush2.bf16.msra.mxu0 0
        %2777 = vmatprep.subr.bf16.mxu0 0
        %2778 = vmatpush2.bf16.msra.mxu0 0
        %2779 = vmatprep.subr.bf16.mxu0 0
        %2780 = vmatpush2.bf16.msra.mxu0 0
        %2781 = vmatprep.mubr.bf16.mxu0 0
        %2782 = vmatmul.mubr.bf16.gmra.mxu0 %v2555
        %v2783 = vpop.f32.mrf.mxu0
        %v2784 = vadd.f32 0.0, %v2783
        %v2785 = vpop.f32.mrf.mxu0
        %v2786 = vadd.f32 0.0, %v2785
        %v2787 = vpop.f32.mrf.mxu0
        %v2788 = vpop.f32.mrf.mxu0
        %2789 = vdwg.mxu0
        %2790 = vmatprep.subr.bf16.mxu0 %v2716
        %2791 = vmatpush1.bf16.msra.mxu0 %v2715
        %2792 = vmatprep.subr.bf16.mxu0 %v2712
        %2793 = vmatpush1.bf16.msra.mxu0 %v2711
        %2794 = vmatprep.subr.bf16.mxu0 %v2708
        %2795 = vmatpush1.bf16.msra.mxu0 %v2707
        %2796 = vmatprep.subr.bf16.mxu0 %v2704
        %2797 = vmatpush1.bf16.msra.mxu0 %v2703
        %2798 = vmatprep.subr.bf16.mxu0 %v2700
        %2799 = vmatpush1.bf16.msra.mxu0 %v2699
        %2800 = vmatprep.subr.bf16.mxu0 %v2696
        %2801 = vmatpush1.bf16.msra.mxu0 %v2695
        %2802 = vmatprep.subr.bf16.mxu0 %v2692
        %2803 = vmatpush1.bf16.msra.mxu0 %v2691
        %2804 = vmatprep.subr.bf16.mxu0 %v2688
        %2805 = vmatpush1.bf16.msra.mxu0 %v2687
        %2806 = vmatprep.subr.bf16.mxu0 0
        %2807 = vmatpush2.bf16.msra.mxu0 0
        %2808 = vmatprep.subr.bf16.mxu0 0
        %2809 = vmatpush2.bf16.msra.mxu0 0
        %2810 = vmatprep.subr.bf16.mxu0 0
        %2811 = vmatpush2.bf16.msra.mxu0 0
        %2812 = vmatprep.subr.bf16.mxu0 0
        %2813 = vmatpush2.bf16.msra.mxu0 0
        %2814 = vmatprep.subr.bf16.mxu0 0
        %2815 = vmatpush2.bf16.msra.mxu0 0
        %2816 = vmatprep.subr.bf16.mxu0 0
        %2817 = vmatpush2.bf16.msra.mxu0 0
        %2818 = vmatprep.subr.bf16.mxu0 0
        %2819 = vmatpush2.bf16.msra.mxu0 0
        %2820 = vmatprep.subr.bf16.mxu0 0
        %2821 = vmatpush2.bf16.msra.mxu0 0
        %2822 = vmatprep.mubr.bf16.mxu0 0
        %2823 = vmatmul.mubr.bf16.gmra.mxu0 %v2555
        %v2824 = vpop.f32.mrf.mxu0
        %v2825 = vadd.f32 0.0, %v2824
        %v2826 = vpop.f32.mrf.mxu0
        %v2827 = vadd.f32 0.0, %v2826
        %v2828 = vpop.f32.mrf.mxu0
        %v2829 = vpop.f32.mrf.mxu0
        %2830 = vdwg.mxu0
        %v2831 = vadd.f32 %v2551, %v2784
        %v2832 = vadd.f32 %v2552, %v2786
        %v2833 = vadd.f32 %v2553, %v2825
        %v2834 = vadd.f32 %v2554, %v2827
        %s2835 = scalar_lea.vmem [#allocation15], 4
        %v2836 = vld [vmem:[%s2835] sm:$0xf]
        %v2838 = vlaneseq
        %v2839 = vshrl.u32 %v2838, 7
        %v2840 = vsub.s32 0, %v2839
        %v2841 = vrot.slane %v2836, %v2840
        %v2842 = vlaneseq
        %v2843 = vshrl.u32 %v2842, 7
        %v2844 = vsub.s32 1, %v2843
        %v2845 = vrot.slane %v2836, %v2844
        %v2846 = vlaneseq
        %v2847 = vshrl.u32 %v2846, 7
        %v2848 = vsub.s32 2, %v2847
        %v2849 = vrot.slane %v2836, %v2848
        %v2850 = vlaneseq
        %v2851 = vshrl.u32 %v2850, 7
        %v2852 = vsub.s32 3, %v2851
        %v2853 = vrot.slane %v2836, %v2852
        %v2858 = vadd.f32 %v2831, %v2841
        %v2859 = vadd.f32 %v2832, %v2845
        %v2860 = vadd.f32 %v2833, %v2849
        %v2861 = vadd.f32 %v2834, %v2853
        %v2862 = vxor.u32 %v2858, 2147483648
        %v2863 = vmul.f32 %v2862, 1.442695
        %v2864 = vpow.pop %v2863
        %v2865 = vadd.f32 %v2864, 1.0
        %v2866 = vrcp.pop %v2865
        %v2867 = vmul.f32 1.0, %v2866
        %v2868 = vxor.u32 %v2859, 2147483648
        %v2869 = vmul.f32 %v2868, 1.442695
        %v2870 = vpow.pop %v2869
        %v2871 = vadd.f32 %v2870, 1.0
        %v2872 = vrcp.pop %v2871
        %v2873 = vmul.f32 1.0, %v2872
        %v2874 = vtanh.pop %v2860
        %v2875 = vxor.u32 %v2861, 2147483648
        %v2876 = vmul.f32 %v2875, 1.442695
        %v2877 = vpow.pop %v2876
        %v2878 = vadd.f32 %v2877, 1.0
        %v2879 = vrcp.pop %v2878
        %v2880 = vmul.f32 1.0, %v2879
        %s2881 = scalar_lea.vmem [#allocation5], 8
        %v2882 = vld [vmem:[%s2881] sm:$0xff]
        %v2883 = vmul.f32 %v2873, %v2882
        %v2884 = vmul.f32 %v2867, %v2874
        %v2885 = vadd.f32 %v2883, %v2884
        %v2886 = vtanh.pop %v2885
        %v2887 = vmul.f32 %v2880, %v2886
        %2888 = vst [vmem:[%s2881] sm:$0xff] %v2885
        %2889 = vst [vmem:[%s2549] sm:$0xff] %v2887
        %v2890 = vstv %s517
        %vm2891 = vcmp.eq.s32.totalorder %v518, %v2890
        %v2892 = vld [vmem:[#allocation6] sm:$0xff]
        %v2893 = vsel %vm2891, 1, 0
        %2894 = vset.pattern.permute.xlu0 0
        %2895 = vperm.xlu0 %2894, %v2893
        %v2896 = vpop.permute.xlu0 %2895
        %vm2897 = vcmp.eq.s32.totalorder %v2896, 1
        %v2898 = vsel %vm2897, %v2887, %v2892
        %2899 = vst [vmem:[#allocation6] sm:$0xff] %v2898
        %v2900 = vld [vmem:[%s2549] sm:$0xff]
        %v2901 = vld [vmem:[%s1206] sm:$0xff]
        %v2902 = vld [vmem:[%s1206 + $0x8] sm:$0xff]
        %v2903 = vld [vmem:[%s1206 + $0x10] sm:$0xff]
        %v2904 = vld [vmem:[%s1206 + $0x18] sm:$0xff]
        %v2905 = vpack.c.bf16 %v2900, %v2900
        %v2906 = vld [vmem:[%s2556] sm:$0xff]
        %v2907 = vld [vmem:[%s2556 + $0x8] sm:$0xff]
        %v2908 = vld [vmem:[%s2556 + $0x10] sm:$0xff]
        %v2909 = vld [vmem:[%s2556 + $0x18] sm:$0xff]
        %v2910 = vld [vmem:[%s2556 + $0x20] sm:$0xff]
        %v2911 = vld [vmem:[%s2556 + $0x28] sm:$0xff]
        %v2912 = vld [vmem:[%s2556 + $0x30] sm:$0xff]
        %v2913 = vld [vmem:[%s2556 + $0x38] sm:$0xff]
        %v2914 = vld [vmem:[%s2556 + $0x40] sm:$0xff]
        %v2915 = vld [vmem:[%s2556 + $0x48] sm:$0xff]
        %v2916 = vld [vmem:[%s2556 + $0x50] sm:$0xff]
        %v2917 = vld [vmem:[%s2556 + $0x58] sm:$0xff]
        %v2918 = vld [vmem:[%s2556 + $0x60] sm:$0xff]
        %v2919 = vld [vmem:[%s2556 + $0x68] sm:$0xff]
        %v2920 = vld [vmem:[%s2556 + $0x70] sm:$0xff]
        %v2921 = vld [vmem:[%s2556 + $0x78] sm:$0xff]
        %v2922 = vld [vmem:[%s2556 + $0x80] sm:$0xff]
        %v2923 = vld [vmem:[%s2556 + $0x88] sm:$0xff]
        %v2924 = vld [vmem:[%s2556 + $0x90] sm:$0xff]
        %v2925 = vld [vmem:[%s2556 + $0x98] sm:$0xff]
        %v2926 = vld [vmem:[%s2556 + $0xa0] sm:$0xff]
        %v2927 = vld [vmem:[%s2556 + $0xa8] sm:$0xff]
        %v2928 = vld [vmem:[%s2556 + $0xb0] sm:$0xff]
        %v2929 = vld [vmem:[%s2556 + $0xb8] sm:$0xff]
        %v2930 = vld [vmem:[%s2556 + $0xc0] sm:$0xff]
        %v2931 = vld [vmem:[%s2556 + $0xc8] sm:$0xff]
        %v2932 = vld [vmem:[%s2556 + $0xd0] sm:$0xff]
        %v2933 = vld [vmem:[%s2556 + $0xd8] sm:$0xff]
        %v2934 = vld [vmem:[%s2556 + $0xe0] sm:$0xff]
        %v2935 = vld [vmem:[%s2556 + $0xe8] sm:$0xff]
        %v2936 = vld [vmem:[%s2556 + $0xf0] sm:$0xff]
        %v2937 = vld [vmem:[%s2556 + $0xf8] sm:$0xff]
        %v2970 = vunpack.c.l.b16 %v2906
        %v2971 = vunpack.c.h.b16 %v2906
        %v2972 = vunpack.c.l.b16 %v2907
        %v2973 = vunpack.c.h.b16 %v2907
        %v2974 = vunpack.c.l.b16 %v2908
        %v2975 = vunpack.c.h.b16 %v2908
        %v2976 = vunpack.c.l.b16 %v2909
        %v2977 = vunpack.c.h.b16 %v2909
        %v2978 = vunpack.c.l.b16 %v2910
        %v2979 = vunpack.c.h.b16 %v2910
        %v2980 = vunpack.c.l.b16 %v2911
        %v2981 = vunpack.c.h.b16 %v2911
        %v2982 = vunpack.c.l.b16 %v2912
        %v2983 = vunpack.c.h.b16 %v2912
        %v2984 = vunpack.c.l.b16 %v2913
        %v2985 = vunpack.c.h.b16 %v2913
        %v2986 = vunpack.c.l.b16 %v2914
        %v2987 = vunpack.c.h.b16 %v2914
        %v2988 = vunpack.c.l.b16 %v2915
        %v2989 = vunpack.c.h.b16 %v2915
        %v2990 = vunpack.c.l.b16 %v2916
        %v2991 = vunpack.c.h.b16 %v2916
        %v2992 = vunpack.c.l.b16 %v2917
        %v2993 = vunpack.c.h.b16 %v2917
        %v2994 = vunpack.c.l.b16 %v2918
        %v2995 = vunpack.c.h.b16 %v2918
        %v2996 = vunpack.c.l.b16 %v2919
        %v2997 = vunpack.c.h.b16 %v2919
        %v2998 = vunpack.c.l.b16 %v2920
        %v2999 = vunpack.c.h.b16 %v2920
        %v3000 = vunpack.c.l.b16 %v2921
        %v3001 = vunpack.c.h.b16 %v2921
        %v3002 = vunpack.c.l.b16 %v2922
        %v3003 = vunpack.c.h.b16 %v2922
        %v3004 = vunpack.c.l.b16 %v2923
        %v3005 = vunpack.c.h.b16 %v2923
        %v3006 = vunpack.c.l.b16 %v2924
        %v3007 = vunpack.c.h.b16 %v2924
        %v3008 = vunpack.c.l.b16 %v2925
        %v3009 = vunpack.c.h.b16 %v2925
        %v3010 = vunpack.c.l.b16 %v2926
        %v3011 = vunpack.c.h.b16 %v2926
        %v3012 = vunpack.c.l.b16 %v2927
        %v3013 = vunpack.c.h.b16 %v2927
        %v3014 = vunpack.c.l.b16 %v2928
        %v3015 = vunpack.c.h.b16 %v2928
        %v3016 = vunpack.c.l.b16 %v2929
        %v3017 = vunpack.c.h.b16 %v2929
        %v3018 = vunpack.c.l.b16 %v2930
        %v3019 = vunpack.c.h.b16 %v2930
        %v3020 = vunpack.c.l.b16 %v2931
        %v3021 = vunpack.c.h.b16 %v2931
        %v3022 = vunpack.c.l.b16 %v2932
        %v3023 = vunpack.c.h.b16 %v2932
        %v3024 = vunpack.c.l.b16 %v2933
        %v3025 = vunpack.c.h.b16 %v2933
        %v3026 = vunpack.c.l.b16 %v2934
        %v3027 = vunpack.c.h.b16 %v2934
        %v3028 = vunpack.c.l.b16 %v2935
        %v3029 = vunpack.c.h.b16 %v2935
        %v3030 = vunpack.c.l.b16 %v2936
        %v3031 = vunpack.c.h.b16 %v2936
        %v3032 = vunpack.c.l.b16 %v2937
        %v3033 = vunpack.c.h.b16 %v2937
        %v3034 = vpack.c.b16 %v2974, %v2970
        %v3035 = vpack.c.b16 %v2975, %v2971
        %v3036 = vpack.c.b16 %v2976, %v2972
        %v3037 = vpack.c.b16 %v2977, %v2973
        %v3038 = vpack.c.b16 %v2982, %v2978
        %v3039 = vpack.c.b16 %v2983, %v2979
        %v3040 = vpack.c.b16 %v2984, %v2980
        %v3041 = vpack.c.b16 %v2985, %v2981
        %v3042 = vpack.c.b16 %v2990, %v2986
        %v3043 = vpack.c.b16 %v2991, %v2987
        %v3044 = vpack.c.b16 %v2992, %v2988
        %v3045 = vpack.c.b16 %v2993, %v2989
        %v3046 = vpack.c.b16 %v2998, %v2994
        %v3047 = vpack.c.b16 %v2999, %v2995
        %v3048 = vpack.c.b16 %v3000, %v2996
        %v3049 = vpack.c.b16 %v3001, %v2997
        %v3050 = vpack.c.b16 %v3006, %v3002
        %v3051 = vpack.c.b16 %v3007, %v3003
        %v3052 = vpack.c.b16 %v3008, %v3004
        %v3053 = vpack.c.b16 %v3009, %v3005
        %v3054 = vpack.c.b16 %v3014, %v3010
        %v3055 = vpack.c.b16 %v3015, %v3011
        %v3056 = vpack.c.b16 %v3016, %v3012
        %v3057 = vpack.c.b16 %v3017, %v3013
        %v3058 = vpack.c.b16 %v3022, %v3018
        %v3059 = vpack.c.b16 %v3023, %v3019
        %v3060 = vpack.c.b16 %v3024, %v3020
        %v3061 = vpack.c.b16 %v3025, %v3021
        %v3062 = vpack.c.b16 %v3030, %v3026
        %v3063 = vpack.c.b16 %v3031, %v3027
        %v3064 = vpack.c.b16 %v3032, %v3028
        %v3065 = vpack.c.b16 %v3033, %v3029
        %3098 = vmatprep.subr.bf16.mxu0 %v3063
        %3099 = vmatpush1.bf16.msra.mxu0 %v3062
        %3100 = vmatprep.subr.bf16.mxu0 %v3059
        %3101 = vmatpush1.bf16.msra.mxu0 %v3058
        %3102 = vmatprep.subr.bf16.mxu0 %v3055
        %3103 = vmatpush1.bf16.msra.mxu0 %v3054
        %3104 = vmatprep.subr.bf16.mxu0 %v3051
        %3105 = vmatpush1.bf16.msra.mxu0 %v3050
        %3106 = vmatprep.subr.bf16.mxu0 %v3047
        %3107 = vmatpush1.bf16.msra.mxu0 %v3046
        %3108 = vmatprep.subr.bf16.mxu0 %v3043
        %3109 = vmatpush1.bf16.msra.mxu0 %v3042
        %3110 = vmatprep.subr.bf16.mxu0 %v3039
        %3111 = vmatpush1.bf16.msra.mxu0 %v3038
        %3112 = vmatprep.subr.bf16.mxu0 %v3035
        %3113 = vmatpush1.bf16.msra.mxu0 %v3034
        %3114 = vmatprep.subr.bf16.mxu0 0
        %3115 = vmatpush2.bf16.msra.mxu0 0
        %3116 = vmatprep.subr.bf16.mxu0 0
        %3117 = vmatpush2.bf16.msra.mxu0 0
        %3118 = vmatprep.subr.bf16.mxu0 0
        %3119 = vmatpush2.bf16.msra.mxu0 0
        %3120 = vmatprep.subr.bf16.mxu0 0
        %3121 = vmatpush2.bf16.msra.mxu0 0
        %3122 = vmatprep.subr.bf16.mxu0 0
        %3123 = vmatpush2.bf16.msra.mxu0 0
        %3124 = vmatprep.subr.bf16.mxu0 0
        %3125 = vmatpush2.bf16.msra.mxu0 0
        %3126 = vmatprep.subr.bf16.mxu0 0
        %3127 = vmatpush2.bf16.msra.mxu0 0
        %3128 = vmatprep.subr.bf16.mxu0 0
        %3129 = vmatpush2.bf16.msra.mxu0 0
        %3130 = vmatprep.mubr.bf16.mxu0 0
        %3131 = vmatmul.mubr.bf16.gmra.mxu0 %v2905
        %v3132 = vpop.f32.mrf.mxu0
        %v3133 = vadd.f32 0.0, %v3132
        %v3134 = vpop.f32.mrf.mxu0
        %v3135 = vadd.f32 0.0, %v3134
        %v3136 = vpop.f32.mrf.mxu0
        %v3137 = vpop.f32.mrf.mxu0
        %3138 = vdwg.mxu0
        %3139 = vmatprep.subr.bf16.mxu0 %v3065
        %3140 = vmatpush1.bf16.msra.mxu0 %v3064
        %3141 = vmatprep.subr.bf16.mxu0 %v3061
        %3142 = vmatpush1.bf16.msra.mxu0 %v3060
        %3143 = vmatprep.subr.bf16.mxu0 %v3057
        %3144 = vmatpush1.bf16.msra.mxu0 %v3056
        %3145 = vmatprep.subr.bf16.mxu0 %v3053
        %3146 = vmatpush1.bf16.msra.mxu0 %v3052
        %3147 = vmatprep.subr.bf16.mxu0 %v3049
        %3148 = vmatpush1.bf16.msra.mxu0 %v3048
        %3149 = vmatprep.subr.bf16.mxu0 %v3045
        %3150 = vmatpush1.bf16.msra.mxu0 %v3044
        %3151 = vmatprep.subr.bf16.mxu0 %v3041
        %3152 = vmatpush1.bf16.msra.mxu0 %v3040
        %3153 = vmatprep.subr.bf16.mxu0 %v3037
        %3154 = vmatpush1.bf16.msra.mxu0 %v3036
        %3155 = vmatprep.subr.bf16.mxu0 0
        %3156 = vmatpush2.bf16.msra.mxu0 0
        %3157 = vmatprep.subr.bf16.mxu0 0
        %3158 = vmatpush2.bf16.msra.mxu0 0
        %3159 = vmatprep.subr.bf16.mxu0 0
        %3160 = vmatpush2.bf16.msra.mxu0 0
        %3161 = vmatprep.subr.bf16.mxu0 0
        %3162 = vmatpush2.bf16.msra.mxu0 0
        %3163 = vmatprep.subr.bf16.mxu0 0
        %3164 = vmatpush2.bf16.msra.mxu0 0
        %3165 = vmatprep.subr.bf16.mxu0 0
        %3166 = vmatpush2.bf16.msra.mxu0 0
        %3167 = vmatprep.subr.bf16.mxu0 0
        %3168 = vmatpush2.bf16.msra.mxu0 0
        %3169 = vmatprep.subr.bf16.mxu0 0
        %3170 = vmatpush2.bf16.msra.mxu0 0
        %3171 = vmatprep.mubr.bf16.mxu0 0
        %3172 = vmatmul.mubr.bf16.gmra.mxu0 %v2905
        %v3173 = vpop.f32.mrf.mxu0
        %v3174 = vadd.f32 0.0, %v3173
        %v3175 = vpop.f32.mrf.mxu0
        %v3176 = vadd.f32 0.0, %v3175
        %v3177 = vpop.f32.mrf.mxu0
        %v3178 = vpop.f32.mrf.mxu0
        %3179 = vdwg.mxu0
        %v3180 = vadd.f32 %v2901, %v3133
        %v3181 = vadd.f32 %v2902, %v3135
        %v3182 = vadd.f32 %v2903, %v3174
        %v3183 = vadd.f32 %v2904, %v3176
        %v3184 = vld [vmem:[%s2835] sm:$0xf]
        %v3186 = vlaneseq
        %v3187 = vshrl.u32 %v3186, 7
        %v3188 = vsub.s32 0, %v3187
        %v3189 = vrot.slane %v3184, %v3188
        %v3190 = vlaneseq
        %v3191 = vshrl.u32 %v3190, 7
        %v3192 = vsub.s32 1, %v3191
        %v3193 = vrot.slane %v3184, %v3192
        %v3194 = vlaneseq
        %v3195 = vshrl.u32 %v3194, 7
        %v3196 = vsub.s32 2, %v3195
        %v3197 = vrot.slane %v3184, %v3196
        %v3198 = vlaneseq
        %v3199 = vshrl.u32 %v3198, 7
        %v3200 = vsub.s32 3, %v3199
        %v3201 = vrot.slane %v3184, %v3200
        %v3206 = vadd.f32 %v3180, %v3189
        %v3207 = vadd.f32 %v3181, %v3193
        %v3208 = vadd.f32 %v3182, %v3197
        %v3209 = vadd.f32 %v3183, %v3201
        %v3210 = vxor.u32 %v3206, 2147483648
        %v3211 = vmul.f32 %v3210, 1.442695
        %v3212 = vpow.pop %v3211
        %v3213 = vadd.f32 %v3212, 1.0
        %v3214 = vrcp.pop %v3213
        %v3215 = vmul.f32 1.0, %v3214
        %v3216 = vxor.u32 %v3207, 2147483648
        %v3217 = vmul.f32 %v3216, 1.442695
        %v3218 = vpow.pop %v3217
        %v3219 = vadd.f32 %v3218, 1.0
        %v3220 = vrcp.pop %v3219
        %v3221 = vmul.f32 1.0, %v3220
        %v3222 = vtanh.pop %v3208
        %v3223 = vxor.u32 %v3209, 2147483648
        %v3224 = vmul.f32 %v3223, 1.442695
        %v3225 = vpow.pop %v3224
        %v3226 = vadd.f32 %v3225, 1.0
        %v3227 = vrcp.pop %v3226
        %v3228 = vmul.f32 1.0, %v3227
        %v3229 = vld [vmem:[%s2881] sm:$0xff]
        %v3230 = vmul.f32 %v3221, %v3229
        %v3231 = vmul.f32 %v3215, %v3222
        %v3232 = vadd.f32 %v3230, %v3231
        %v3233 = vtanh.pop %v3232
        %v3234 = vmul.f32 %v3228, %v3233
        %3235 = vst [vmem:[%s2881] sm:$0xff] %v3232
        %3236 = vst [vmem:[%s2549] sm:$0xff] %v3234
        %s3237 = sadd.s32 %s517, 1
        %v3238 = vstv %s3237
        %vm3239 = vcmp.eq.s32.totalorder %v518, %v3238
        %v3240 = vld [vmem:[#allocation6] sm:$0xff]
        %v3241 = vsel %vm3239, 1, 0
        %3242 = vset.pattern.permute.xlu0 0
        %3243 = vperm.xlu0 %3242, %v3241
        %v3244 = vpop.permute.xlu0 %3243
        %vm3245 = vcmp.eq.s32.totalorder %v3244, 1
        %v3246 = vsel %vm3245, %v3234, %v3240
        %3247 = vst [vmem:[#allocation6] sm:$0xff] %v3246
        %v3248 = vld [vmem:[%s2549] sm:$0xff]
        %v3249 = vld [vmem:[%s1548] sm:$0xff]
        %v3250 = vld [vmem:[%s1548 + $0x8] sm:$0xff]
        %v3251 = vld [vmem:[%s1548 + $0x10] sm:$0xff]
        %v3252 = vld [vmem:[%s1548 + $0x18] sm:$0xff]
        %v3253 = vpack.c.bf16 %v3248, %v3248
        %v3254 = vld [vmem:[%s2556] sm:$0xff]
        %v3255 = vld [vmem:[%s2556 + $0x8] sm:$0xff]
        %v3256 = vld [vmem:[%s2556 + $0x10] sm:$0xff]
        %v3257 = vld [vmem:[%s2556 + $0x18] sm:$0xff]
        %v3258 = vld [vmem:[%s2556 + $0x20] sm:$0xff]
        %v3259 = vld [vmem:[%s2556 + $0x28] sm:$0xff]
        %v3260 = vld [vmem:[%s2556 + $0x30] sm:$0xff]
        %v3261 = vld [vmem:[%s2556 + $0x38] sm:$0xff]
        %v3262 = vld [vmem:[%s2556 + $0x40] sm:$0xff]
        %v3263 = vld [vmem:[%s2556 + $0x48] sm:$0xff]
        %v3264 = vld [vmem:[%s2556 + $0x50] sm:$0xff]
        %v3265 = vld [vmem:[%s2556 + $0x58] sm:$0xff]
        %v3266 = vld [vmem:[%s2556 + $0x60] sm:$0xff]
        %v3267 = vld [vmem:[%s2556 + $0x68] sm:$0xff]
        %v3268 = vld [vmem:[%s2556 + $0x70] sm:$0xff]
        %v3269 = vld [vmem:[%s2556 + $0x78] sm:$0xff]
        %v3270 = vld [vmem:[%s2556 + $0x80] sm:$0xff]
        %v3271 = vld [vmem:[%s2556 + $0x88] sm:$0xff]
        %v3272 = vld [vmem:[%s2556 + $0x90] sm:$0xff]
        %v3273 = vld [vmem:[%s2556 + $0x98] sm:$0xff]
        %v3274 = vld [vmem:[%s2556 + $0xa0] sm:$0xff]
        %v3275 = vld [vmem:[%s2556 + $0xa8] sm:$0xff]
        %v3276 = vld [vmem:[%s2556 + $0xb0] sm:$0xff]
        %v3277 = vld [vmem:[%s2556 + $0xb8] sm:$0xff]
        %v3278 = vld [vmem:[%s2556 + $0xc0] sm:$0xff]
        %v3279 = vld [vmem:[%s2556 + $0xc8] sm:$0xff]
        %v3280 = vld [vmem:[%s2556 + $0xd0] sm:$0xff]
        %v3281 = vld [vmem:[%s2556 + $0xd8] sm:$0xff]
        %v3282 = vld [vmem:[%s2556 + $0xe0] sm:$0xff]
        %v3283 = vld [vmem:[%s2556 + $0xe8] sm:$0xff]
        %v3284 = vld [vmem:[%s2556 + $0xf0] sm:$0xff]
        %v3285 = vld [vmem:[%s2556 + $0xf8] sm:$0xff]
        %v3318 = vunpack.c.l.b16 %v3254
        %v3319 = vunpack.c.h.b16 %v3254
        %v3320 = vunpack.c.l.b16 %v3255
        %v3321 = vunpack.c.h.b16 %v3255
        %v3322 = vunpack.c.l.b16 %v3256
        %v3323 = vunpack.c.h.b16 %v3256
        %v3324 = vunpack.c.l.b16 %v3257
        %v3325 = vunpack.c.h.b16 %v3257
        %v3326 = vunpack.c.l.b16 %v3258
        %v3327 = vunpack.c.h.b16 %v3258
        %v3328 = vunpack.c.l.b16 %v3259
        %v3329 = vunpack.c.h.b16 %v3259
        %v3330 = vunpack.c.l.b16 %v3260
        %v3331 = vunpack.c.h.b16 %v3260
        %v3332 = vunpack.c.l.b16 %v3261
        %v3333 = vunpack.c.h.b16 %v3261
        %v3334 = vunpack.c.l.b16 %v3262
        %v3335 = vunpack.c.h.b16 %v3262
        %v3336 = vunpack.c.l.b16 %v3263
        %v3337 = vunpack.c.h.b16 %v3263
        %v3338 = vunpack.c.l.b16 %v3264
        %v3339 = vunpack.c.h.b16 %v3264
        %v3340 = vunpack.c.l.b16 %v3265
        %v3341 = vunpack.c.h.b16 %v3265
        %v3342 = vunpack.c.l.b16 %v3266
        %v3343 = vunpack.c.h.b16 %v3266
        %v3344 = vunpack.c.l.b16 %v3267
        %v3345 = vunpack.c.h.b16 %v3267
        %v3346 = vunpack.c.l.b16 %v3268
        %v3347 = vunpack.c.h.b16 %v3268
        %v3348 = vunpack.c.l.b16 %v3269
        %v3349 = vunpack.c.h.b16 %v3269
        %v3350 = vunpack.c.l.b16 %v3270
        %v3351 = vunpack.c.h.b16 %v3270
        %v3352 = vunpack.c.l.b16 %v3271
        %v3353 = vunpack.c.h.b16 %v3271
        %v3354 = vunpack.c.l.b16 %v3272
        %v3355 = vunpack.c.h.b16 %v3272
        %v3356 = vunpack.c.l.b16 %v3273
        %v3357 = vunpack.c.h.b16 %v3273
        %v3358 = vunpack.c.l.b16 %v3274
        %v3359 = vunpack.c.h.b16 %v3274
        %v3360 = vunpack.c.l.b16 %v3275
        %v3361 = vunpack.c.h.b16 %v3275
        %v3362 = vunpack.c.l.b16 %v3276
        %v3363 = vunpack.c.h.b16 %v3276
        %v3364 = vunpack.c.l.b16 %v3277
        %v3365 = vunpack.c.h.b16 %v3277
        %v3366 = vunpack.c.l.b16 %v3278
        %v3367 = vunpack.c.h.b16 %v3278
        %v3368 = vunpack.c.l.b16 %v3279
        %v3369 = vunpack.c.h.b16 %v3279
        %v3370 = vunpack.c.l.b16 %v3280
        %v3371 = vunpack.c.h.b16 %v3280
        %v3372 = vunpack.c.l.b16 %v3281
        %v3373 = vunpack.c.h.b16 %v3281
        %v3374 = vunpack.c.l.b16 %v3282
        %v3375 = vunpack.c.h.b16 %v3282
        %v3376 = vunpack.c.l.b16 %v3283
        %v3377 = vunpack.c.h.b16 %v3283
        %v3378 = vunpack.c.l.b16 %v3284
        %v3379 = vunpack.c.h.b16 %v3284
        %v3380 = vunpack.c.l.b16 %v3285
        %v3381 = vunpack.c.h.b16 %v3285
        %v3382 = vpack.c.b16 %v3322, %v3318
        %v3383 = vpack.c.b16 %v3323, %v3319
        %v3384 = vpack.c.b16 %v3324, %v3320
        %v3385 = vpack.c.b16 %v3325, %v3321
        %v3386 = vpack.c.b16 %v3330, %v3326
        %v3387 = vpack.c.b16 %v3331, %v3327
        %v3388 = vpack.c.b16 %v3332, %v3328
        %v3389 = vpack.c.b16 %v3333, %v3329
        %v3390 = vpack.c.b16 %v3338, %v3334
        %v3391 = vpack.c.b16 %v3339, %v3335
        %v3392 = vpack.c.b16 %v3340, %v3336
        %v3393 = vpack.c.b16 %v3341, %v3337
        %v3394 = vpack.c.b16 %v3346, %v3342
        %v3395 = vpack.c.b16 %v3347, %v3343
        %v3396 = vpack.c.b16 %v3348, %v3344
        %v3397 = vpack.c.b16 %v3349, %v3345
        %v3398 = vpack.c.b16 %v3354, %v3350
        %v3399 = vpack.c.b16 %v3355, %v3351
        %v3400 = vpack.c.b16 %v3356, %v3352
        %v3401 = vpack.c.b16 %v3357, %v3353
        %v3402 = vpack.c.b16 %v3362, %v3358
        %v3403 = vpack.c.b16 %v3363, %v3359
        %v3404 = vpack.c.b16 %v3364, %v3360
        %v3405 = vpack.c.b16 %v3365, %v3361
        %v3406 = vpack.c.b16 %v3370, %v3366
        %v3407 = vpack.c.b16 %v3371, %v3367
        %v3408 = vpack.c.b16 %v3372, %v3368
        %v3409 = vpack.c.b16 %v3373, %v3369
        %v3410 = vpack.c.b16 %v3378, %v3374
        %v3411 = vpack.c.b16 %v3379, %v3375
        %v3412 = vpack.c.b16 %v3380, %v3376
        %v3413 = vpack.c.b16 %v3381, %v3377
        %3446 = vmatprep.subr.bf16.mxu0 %v3411
        %3447 = vmatpush1.bf16.msra.mxu0 %v3410
        %3448 = vmatprep.subr.bf16.mxu0 %v3407
        %3449 = vmatpush1.bf16.msra.mxu0 %v3406
        %3450 = vmatprep.subr.bf16.mxu0 %v3403
        %3451 = vmatpush1.bf16.msra.mxu0 %v3402
        %3452 = vmatprep.subr.bf16.mxu0 %v3399
        %3453 = vmatpush1.bf16.msra.mxu0 %v3398
        %3454 = vmatprep.subr.bf16.mxu0 %v3395
        %3455 = vmatpush1.bf16.msra.mxu0 %v3394
        %3456 = vmatprep.subr.bf16.mxu0 %v3391
        %3457 = vmatpush1.bf16.msra.mxu0 %v3390
        %3458 = vmatprep.subr.bf16.mxu0 %v3387
        %3459 = vmatpush1.bf16.msra.mxu0 %v3386
        %3460 = vmatprep.subr.bf16.mxu0 %v3383
        %3461 = vmatpush1.bf16.msra.mxu0 %v3382
        %3462 = vmatprep.subr.bf16.mxu0 0
        %3463 = vmatpush2.bf16.msra.mxu0 0
        %3464 = vmatprep.subr.bf16.mxu0 0
        %3465 = vmatpush2.bf16.msra.mxu0 0
        %3466 = vmatprep.subr.bf16.mxu0 0
        %3467 = vmatpush2.bf16.msra.mxu0 0
        %3468 = vmatprep.subr.bf16.mxu0 0
        %3469 = vmatpush2.bf16.msra.mxu0 0
        %3470 = vmatprep.subr.bf16.mxu0 0
        %3471 = vmatpush2.bf16.msra.mxu0 0
        %3472 = vmatprep.subr.bf16.mxu0 0
        %3473 = vmatpush2.bf16.msra.mxu0 0
        %3474 = vmatprep.subr.bf16.mxu0 0
        %3475 = vmatpush2.bf16.msra.mxu0 0
        %3476 = vmatprep.subr.bf16.mxu0 0
        %3477 = vmatpush2.bf16.msra.mxu0 0
        %3478 = vmatprep.mubr.bf16.mxu0 0
        %3479 = vmatmul.mubr.bf16.gmra.mxu0 %v3253
        %v3480 = vpop.f32.mrf.mxu0
        %v3481 = vadd.f32 0.0, %v3480
        %v3482 = vpop.f32.mrf.mxu0
        %v3483 = vadd.f32 0.0, %v3482
        %v3484 = vpop.f32.mrf.mxu0
        %v3485 = vpop.f32.mrf.mxu0
        %3486 = vdwg.mxu0
        %3487 = vmatprep.subr.bf16.mxu0 %v3413
        %3488 = vmatpush1.bf16.msra.mxu0 %v3412
        %3489 = vmatprep.subr.bf16.mxu0 %v3409
        %3490 = vmatpush1.bf16.msra.mxu0 %v3408
        %3491 = vmatprep.subr.bf16.mxu0 %v3405
        %3492 = vmatpush1.bf16.msra.mxu0 %v3404
        %3493 = vmatprep.subr.bf16.mxu0 %v3401
        %3494 = vmatpush1.bf16.msra.mxu0 %v3400
        %3495 = vmatprep.subr.bf16.mxu0 %v3397
        %3496 = vmatpush1.bf16.msra.mxu0 %v3396
        %3497 = vmatprep.subr.bf16.mxu0 %v3393
        %3498 = vmatpush1.bf16.msra.mxu0 %v3392
        %3499 = vmatprep.subr.bf16.mxu0 %v3389
        %3500 = vmatpush1.bf16.msra.mxu0 %v3388
        %3501 = vmatprep.subr.bf16.mxu0 %v3385
        %3502 = vmatpush1.bf16.msra.mxu0 %v3384
        %3503 = vmatprep.subr.bf16.mxu0 0
        %3504 = vmatpush2.bf16.msra.mxu0 0
        %3505 = vmatprep.subr.bf16.mxu0 0
        %3506 = vmatpush2.bf16.msra.mxu0 0
        %3507 = vmatprep.subr.bf16.mxu0 0
        %3508 = vmatpush2.bf16.msra.mxu0 0
        %3509 = vmatprep.subr.bf16.mxu0 0
        %3510 = vmatpush2.bf16.msra.mxu0 0
        %3511 = vmatprep.subr.bf16.mxu0 0
        %3512 = vmatpush2.bf16.msra.mxu0 0
        %3513 = vmatprep.subr.bf16.mxu0 0
        %3514 = vmatpush2.bf16.msra.mxu0 0
        %3515 = vmatprep.subr.bf16.mxu0 0
        %3516 = vmatpush2.bf16.msra.mxu0 0
        %3517 = vmatprep.subr.bf16.mxu0 0
        %3518 = vmatpush2.bf16.msra.mxu0 0
        %3519 = vmatprep.mubr.bf16.mxu0 0
        %3520 = vmatmul.mubr.bf16.gmra.mxu0 %v3253
        %v3521 = vpop.f32.mrf.mxu0
        %v3522 = vadd.f32 0.0, %v3521
        %v3523 = vpop.f32.mrf.mxu0
        %v3524 = vadd.f32 0.0, %v3523
        %v3525 = vpop.f32.mrf.mxu0
        %v3526 = vpop.f32.mrf.mxu0
        %3527 = vdwg.mxu0
        %v3528 = vadd.f32 %v3249, %v3481
        %v3529 = vadd.f32 %v3250, %v3483
        %v3530 = vadd.f32 %v3251, %v3522
        %v3531 = vadd.f32 %v3252, %v3524
        %v3532 = vld [vmem:[%s2835] sm:$0xf]
        %v3534 = vlaneseq
        %v3535 = vshrl.u32 %v3534, 7
        %v3536 = vsub.s32 0, %v3535
        %v3537 = vrot.slane %v3532, %v3536
        %v3538 = vlaneseq
        %v3539 = vshrl.u32 %v3538, 7
        %v3540 = vsub.s32 1, %v3539
        %v3541 = vrot.slane %v3532, %v3540
        %v3542 = vlaneseq
        %v3543 = vshrl.u32 %v3542, 7
        %v3544 = vsub.s32 2, %v3543
        %v3545 = vrot.slane %v3532, %v3544
        %v3546 = vlaneseq
        %v3547 = vshrl.u32 %v3546, 7
        %v3548 = vsub.s32 3, %v3547
        %v3549 = vrot.slane %v3532, %v3548
        %v3554 = vadd.f32 %v3528, %v3537
        %v3555 = vadd.f32 %v3529, %v3541
        %v3556 = vadd.f32 %v3530, %v3545
        %v3557 = vadd.f32 %v3531, %v3549
        %v3558 = vxor.u32 %v3554, 2147483648
        %v3559 = vmul.f32 %v3558, 1.442695
        %v3560 = vpow.pop %v3559
        %v3561 = vadd.f32 %v3560, 1.0
        %v3562 = vrcp.pop %v3561
        %v3563 = vmul.f32 1.0, %v3562
        %v3564 = vxor.u32 %v3555, 2147483648
        %v3565 = vmul.f32 %v3564, 1.442695
        %v3566 = vpow.pop %v3565
        %v3567 = vadd.f32 %v3566, 1.0
        %v3568 = vrcp.pop %v3567
        %v3569 = vmul.f32 1.0, %v3568
        %v3570 = vtanh.pop %v3556
        %v3571 = vxor.u32 %v3557, 2147483648
        %v3572 = vmul.f32 %v3571, 1.442695
        %v3573 = vpow.pop %v3572
        %v3574 = vadd.f32 %v3573, 1.0
        %v3575 = vrcp.pop %v3574
        %v3576 = vmul.f32 1.0, %v3575
        %v3577 = vld [vmem:[%s2881] sm:$0xff]
        %v3578 = vmul.f32 %v3569, %v3577
        %v3579 = vmul.f32 %v3563, %v3570
        %v3580 = vadd.f32 %v3578, %v3579
        %v3581 = vtanh.pop %v3580
        %v3582 = vmul.f32 %v3576, %v3581
        %3583 = vst [vmem:[%s2881] sm:$0xff] %v3580
        %3584 = vst [vmem:[%s2549] sm:$0xff] %v3582
        %s3585 = sadd.s32 %s517, 2
        %v3586 = vstv %s3585
        %vm3587 = vcmp.eq.s32.totalorder %v518, %v3586
        %v3588 = vld [vmem:[#allocation6] sm:$0xff]
        %v3589 = vsel %vm3587, 1, 0
        %3590 = vset.pattern.permute.xlu0 0
        %3591 = vperm.xlu0 %3590, %v3589
        %v3592 = vpop.permute.xlu0 %3591
        %vm3593 = vcmp.eq.s32.totalorder %v3592, 1
        %v3594 = vsel %vm3593, %v3582, %v3588
        %3595 = vst [vmem:[#allocation6] sm:$0xff] %v3594
        %v3596 = vld [vmem:[%s2549] sm:$0xff]
        %v3597 = vld [vmem:[%s1890] sm:$0xff]
        %v3598 = vld [vmem:[%s1890 + $0x8] sm:$0xff]
        %v3599 = vld [vmem:[%s1890 + $0x10] sm:$0xff]
        %v3600 = vld [vmem:[%s1890 + $0x18] sm:$0xff]
        %v3601 = vpack.c.bf16 %v3596, %v3596
        %v3602 = vld [vmem:[%s2556] sm:$0xff]
        %v3603 = vld [vmem:[%s2556 + $0x8] sm:$0xff]
        %v3604 = vld [vmem:[%s2556 + $0x10] sm:$0xff]
        %v3605 = vld [vmem:[%s2556 + $0x18] sm:$0xff]
        %v3606 = vld [vmem:[%s2556 + $0x20] sm:$0xff]
        %v3607 = vld [vmem:[%s2556 + $0x28] sm:$0xff]
        %v3608 = vld [vmem:[%s2556 + $0x30] sm:$0xff]
        %v3609 = vld [vmem:[%s2556 + $0x38] sm:$0xff]
        %v3610 = vld [vmem:[%s2556 + $0x40] sm:$0xff]
        %v3611 = vld [vmem:[%s2556 + $0x48] sm:$0xff]
        %v3612 = vld [vmem:[%s2556 + $0x50] sm:$0xff]
        %v3613 = vld [vmem:[%s2556 + $0x58] sm:$0xff]
        %v3614 = vld [vmem:[%s2556 + $0x60] sm:$0xff]
        %v3615 = vld [vmem:[%s2556 + $0x68] sm:$0xff]
        %v3616 = vld [vmem:[%s2556 + $0x70] sm:$0xff]
        %v3617 = vld [vmem:[%s2556 + $0x78] sm:$0xff]
        %v3618 = vld [vmem:[%s2556 + $0x80] sm:$0xff]
        %v3619 = vld [vmem:[%s2556 + $0x88] sm:$0xff]
        %v3620 = vld [vmem:[%s2556 + $0x90] sm:$0xff]
        %v3621 = vld [vmem:[%s2556 + $0x98] sm:$0xff]
        %v3622 = vld [vmem:[%s2556 + $0xa0] sm:$0xff]
        %v3623 = vld [vmem:[%s2556 + $0xa8] sm:$0xff]
        %v3624 = vld [vmem:[%s2556 + $0xb0] sm:$0xff]
        %v3625 = vld [vmem:[%s2556 + $0xb8] sm:$0xff]
        %v3626 = vld [vmem:[%s2556 + $0xc0] sm:$0xff]
        %v3627 = vld [vmem:[%s2556 + $0xc8] sm:$0xff]
        %v3628 = vld [vmem:[%s2556 + $0xd0] sm:$0xff]
        %v3629 = vld [vmem:[%s2556 + $0xd8] sm:$0xff]
        %v3630 = vld [vmem:[%s2556 + $0xe0] sm:$0xff]
        %v3631 = vld [vmem:[%s2556 + $0xe8] sm:$0xff]
        %v3632 = vld [vmem:[%s2556 + $0xf0] sm:$0xff]
        %v3633 = vld [vmem:[%s2556 + $0xf8] sm:$0xff]
        %v3666 = vunpack.c.l.b16 %v3602
        %v3667 = vunpack.c.h.b16 %v3602
        %v3668 = vunpack.c.l.b16 %v3603
        %v3669 = vunpack.c.h.b16 %v3603
        %v3670 = vunpack.c.l.b16 %v3604
        %v3671 = vunpack.c.h.b16 %v3604
        %v3672 = vunpack.c.l.b16 %v3605
        %v3673 = vunpack.c.h.b16 %v3605
        %v3674 = vunpack.c.l.b16 %v3606
        %v3675 = vunpack.c.h.b16 %v3606
        %v3676 = vunpack.c.l.b16 %v3607
        %v3677 = vunpack.c.h.b16 %v3607
        %v3678 = vunpack.c.l.b16 %v3608
        %v3679 = vunpack.c.h.b16 %v3608
        %v3680 = vunpack.c.l.b16 %v3609
        %v3681 = vunpack.c.h.b16 %v3609
        %v3682 = vunpack.c.l.b16 %v3610
        %v3683 = vunpack.c.h.b16 %v3610
        %v3684 = vunpack.c.l.b16 %v3611
        %v3685 = vunpack.c.h.b16 %v3611
        %v3686 = vunpack.c.l.b16 %v3612
        %v3687 = vunpack.c.h.b16 %v3612
        %v3688 = vunpack.c.l.b16 %v3613
        %v3689 = vunpack.c.h.b16 %v3613
        %v3690 = vunpack.c.l.b16 %v3614
        %v3691 = vunpack.c.h.b16 %v3614
        %v3692 = vunpack.c.l.b16 %v3615
        %v3693 = vunpack.c.h.b16 %v3615
        %v3694 = vunpack.c.l.b16 %v3616
        %v3695 = vunpack.c.h.b16 %v3616
        %v3696 = vunpack.c.l.b16 %v3617
        %v3697 = vunpack.c.h.b16 %v3617
        %v3698 = vunpack.c.l.b16 %v3618
        %v3699 = vunpack.c.h.b16 %v3618
        %v3700 = vunpack.c.l.b16 %v3619
        %v3701 = vunpack.c.h.b16 %v3619
        %v3702 = vunpack.c.l.b16 %v3620
        %v3703 = vunpack.c.h.b16 %v3620
        %v3704 = vunpack.c.l.b16 %v3621
        %v3705 = vunpack.c.h.b16 %v3621
        %v3706 = vunpack.c.l.b16 %v3622
        %v3707 = vunpack.c.h.b16 %v3622
        %v3708 = vunpack.c.l.b16 %v3623
        %v3709 = vunpack.c.h.b16 %v3623
        %v3710 = vunpack.c.l.b16 %v3624
        %v3711 = vunpack.c.h.b16 %v3624
        %v3712 = vunpack.c.l.b16 %v3625
        %v3713 = vunpack.c.h.b16 %v3625
        %v3714 = vunpack.c.l.b16 %v3626
        %v3715 = vunpack.c.h.b16 %v3626
        %v3716 = vunpack.c.l.b16 %v3627
        %v3717 = vunpack.c.h.b16 %v3627
        %v3718 = vunpack.c.l.b16 %v3628
        %v3719 = vunpack.c.h.b16 %v3628
        %v3720 = vunpack.c.l.b16 %v3629
        %v3721 = vunpack.c.h.b16 %v3629
        %v3722 = vunpack.c.l.b16 %v3630
        %v3723 = vunpack.c.h.b16 %v3630
        %v3724 = vunpack.c.l.b16 %v3631
        %v3725 = vunpack.c.h.b16 %v3631
        %v3726 = vunpack.c.l.b16 %v3632
        %v3727 = vunpack.c.h.b16 %v3632
        %v3728 = vunpack.c.l.b16 %v3633
        %v3729 = vunpack.c.h.b16 %v3633
        %v3730 = vpack.c.b16 %v3670, %v3666
        %v3731 = vpack.c.b16 %v3671, %v3667
        %v3732 = vpack.c.b16 %v3672, %v3668
        %v3733 = vpack.c.b16 %v3673, %v3669
        %v3734 = vpack.c.b16 %v3678, %v3674
        %v3735 = vpack.c.b16 %v3679, %v3675
        %v3736 = vpack.c.b16 %v3680, %v3676
        %v3737 = vpack.c.b16 %v3681, %v3677
        %v3738 = vpack.c.b16 %v3686, %v3682
        %v3739 = vpack.c.b16 %v3687, %v3683
        %v3740 = vpack.c.b16 %v3688, %v3684
        %v3741 = vpack.c.b16 %v3689, %v3685
        %v3742 = vpack.c.b16 %v3694, %v3690
        %v3743 = vpack.c.b16 %v3695, %v3691
        %v3744 = vpack.c.b16 %v3696, %v3692
        %v3745 = vpack.c.b16 %v3697, %v3693
        %v3746 = vpack.c.b16 %v3702, %v3698
        %v3747 = vpack.c.b16 %v3703, %v3699
        %v3748 = vpack.c.b16 %v3704, %v3700
        %v3749 = vpack.c.b16 %v3705, %v3701
        %v3750 = vpack.c.b16 %v3710, %v3706
        %v3751 = vpack.c.b16 %v3711, %v3707
        %v3752 = vpack.c.b16 %v3712, %v3708
        %v3753 = vpack.c.b16 %v3713, %v3709
        %v3754 = vpack.c.b16 %v3718, %v3714
        %v3755 = vpack.c.b16 %v3719, %v3715
        %v3756 = vpack.c.b16 %v3720, %v3716
        %v3757 = vpack.c.b16 %v3721, %v3717
        %v3758 = vpack.c.b16 %v3726, %v3722
        %v3759 = vpack.c.b16 %v3727, %v3723
        %v3760 = vpack.c.b16 %v3728, %v3724
        %v3761 = vpack.c.b16 %v3729, %v3725
        %3794 = vmatprep.subr.bf16.mxu0 %v3759
        %3795 = vmatpush1.bf16.msra.mxu0 %v3758
        %3796 = vmatprep.subr.bf16.mxu0 %v3755
        %3797 = vmatpush1.bf16.msra.mxu0 %v3754
        %3798 = vmatprep.subr.bf16.mxu0 %v3751
        %3799 = vmatpush1.bf16.msra.mxu0 %v3750
        %3800 = vmatprep.subr.bf16.mxu0 %v3747
        %3801 = vmatpush1.bf16.msra.mxu0 %v3746
        %3802 = vmatprep.subr.bf16.mxu0 %v3743
        %3803 = vmatpush1.bf16.msra.mxu0 %v3742
        %3804 = vmatprep.subr.bf16.mxu0 %v3739
        %3805 = vmatpush1.bf16.msra.mxu0 %v3738
        %3806 = vmatprep.subr.bf16.mxu0 %v3735
        %3807 = vmatpush1.bf16.msra.mxu0 %v3734
        %3808 = vmatprep.subr.bf16.mxu0 %v3731
        %3809 = vmatpush1.bf16.msra.mxu0 %v3730
        %3810 = vmatprep.subr.bf16.mxu0 0
        %3811 = vmatpush2.bf16.msra.mxu0 0
        %3812 = vmatprep.subr.bf16.mxu0 0
        %3813 = vmatpush2.bf16.msra.mxu0 0
        %3814 = vmatprep.subr.bf16.mxu0 0
        %3815 = vmatpush2.bf16.msra.mxu0 0
        %3816 = vmatprep.subr.bf16.mxu0 0
        %3817 = vmatpush2.bf16.msra.mxu0 0
        %3818 = vmatprep.subr.bf16.mxu0 0
        %3819 = vmatpush2.bf16.msra.mxu0 0
        %3820 = vmatprep.subr.bf16.mxu0 0
        %3821 = vmatpush2.bf16.msra.mxu0 0
        %3822 = vmatprep.subr.bf16.mxu0 0
        %3823 = vmatpush2.bf16.msra.mxu0 0
        %3824 = vmatprep.subr.bf16.mxu0 0
        %3825 = vmatpush2.bf16.msra.mxu0 0
        %3826 = vmatprep.mubr.bf16.mxu0 0
        %3827 = vmatmul.mubr.bf16.gmra.mxu0 %v3601
        %v3828 = vpop.f32.mrf.mxu0
        %v3829 = vadd.f32 0.0, %v3828
        %v3830 = vpop.f32.mrf.mxu0
        %v3831 = vadd.f32 0.0, %v3830
        %v3832 = vpop.f32.mrf.mxu0
        %v3833 = vpop.f32.mrf.mxu0
        %3834 = vdwg.mxu0
        %3835 = vmatprep.subr.bf16.mxu0 %v3761
        %3836 = vmatpush1.bf16.msra.mxu0 %v3760
        %3837 = vmatprep.subr.bf16.mxu0 %v3757
        %3838 = vmatpush1.bf16.msra.mxu0 %v3756
        %3839 = vmatprep.subr.bf16.mxu0 %v3753
        %3840 = vmatpush1.bf16.msra.mxu0 %v3752
        %3841 = vmatprep.subr.bf16.mxu0 %v3749
        %3842 = vmatpush1.bf16.msra.mxu0 %v3748
        %3843 = vmatprep.subr.bf16.mxu0 %v3745
        %3844 = vmatpush1.bf16.msra.mxu0 %v3744
        %3845 = vmatprep.subr.bf16.mxu0 %v3741
        %3846 = vmatpush1.bf16.msra.mxu0 %v3740
        %3847 = vmatprep.subr.bf16.mxu0 %v3737
        %3848 = vmatpush1.bf16.msra.mxu0 %v3736
        %3849 = vmatprep.subr.bf16.mxu0 %v3733
        %3850 = vmatpush1.bf16.msra.mxu0 %v3732
        %3851 = vmatprep.subr.bf16.mxu0 0
        %3852 = vmatpush2.bf16.msra.mxu0 0
        %3853 = vmatprep.subr.bf16.mxu0 0
        %3854 = vmatpush2.bf16.msra.mxu0 0
        %3855 = vmatprep.subr.bf16.mxu0 0
        %3856 = vmatpush2.bf16.msra.mxu0 0
        %3857 = vmatprep.subr.bf16.mxu0 0
        %3858 = vmatpush2.bf16.msra.mxu0 0
        %3859 = vmatprep.subr.bf16.mxu0 0
        %3860 = vmatpush2.bf16.msra.mxu0 0
        %3861 = vmatprep.subr.bf16.mxu0 0
        %3862 = vmatpush2.bf16.msra.mxu0 0
        %3863 = vmatprep.subr.bf16.mxu0 0
        %3864 = vmatpush2.bf16.msra.mxu0 0
        %3865 = vmatprep.subr.bf16.mxu0 0
        %3866 = vmatpush2.bf16.msra.mxu0 0
        %3867 = vmatprep.mubr.bf16.mxu0 0
        %3868 = vmatmul.mubr.bf16.gmra.mxu0 %v3601
        %v3869 = vpop.f32.mrf.mxu0
        %v3870 = vadd.f32 0.0, %v3869
        %v3871 = vpop.f32.mrf.mxu0
        %v3872 = vadd.f32 0.0, %v3871
        %v3873 = vpop.f32.mrf.mxu0
        %v3874 = vpop.f32.mrf.mxu0
        %3875 = vdwg.mxu0
        %v3876 = vadd.f32 %v3597, %v3829
        %v3877 = vadd.f32 %v3598, %v3831
        %v3878 = vadd.f32 %v3599, %v3870
        %v3879 = vadd.f32 %v3600, %v3872
        %v3880 = vld [vmem:[%s2835] sm:$0xf]
        %v3882 = vlaneseq
        %v3883 = vshrl.u32 %v3882, 7
        %v3884 = vsub.s32 0, %v3883
        %v3885 = vrot.slane %v3880, %v3884
        %v3886 = vlaneseq
        %v3887 = vshrl.u32 %v3886, 7
        %v3888 = vsub.s32 1, %v3887
        %v3889 = vrot.slane %v3880, %v3888
        %v3890 = vlaneseq
        %v3891 = vshrl.u32 %v3890, 7
        %v3892 = vsub.s32 2, %v3891
        %v3893 = vrot.slane %v3880, %v3892
        %v3894 = vlaneseq
        %v3895 = vshrl.u32 %v3894, 7
        %v3896 = vsub.s32 3, %v3895
        %v3897 = vrot.slane %v3880, %v3896
        %v3902 = vadd.f32 %v3876, %v3885
        %v3903 = vadd.f32 %v3877, %v3889
        %v3904 = vadd.f32 %v3878, %v3893
        %v3905 = vadd.f32 %v3879, %v3897
        %v3906 = vxor.u32 %v3902, 2147483648
        %v3907 = vmul.f32 %v3906, 1.442695
        %v3908 = vpow.pop %v3907
        %v3909 = vadd.f32 %v3908, 1.0
        %v3910 = vrcp.pop %v3909
        %v3911 = vmul.f32 1.0, %v3910
        %v3912 = vxor.u32 %v3903, 2147483648
        %v3913 = vmul.f32 %v3912, 1.442695
        %v3914 = vpow.pop %v3913
        %v3915 = vadd.f32 %v3914, 1.0
        %v3916 = vrcp.pop %v3915
        %v3917 = vmul.f32 1.0, %v3916
        %v3918 = vtanh.pop %v3904
        %v3919 = vxor.u32 %v3905, 2147483648
        %v3920 = vmul.f32 %v3919, 1.442695
        %v3921 = vpow.pop %v3920
        %v3922 = vadd.f32 %v3921, 1.0
        %v3923 = vrcp.pop %v3922
        %v3924 = vmul.f32 1.0, %v3923
        %v3925 = vld [vmem:[%s2881] sm:$0xff]
        %v3926 = vmul.f32 %v3917, %v3925
        %v3927 = vmul.f32 %v3911, %v3918
        %v3928 = vadd.f32 %v3926, %v3927
        %v3929 = vtanh.pop %v3928
        %v3930 = vmul.f32 %v3924, %v3929
        %3931 = vst [vmem:[%s2881] sm:$0xff] %v3928
        %3932 = vst [vmem:[%s2549] sm:$0xff] %v3930
        %s3933 = sadd.s32 %s517, 3
        %v3934 = vstv %s3933
        %vm3935 = vcmp.eq.s32.totalorder %v518, %v3934
        %v3936 = vld [vmem:[#allocation6] sm:$0xff]
        %v3937 = vsel %vm3935, 1, 0
        %3938 = vset.pattern.permute.xlu0 0
        %3939 = vperm.xlu0 %3938, %v3937
        %v3940 = vpop.permute.xlu0 %3939
        %vm3941 = vcmp.eq.s32.totalorder %v3940, 1
        %v3942 = vsel %vm3941, %v3930, %v3936
        %3943 = vst [vmem:[#allocation6] sm:$0xff] %v3942
        %p3944 = scmp.eq.s32.totalorder %s33, 1
        // Predicated region
        $region93: #{tpu_custom_call.1} parent=59 // pred_check
          %p3945 = pneg %p3944
        $region94: #{tpu_custom_call.1} parent=59 // pred_check_branch
          %3947 = sbr.rel (%p3945) target = $region96
        $region95: #{tpu_custom_call.1} parent=59 // pred_region
          %v3948 = vld [vmem:[#allocation6] sm:$0xff]
          %v3949 = vpack.c.bf16 %v3948, %v3948
          %v3950 = vld [vmem:[#allocation18] sm:$0xf]
          %v3951 = vld [vmem:[#allocation18 + $0x4] sm:$0xf]
          %v3952 = vld [vmem:[#allocation18 + $0x8] sm:$0xf]
          %v3953 = vld [vmem:[#allocation18 + $0xc] sm:$0xf]
          %v3954 = vld [vmem:[#allocation18 + $0x10] sm:$0xf]
          %v3955 = vld [vmem:[#allocation18 + $0x14] sm:$0xf]
          %v3956 = vld [vmem:[#allocation18 + $0x18] sm:$0xf]
          %v3957 = vld [vmem:[#allocation18 + $0x1c] sm:$0xf]
          %v3958 = vld [vmem:[#allocation18 + $0x20] sm:$0xf]
          %v3959 = vld [vmem:[#allocation18 + $0x24] sm:$0xf]
          %v3960 = vld [vmem:[#allocation18 + $0x28] sm:$0xf]
          %v3961 = vld [vmem:[#allocation18 + $0x2c] sm:$0xf]
          %v3962 = vld [vmem:[#allocation18 + $0x30] sm:$0xf]
          %v3963 = vld [vmem:[#allocation18 + $0x34] sm:$0xf]
          %v3964 = vld [vmem:[#allocation18 + $0x38] sm:$0xf]
          %v3965 = vld [vmem:[#allocation18 + $0x3c] sm:$0xf]
          %v3966 = vld [vmem:[%s9] sm:$0x1]
          %v3968 = vlaneseq
          %v3969 = vshrl.u32 %v3968, 7
          %v3970 = vsub.s32 0, %v3969
          %v3971 = vrot.slane %v3966, %v3970
          %v3989 = vunpack.c.l.b16 %v3950
          %v3990 = vunpack.c.l.b16 %v3951
          %v3991 = vunpack.c.l.b16 %v3952
          %v3992 = vunpack.c.l.b16 %v3953
          %v3993 = vunpack.c.l.b16 %v3954
          %v3994 = vunpack.c.l.b16 %v3955
          %v3995 = vunpack.c.l.b16 %v3956
          %v3996 = vunpack.c.l.b16 %v3957
          %v3997 = vunpack.c.l.b16 %v3958
          %v3998 = vunpack.c.l.b16 %v3959
          %v3999 = vunpack.c.l.b16 %v3960
          %v4000 = vunpack.c.l.b16 %v3961
          %v4001 = vunpack.c.l.b16 %v3962
          %v4002 = vunpack.c.l.b16 %v3963
          %v4003 = vunpack.c.l.b16 %v3964
          %v4004 = vunpack.c.l.b16 %v3965
          %v4005 = vpack.c.b16 %v3990, %v3989
          %v4006 = vpack.c.b16 %v3992, %v3991
          %v4007 = vpack.c.b16 %v3994, %v3993
          %v4008 = vpack.c.b16 %v3996, %v3995
          %v4009 = vpack.c.b16 %v3998, %v3997
          %v4010 = vpack.c.b16 %v4000, %v3999
          %v4011 = vpack.c.b16 %v4002, %v4001
          %v4012 = vpack.c.b16 %v4004, %v4003
          %4021 = vmatprep.subr.bf16.mxu0 0
          %4022 = vmatpush1.bf16.msra.mxu0 %v4012
          %4023 = vmatprep.subr.bf16.mxu0 0
          %4024 = vmatpush1.bf16.msra.mxu0 %v4011
          %4025 = vmatprep.subr.bf16.mxu0 0
          %4026 = vmatpush1.bf16.msra.mxu0 %v4010
          %4027 = vmatprep.subr.bf16.mxu0 0
          %4028 = vmatpush1.bf16.msra.mxu0 %v4009
          %4029 = vmatprep.subr.bf16.mxu0 0
          %4030 = vmatpush1.bf16.msra.mxu0 %v4008
          %4031 = vmatprep.subr.bf16.mxu0 0
          %4032 = vmatpush1.bf16.msra.mxu0 %v4007
          %4033 = vmatprep.subr.bf16.mxu0 0
          %4034 = vmatpush1.bf16.msra.mxu0 %v4006
          %4035 = vmatprep.subr.bf16.mxu0 0
          %4036 = vmatpush1.bf16.msra.mxu0 %v4005
          %4037 = vmatprep.subr.bf16.mxu0 0
          %4038 = vmatpush2.bf16.msra.mxu0 0
          %4039 = vmatprep.subr.bf16.mxu0 0
          %4040 = vmatpush2.bf16.msra.mxu0 0
          %4041 = vmatprep.subr.bf16.mxu0 0
          %4042 = vmatpush2.bf16.msra.mxu0 0
          %4043 = vmatprep.subr.bf16.mxu0 0
          %4044 = vmatpush2.bf16.msra.mxu0 0
          %4045 = vmatprep.subr.bf16.mxu0 0
          %4046 = vmatpush2.bf16.msra.mxu0 0
          %4047 = vmatprep.subr.bf16.mxu0 0
          %4048 = vmatpush2.bf16.msra.mxu0 0
          %4049 = vmatprep.subr.bf16.mxu0 0
          %4050 = vmatpush2.bf16.msra.mxu0 0
          %4051 = vmatprep.subr.bf16.mxu0 0
          %4052 = vmatpush2.bf16.msra.mxu0 0
          %4053 = vmatprep.mubr.bf16.mxu0 0
          %4054 = vmatmul.mubr.bf16.gmra.mxu0 %v3949
          %v4055 = vpop.f32.mrf.mxu0
          %v4056 = vadd.f32 %v3971, %v4055
          %v4057 = vpop.f32.mrf.mxu0
          %v4058 = vpop.f32.mrf.mxu0
          %v4059 = vpop.f32.mrf.mxu0
          %4060 = vdwg.mxu0
          %4061 = vst [vmem:[#allocation19] sm:$0xff] %v4056
        $region96: #{tpu_custom_call.1} parent=59 // pred_fallthru
          _
        // Predicated region
        $region97: #{tpu_custom_call.1} parent=59 // pred_check
          %p4062 = pneg %p290
        $region98: #{tpu_custom_call.1} parent=59 // pred_check_branch
          %4064 = sbr.rel (%p4062) target = $region100
        $region99: #{tpu_custom_call.1} parent=59 // pred_region
          %s4066 = ssub.s32 128, 128
          %4067 = vsyncadd [#allocation9], %s4066
          %s4068 = smul.addr %s32, 128
          %s4069 = scalar_lea.hbm %s10, %s4068
          %s4071 = sshll.u32 [#allocation19], 4
          %s4072 = int_to_ptr.vmem [resolvable:$true] %s4071
          %4074 = dma.vmem_to_hbm [thread:$0]  %s4072, 128, %s4069, [#allocation9]
        $region100: #{tpu_custom_call.1} parent=59 // pred_fallthru
          _
        // Predicated region
        $region101: #{tpu_custom_call.1} parent=59 // pred_check
          %p4075 = pneg %p290
        $region102: #{tpu_custom_call.1} parent=59 // pred_check_branch
          %4077 = sbr.rel (%p4075) target = $region104
        $region103: #{tpu_custom_call.1} parent=59 // pred_region
          %4078 = dma.done [#allocation9], 128
        $region104: #{tpu_custom_call.1} parent=59 // pred_fallthru
          _
      $region60: #{tpu_custom_call.1} parent=5 // pred_fallthru
        _
      %p4079 = scmp.le.s32.totalorder 2, %s23
      // Predicated region
      $region105: #{tpu_custom_call.1} parent=5 // pred_check
        %p4080 = pneg %p4079
      $region106: #{tpu_custom_call.1} parent=5 // pred_check_branch
        %4082 = sbr.rel (%p4080) target = $region108
      $region107: #{tpu_custom_call.1} parent=5 // pred_region
        %s4083 = ssub.s32 %s23, 2
      $region108: #{tpu_custom_call.1} parent=5 // pred_fallthru
        _
    $region6: #{tpu_custom_call.1} parent=1 // loop_footer
      %s27 = sadd.s32 1, %s23
    $region7: #{tpu_custom_call.1} parent=1 // loop_footer_branch
      %22 = sbr.rel target = $region3
    $region8: #{tpu_custom_call.1} parent=1 // loop_exit
      _
    %4084 = vsyncpa [#allocation8], 1
    %s4085 = scalar_lea.sflag [#allocation8], 1
    %4086 = vsyncpa %s4085, 1
    %4087 = vsyncpa [#allocation11], 1
    %4088 = vsyncpa [#allocation14], 1
    %4089 = vsyncpa [#allocation17], 1
    %4090 = vsyncpa [#allocation9], 1
    %s4091 = scalar_lea.sflag [#allocation9], 1
    %4092 = vsyncpa %s4091, 1

</llo_original>
